<compile_context>
chip_gen: v7x
topology: tpu7x:2x2x1
jax: 0.10.0
libtpu: 0.0.40
codegen_flags: <defaults>
</compile_context>

<pallas_src>
import jax
import jax.numpy as jnp
from jax.experimental import pallas as pl
from jax.experimental.pallas import tpu as pltpu

# Small, self-consistent sizes (module defaults force hidden=out=32 so that
# flattened_size == 32*2*2 == 128; in_channels == matrix_size for the slicing
# in forward() to make sense).
B = 2
H = W = 16
MATRIX_SIZE = 4            # in_channels (PyTorch default is 50; kept small)
C_IN = MATRIX_SIZE
C_HID = 32                 # hidden_channels
C_OUT = 32                 # out_channels
K = 3
F_FLAT = C_OUT * 2 * 2     # 128 == flattened_size in the module
F1 = C_HID * 2             # 64

# Packed bf16 weight-blob layout (row offsets kept multiples of 8 so that all
# in-kernel ref slices are sublane-aligned).
W1_ROWS = K * K * C_IN     # 36
W2_OFF = 40                # 36 padded up to a multiple of 8
W2_ROWS = K * K * C_HID    # 288
FC1_OFF = W2_OFF + W2_ROWS # 328
WBLOB_ROWS = FC1_OFF + F_FLAT   # 456
WBLOB_COLS = 64
# f32 bias/scalar blob rows: 0=b1, 1=b2, 2=b_fc1, 3=fc1 theta row,
# 4=fc1 log_h row, 5=fc2 weight row, 6=b_fc2.


def _cnn_kernel(x_ref, sc_ref, w_ref, b_ref, out_ref):
    f32 = jnp.float32
    bf16 = jnp.bfloat16

    def shift_w(t, delta):
        """value at w = t[..., w+delta, :]; zero where w+delta is out of range.

        pltpu.roll matches jnp.roll: roll(t, s, axis)[w] = t[w - s]; the rotate
        runs on the XLU (f32 sublane rotate) instead of zero-fill + concat.
        """
        wdim = t.shape[2]
        rolled = pltpu.roll(t, shift=(-delta) % wdim, axis=2)
        w_idx = jax.lax.broadcasted_iota(jnp.int32, t.shape, 2)
        valid = jnp.logical_and(w_idx + delta >= 0, w_idx + delta <= wdim - 1)
        return jnp.where(valid, rolled, 0.0)

    def im2col_3x3(t):
        """[B, Hh, Ww, C] f32 -> [B*Hh*Ww, 9*C] bf16 patches; lane order is
        (kh, kw, c), matching the tap-major packed conv weights."""
        b, hh, ww, c = t.shape
        # W taps (kw = 0,1,2 -> input column w-1, w, w+1): f32 roll, then bf16.
        wtaps = [shift_w(t, -1).astype(bf16), t.astype(bf16),
                 shift_w(t, 1).astype(bf16)]
        # H taps via leading-axis slices of a zero-row-padded tensor (cheap).
        zrow = jnp.zeros((b, 1, ww, c), bf16)
        padded = [jnp.concatenate([zrow, wt, zrow], axis=1) for wt in wtaps]
        taps = [padded[kw][:, kh:kh + hh] for kh in range(K) for kw in range(K)]
        return jnp.concatenate(taps, axis=-1).reshape(b * hh * ww, K * K * c)

    biases = b_ref[...]                                           # [8, 64] f32

    # ---- conv1 (3x3 'same') as one K=36 im2col matmul + bias + ReLU ---------
    x = x_ref[...]                                                # [B,H,W,C_IN] f32
    p1 = im2col_3x3(x)                                            # [512, 36] bf16
    h1 = jnp.dot(p1, w_ref[0:W1_ROWS, 0:C_HID], preferred_element_type=f32)
    h1 = jnp.maximum(h1 + biases[0:1, 0:C_HID], 0.0)              # [512, 32] f32
    h1 = h1.reshape(B, H, W, C_HID)

    # ---- conv2 (3x3 'same'): single K=288 im2col matmul ---------------------
    # TODO(synk): GATConv (graph attention) has no clean Pallas/dense-conv
    # equivalent; implemented as Conv2d(hidden, out, 3, padding='same').
    p2 = im2col_3x3(h1)                                           # [512, 288] bf16
    h2 = jnp.dot(p2, w_ref[W2_OFF:W2_OFF + W2_ROWS, 0:C_OUT],
                 preferred_element_type=f32)
    h2 = jnp.maximum(h2 + biases[1:2, 0:C_OUT], 0.0)              # [512, 32] f32
    h2 = h2.reshape(B, H, W, C_OUT)

    # ---- MaxPool2d(2) --------------------------------------------------------
    h2r = h2.reshape(B, H // 2, 2, W, C_OUT)                      # split H (leading)
    hm = jnp.maximum(h2r[:, :, 0], h2r[:, :, 1])                  # [B, 8, W, C]
    # W-pair max: roll-by-one (XLU) + max; odd columns zeroed so the avg-pool
    # sum below only counts real pooled cells (the wraparound lands on odd w).
    hm_next = pltpu.roll(hm, shift=W - 1, axis=2)                 # value@w = hm[w+1]
    pairmax = jnp.maximum(hm, hm_next)
    w_iota = jax.lax.broadcasted_iota(jnp.int32, pairmax.shape, 2)
    masked = jnp.where(w_iota % 2 == 0, pairmax, 0.0)             # [B, 8, W, C]

    # dropout: identity (inference)

    # ---- AdaptiveAvgPool2d((2,2)) + flatten ----------------------------------
    # Each (i,j) cell averages a 4x8 block of `masked`; exactly 16 entries are
    # real pooled values (even columns) -> fixed 1/16 divisor.
    pooled = []
    for i in range(2):
        for j in range(2):
            blk = masked[:, 4 * i:4 * i + 4, 8 * j:8 * j + 8, :]  # [B,4,8,C]
            pooled.append(jnp.sum(blk, axis=(1, 2)) * (1.0 / 16.0))   # [B, C]
    flat = jnp.concatenate(pooled, axis=1)                        # [B, 128] f32

    # ---- cat([flat, theta, log_h]) + fc1 + ReLU ------------------------------
    # fc1 image rows were pre-permuted (once, in prepare_params) so flat's
    # (i,j,c) order matches PyTorch's NCHW flatten; theta / log_h rows are
    # applied as VPU rank-1 updates.
    sc = sc_ref[...]                                              # [B, 2] f32
    theta, logh = sc[:, 0:1], sc[:, 1:2]
    y = jnp.dot(flat.astype(bf16), w_ref[FC1_OFF:FC1_OFF + F_FLAT, 0:F1],
                preferred_element_type=f32)                       # [B, 64]
    y = y + theta * biases[3:4, :] + logh * biases[4:5, :] + biases[2:3, :]
    y = jnp.maximum(y, 0.0)

    # dropout: identity (inference)

    # ---- fc2 as VPU multiply + lane reduction (no MXU push/pop for 128 MACs) -
    out_ref[...] = (jnp.sum(y * biases[5:6, :], axis=-1, keepdims=True)
                    + biases[6:7, 0:1])


def init_params(key):
    ks = jax.random.split(key, 8)
    s = 0.1
    # Conv weights tap-major [9, Cin, Cout]; tap t = kh*3 + kw multiplies the
    # input pixel (h + kh - 1, w + kw - 1)  ('same' padding).
    w1 = jax.random.normal(ks[0], (K * K, C_IN, C_HID), jnp.float32) * s
    b1 = jax.random.normal(ks[1], (C_HID,), jnp.float32) * s
    w2 = jax.random.normal(ks[2], (K * K, C_HID, C_OUT), jnp.float32) * s
    b2 = jax.random.normal(ks[3], (C_OUT,), jnp.float32) * s
    # fc1: Linear(F_FLAT + 2, F1) stored as [in, out] ("x @ W" layout).
    w_fc1 = jax.random.normal(ks[4], (F_FLAT + 2, F1), jnp.float32) * s
    b_fc1 = jax.random.normal(ks[5], (F1,), jnp.float32) * s
    w_fc2 = jax.random.normal(ks[6], (F1, 1), jnp.float32) * s
    b_fc2 = jax.random.normal(ks[7], (1,), jnp.float32) * s
    return (w1, b1, w2, b2, w_fc1, b_fc1, w_fc2, b_fc2)


def prepare_params(params):
    """One-time, hoisted kernel-layout packing: one bf16 weight blob and one
    f32 bias/scalar blob (2 weight DMAs total in the kernel prologue)."""
    (w1, b1, w2, b2, w_fc1, b_fc1, w_fc2, b_fc2) = params
    # PyTorch flattens the pooled NCHW tensor with index c*4 + i*2 + j; the
    # kernel emits (i*2 + j)*C_OUT + c, so permute fc1's image rows accordingly.
    w1_img = (w_fc1[:F_FLAT].reshape(C_OUT, 4, F1).transpose(1, 0, 2)
              .reshape(F_FLAT, F1))

    wb = jnp.zeros((WBLOB_ROWS, WBLOB_COLS), jnp.bfloat16)
    wb = wb.at[0:W1_ROWS, 0:C_HID].set(
        w1.reshape(K * K * C_IN, C_HID).astype(jnp.bfloat16))
    wb = wb.at[W2_OFF:W2_OFF + W2_ROWS, 0:C_OUT].set(
        w2.reshape(K * K * C_HID, C_OUT).astype(jnp.bfloat16))
    wb = wb.at[FC1_OFF:FC1_OFF + F_FLAT, 0:F1].set(w1_img.astype(jnp.bfloat16))

    bb = jnp.zeros((8, WBLOB_COLS), jnp.float32)
    bb = bb.at[0, 0:C_HID].set(b1)
    bb = bb.at[1, 0:C_OUT].set(b2)
    bb = bb.at[2, 0:F1].set(b_fc1)
    bb = bb.at[3, 0:F1].set(w_fc1[F_FLAT])        # theta row of fc1
    bb = bb.at[4, 0:F1].set(w_fc1[F_FLAT + 1])    # log_h row of fc1
    bb = bb.at[5, 0:F1].set(w_fc2[:, 0])
    bb = bb.at[6, 0].set(b_fc2[0])
    return wb, bb


@jax.jit
def cnn_forward(data, wb, bb):
    # Per-call activation prep only (weights are pre-packed): slice the image
    # channels to NHWC and pull theta / log_h out as per-sample scalars.
    x = jnp.transpose(data[:, :MATRIX_SIZE], (0, 2, 3, 1))        # [B,H,W,C_IN]
    # TODO(synk): the original forward slices theta/log_h as full channels and
    # concatenates them with a flat [B,128] vector (shape-inconsistent in
    # PyTorch); they are interpreted here as per-sample scalars.
    scalars = data[:, MATRIX_SIZE:, 0, 0]                         # [B, 2]

    def vspec(shape):
        return pl.BlockSpec(shape, lambda *_: (0,) * len(shape))

    inputs = (x, scalars, wb, bb)
    out = pl.pallas_call(
        _cnn_kernel,
        out_shape=jax.ShapeDtypeStruct((B, 1), jnp.float32),
        grid=(1,),
        in_specs=[vspec(a.shape) for a in inputs],
        out_specs=vspec((B, 1)),
        compiler_params=pltpu.CompilerParams(
            dimension_semantics=("arbitrary",)),
    )(*inputs)
    return out[:, 0]                                              # squeeze(-1)


if __name__ == "__main__":
    key = jax.random.PRNGKey(0)
    pkey, dkey, skey = jax.random.split(key, 3)
    params = init_params(pkey)
    wb, bb = prepare_params(params)   # hoisted: runs once, not per forward call

    # Build data [B, MATRIX_SIZE + 2, H, W]; last two channels are the
    # spatially constant scalars (theta, log_h).
    img = jax.random.normal(dkey, (B, MATRIX_SIZE, H, W), jnp.float32)
    scal = jax.random.normal(skey, (B, 2), jnp.float32)
    scal_ch = jnp.broadcast_to(scal[:, :, None, None], (B, 2, H, W))
    data = jnp.concatenate([img, scal_ch], axis=1)

    out = cnn_forward(data, wb, bb)
    jax.block_until_ready(out)
    assert out.shape == (B,) and out.dtype == jnp.float32
    print("KERNEL_OK")
</pallas_src>

<mosaic_0001>
module attributes {stable_mosaic.version = 11 : i64} {
  func.func @_cnn_kernel(%arg0: i32, %arg1: memref<2x16x16x4xf32, #tpu.memory_space<vmem>>, %arg2: memref<2x2xf32, #tpu.memory_space<vmem>>, %arg3: memref<456x64xbf16, #tpu.memory_space<vmem>>, %arg4: memref<8x64xf32, #tpu.memory_space<vmem>>, %arg5: memref<2x1xf32, #tpu.memory_space<vmem>>) attributes {dimension_semantics = [#tpu.dimension_semantics<arbitrary>], iteration_bounds = array<i64: 1>, scalar_prefetch = 0 : i64, scratch_operands = 0 : i64, tpu.core_type = #tpu.core_type<tc>, window_params = [{pipeline_mode = #tpu.pipeline_mode<synchronous>, transform_indices = @transform_0, window_bounds = array<i64: 2, 16, 16, 4>}, {pipeline_mode = #tpu.pipeline_mode<synchronous>, transform_indices = @transform_1, window_bounds = array<i64: 2, 2>}, {pipeline_mode = #tpu.pipeline_mode<synchronous>, transform_indices = @transform_2, window_bounds = array<i64: 456, 64>}, {pipeline_mode = #tpu.pipeline_mode<synchronous>, transform_indices = @transform_3, window_bounds = array<i64: 8, 64>}, {pipeline_mode = #tpu.pipeline_mode<synchronous>, transform_indices = @transform_4, window_bounds = array<i64: 2, 1>}]} {
    %c0 = arith.constant 0 : index
    %c0_0 = arith.constant 0 : index
    %0 = vector.load %arg4[%c0, %c0_0] : memref<8x64xf32, #tpu.memory_space<vmem>>, vector<8x64xf32>
    %c0_1 = arith.constant 0 : index
    %c0_2 = arith.constant 0 : index
    %c0_3 = arith.constant 0 : index
    %c0_4 = arith.constant 0 : index
    %1 = vector.load %arg1[%c0_1, %c0_2, %c0_3, %c0_4] : memref<2x16x16x4xf32, #tpu.memory_space<vmem>>, vector<2x16x16x4xf32>
    %c1_i32 = arith.constant 1 : i32
    %2 = tpu.dynamic_rotate %1 by %c1_i32 dim 2 : vector<2x16x16x4xf32>, i32 -> vector<2x16x16x4xf32>
    %3 = tpu.iota {dimensions = array<i32: 2>} : vector<2x16x16x4xi32>
    %c-1_i32 = arith.constant -1 : i32
    %4 = vector.broadcast %c-1_i32 : i32 to vector<2x16x16x4xi32>
    %5 = arith.addi %3, %4 : vector<2x16x16x4xi32>
    %c0_i32 = arith.constant 0 : i32
    %6 = vector.broadcast %c0_i32 : i32 to vector<2x16x16x4xi32>
    %7 = arith.cmpi sge, %5, %6 : vector<2x16x16x4xi32>
    %c-1_i32_5 = arith.constant -1 : i32
    %8 = vector.broadcast %c-1_i32_5 : i32 to vector<2x16x16x4xi32>
    %9 = arith.addi %3, %8 : vector<2x16x16x4xi32>
    %c15_i32 = arith.constant 15 : i32
    %10 = vector.broadcast %c15_i32 : i32 to vector<2x16x16x4xi32>
    %11 = arith.cmpi sle, %9, %10 : vector<2x16x16x4xi32>
    %12 = arith.andi %7, %11 : vector<2x16x16x4xi1>
    %cst = arith.constant 0.000000e+00 : f32
    %13 = vector.broadcast %cst : f32 to vector<2x16x16x4xf32>
    %14 = arith.select %12, %2, %13 : vector<2x16x16x4xi1>, vector<2x16x16x4xf32>
    %15 = arith.truncf %14 : vector<2x16x16x4xf32> to vector<2x16x16x4xbf16>
    %16 = arith.truncf %1 : vector<2x16x16x4xf32> to vector<2x16x16x4xbf16>
    %c15_i32_6 = arith.constant 15 : i32
    %17 = tpu.dynamic_rotate %1 by %c15_i32_6 dim 2 : vector<2x16x16x4xf32>, i32 -> vector<2x16x16x4xf32>
    %18 = tpu.iota {dimensions = array<i32: 2>} : vector<2x16x16x4xi32>
    %c1_i32_7 = arith.constant 1 : i32
    %19 = vector.broadcast %c1_i32_7 : i32 to vector<2x16x16x4xi32>
    %20 = arith.addi %18, %19 : vector<2x16x16x4xi32>
    %c0_i32_8 = arith.constant 0 : i32
    %21 = vector.broadcast %c0_i32_8 : i32 to vector<2x16x16x4xi32>
    %22 = arith.cmpi sge, %20, %21 : vector<2x16x16x4xi32>
    %c1_i32_9 = arith.constant 1 : i32
    %23 = vector.broadcast %c1_i32_9 : i32 to vector<2x16x16x4xi32>
    %24 = arith.addi %18, %23 : vector<2x16x16x4xi32>
    %c15_i32_10 = arith.constant 15 : i32
    %25 = vector.broadcast %c15_i32_10 : i32 to vector<2x16x16x4xi32>
    %26 = arith.cmpi sle, %24, %25 : vector<2x16x16x4xi32>
    %27 = arith.andi %22, %26 : vector<2x16x16x4xi1>
    %cst_11 = arith.constant 0.000000e+00 : f32
    %28 = vector.broadcast %cst_11 : f32 to vector<2x16x16x4xf32>
    %29 = arith.select %27, %17, %28 : vector<2x16x16x4xi1>, vector<2x16x16x4xf32>
    %30 = arith.truncf %29 : vector<2x16x16x4xf32> to vector<2x16x16x4xbf16>
    %cst_12 = arith.constant 0.000000e+00 : bf16
    %31 = vector.broadcast %cst_12 : bf16 to vector<2x1x16x4xbf16>
    %32 = tpu.concatenate %31, %15, %31 in 1 : vector<2x1x16x4xbf16>, vector<2x16x16x4xbf16>, vector<2x1x16x4xbf16> -> vector<2x18x16x4xbf16>
    %33 = tpu.concatenate %31, %16, %31 in 1 : vector<2x1x16x4xbf16>, vector<2x16x16x4xbf16>, vector<2x1x16x4xbf16> -> vector<2x18x16x4xbf16>
    %34 = tpu.concatenate %31, %30, %31 in 1 : vector<2x1x16x4xbf16>, vector<2x16x16x4xbf16>, vector<2x1x16x4xbf16> -> vector<2x18x16x4xbf16>
    %35 = vector.extract_strided_slice %32 {offsets = [0, 0, 0, 0], sizes = [2, 16, 16, 4], strides = [1, 1, 1, 1]} : vector<2x18x16x4xbf16> to vector<2x16x16x4xbf16>
    %36 = vector.extract_strided_slice %33 {offsets = [0, 0, 0, 0], sizes = [2, 16, 16, 4], strides = [1, 1, 1, 1]} : vector<2x18x16x4xbf16> to vector<2x16x16x4xbf16>
    %37 = vector.extract_strided_slice %34 {offsets = [0, 0, 0, 0], sizes = [2, 16, 16, 4], strides = [1, 1, 1, 1]} : vector<2x18x16x4xbf16> to vector<2x16x16x4xbf16>
    %38 = vector.extract_strided_slice %32 {offsets = [0, 1, 0, 0], sizes = [2, 16, 16, 4], strides = [1, 1, 1, 1]} : vector<2x18x16x4xbf16> to vector<2x16x16x4xbf16>
    %39 = vector.extract_strided_slice %33 {offsets = [0, 1, 0, 0], sizes = [2, 16, 16, 4], strides = [1, 1, 1, 1]} : vector<2x18x16x4xbf16> to vector<2x16x16x4xbf16>
    %40 = vector.extract_strided_slice %34 {offsets = [0, 1, 0, 0], sizes = [2, 16, 16, 4], strides = [1, 1, 1, 1]} : vector<2x18x16x4xbf16> to vector<2x16x16x4xbf16>
    %41 = vector.extract_strided_slice %32 {offsets = [0, 2, 0, 0], sizes = [2, 16, 16, 4], strides = [1, 1, 1, 1]} : vector<2x18x16x4xbf16> to vector<2x16x16x4xbf16>
    %42 = vector.extract_strided_slice %33 {offsets = [0, 2, 0, 0], sizes = [2, 16, 16, 4], strides = [1, 1, 1, 1]} : vector<2x18x16x4xbf16> to vector<2x16x16x4xbf16>
    %43 = vector.extract_strided_slice %34 {offsets = [0, 2, 0, 0], sizes = [2, 16, 16, 4], strides = [1, 1, 1, 1]} : vector<2x18x16x4xbf16> to vector<2x16x16x4xbf16>
    %44 = tpu.concatenate %35, %36, %37, %38, %39, %40, %41, %42, %43 in 3 : vector<2x16x16x4xbf16>, vector<2x16x16x4xbf16>, vector<2x16x16x4xbf16>, vector<2x16x16x4xbf16>, vector<2x16x16x4xbf16>, vector<2x16x16x4xbf16>, vector<2x16x16x4xbf16>, vector<2x16x16x4xbf16>, vector<2x16x16x4xbf16> -> vector<2x16x16x36xbf16>
    %45 = vector.shape_cast %44 : vector<2x16x16x36xbf16> to vector<512x36xbf16>
    %c0_13 = arith.constant 0 : index
    %c0_14 = arith.constant 0 : index
    %46 = vector.load %arg3[%c0_13, %c0_14] : memref<456x64xbf16, #tpu.memory_space<vmem>>, vector<36x32xbf16>
    %cst_15 = arith.constant dense<0.000000e+00> : vector<512x32xf32>
    %47 = tpu.matmul %45, %46, %cst_15 {dimension_numbers = #tpu.dot_dimension_numbers<[1], [0], [0], [1], [0, 0, 1, 1], [], []>} : vector<512x36xbf16>, vector<36x32xbf16>, vector<512x32xf32> -> vector<512x32xf32>
    %48 = vector.extract_strided_slice %0 {offsets = [0, 0], sizes = [1, 32], strides = [1, 1]} : vector<8x64xf32> to vector<1x32xf32>
    %49 = vector.broadcast %48 : vector<1x32xf32> to vector<512x32xf32>
    %50 = arith.addf %47, %49 : vector<512x32xf32>
    %cst_16 = arith.constant 0.000000e+00 : f32
    %51 = vector.broadcast %cst_16 : f32 to vector<512x32xf32>
    %52 = arith.maximumf %50, %51 : vector<512x32xf32>
    %53 = vector.shape_cast %52 : vector<512x32xf32> to vector<2x16x16x32xf32>
    %c1_i32_17 = arith.constant 1 : i32
    %54 = tpu.dynamic_rotate %53 by %c1_i32_17 dim 2 : vector<2x16x16x32xf32>, i32 -> vector<2x16x16x32xf32>
    %55 = tpu.iota {dimensions = array<i32: 2>} : vector<2x16x16x32xi32>
    %c-1_i32_18 = arith.constant -1 : i32
    %56 = vector.broadcast %c-1_i32_18 : i32 to vector<2x16x16x32xi32>
    %57 = arith.addi %55, %56 : vector<2x16x16x32xi32>
    %c0_i32_19 = arith.constant 0 : i32
    %58 = vector.broadcast %c0_i32_19 : i32 to vector<2x16x16x32xi32>
    %59 = arith.cmpi sge, %57, %58 : vector<2x16x16x32xi32>
    %c-1_i32_20 = arith.constant -1 : i32
    %60 = vector.broadcast %c-1_i32_20 : i32 to vector<2x16x16x32xi32>
    %61 = arith.addi %55, %60 : vector<2x16x16x32xi32>
    %c15_i32_21 = arith.constant 15 : i32
    %62 = vector.broadcast %c15_i32_21 : i32 to vector<2x16x16x32xi32>
    %63 = arith.cmpi sle, %61, %62 : vector<2x16x16x32xi32>
    %64 = arith.andi %59, %63 : vector<2x16x16x32xi1>
    %cst_22 = arith.constant 0.000000e+00 : f32
    %65 = vector.broadcast %cst_22 : f32 to vector<2x16x16x32xf32>
    %66 = arith.select %64, %54, %65 : vector<2x16x16x32xi1>, vector<2x16x16x32xf32>
    %67 = arith.truncf %66 : vector<2x16x16x32xf32> to vector<2x16x16x32xbf16>
    %68 = arith.truncf %53 : vector<2x16x16x32xf32> to vector<2x16x16x32xbf16>
    %c15_i32_23 = arith.constant 15 : i32
    %69 = tpu.dynamic_rotate %53 by %c15_i32_23 dim 2 : vector<2x16x16x32xf32>, i32 -> vector<2x16x16x32xf32>
    %70 = tpu.iota {dimensions = array<i32: 2>} : vector<2x16x16x32xi32>
    %c1_i32_24 = arith.constant 1 : i32
    %71 = vector.broadcast %c1_i32_24 : i32 to vector<2x16x16x32xi32>
    %72 = arith.addi %70, %71 : vector<2x16x16x32xi32>
    %c0_i32_25 = arith.constant 0 : i32
    %73 = vector.broadcast %c0_i32_25 : i32 to vector<2x16x16x32xi32>
    %74 = arith.cmpi sge, %72, %73 : vector<2x16x16x32xi32>
    %c1_i32_26 = arith.constant 1 : i32
    %75 = vector.broadcast %c1_i32_26 : i32 to vector<2x16x16x32xi32>
    %76 = arith.addi %70, %75 : vector<2x16x16x32xi32>
    %c15_i32_27 = arith.constant 15 : i32
    %77 = vector.broadcast %c15_i32_27 : i32 to vector<2x16x16x32xi32>
    %78 = arith.cmpi sle, %76, %77 : vector<2x16x16x32xi32>
    %79 = arith.andi %74, %78 : vector<2x16x16x32xi1>
    %cst_28 = arith.constant 0.000000e+00 : f32
    %80 = vector.broadcast %cst_28 : f32 to vector<2x16x16x32xf32>
    %81 = arith.select %79, %69, %80 : vector<2x16x16x32xi1>, vector<2x16x16x32xf32>
    %82 = arith.truncf %81 : vector<2x16x16x32xf32> to vector<2x16x16x32xbf16>
    %cst_29 = arith.constant 0.000000e+00 : bf16
    %83 = vector.broadcast %cst_29 : bf16 to vector<2x1x16x32xbf16>
    %84 = tpu.concatenate %83, %67, %83 in 1 : vector<2x1x16x32xbf16>, vector<2x16x16x32xbf16>, vector<2x1x16x32xbf16> -> vector<2x18x16x32xbf16>
    %85 = tpu.concatenate %83, %68, %83 in 1 : vector<2x1x16x32xbf16>, vector<2x16x16x32xbf16>, vector<2x1x16x32xbf16> -> vector<2x18x16x32xbf16>
    %86 = tpu.concatenate %83, %82, %83 in 1 : vector<2x1x16x32xbf16>, vector<2x16x16x32xbf16>, vector<2x1x16x32xbf16> -> vector<2x18x16x32xbf16>
    %87 = vector.extract_strided_slice %84 {offsets = [0, 0, 0, 0], sizes = [2, 16, 16, 32], strides = [1, 1, 1, 1]} : vector<2x18x16x32xbf16> to vector<2x16x16x32xbf16>
    %88 = vector.extract_strided_slice %85 {offsets = [0, 0, 0, 0], sizes = [2, 16, 16, 32], strides = [1, 1, 1, 1]} : vector<2x18x16x32xbf16> to vector<2x16x16x32xbf16>
    %89 = vector.extract_strided_slice %86 {offsets = [0, 0, 0, 0], sizes = [2, 16, 16, 32], strides = [1, 1, 1, 1]} : vector<2x18x16x32xbf16> to vector<2x16x16x32xbf16>
    %90 = vector.extract_strided_slice %84 {offsets = [0, 1, 0, 0], sizes = [2, 16, 16, 32], strides = [1, 1, 1, 1]} : vector<2x18x16x32xbf16> to vector<2x16x16x32xbf16>
    %91 = vector.extract_strided_slice %85 {offsets = [0, 1, 0, 0], sizes = [2, 16, 16, 32], strides = [1, 1, 1, 1]} : vector<2x18x16x32xbf16> to vector<2x16x16x32xbf16>
    %92 = vector.extract_strided_slice %86 {offsets = [0, 1, 0, 0], sizes = [2, 16, 16, 32], strides = [1, 1, 1, 1]} : vector<2x18x16x32xbf16> to vector<2x16x16x32xbf16>
    %93 = vector.extract_strided_slice %84 {offsets = [0, 2, 0, 0], sizes = [2, 16, 16, 32], strides = [1, 1, 1, 1]} : vector<2x18x16x32xbf16> to vector<2x16x16x32xbf16>
    %94 = vector.extract_strided_slice %85 {offsets = [0, 2, 0, 0], sizes = [2, 16, 16, 32], strides = [1, 1, 1, 1]} : vector<2x18x16x32xbf16> to vector<2x16x16x32xbf16>
    %95 = vector.extract_strided_slice %86 {offsets = [0, 2, 0, 0], sizes = [2, 16, 16, 32], strides = [1, 1, 1, 1]} : vector<2x18x16x32xbf16> to vector<2x16x16x32xbf16>
    %96 = tpu.concatenate %87, %88, %89, %90, %91, %92, %93, %94, %95 in 3 : vector<2x16x16x32xbf16>, vector<2x16x16x32xbf16>, vector<2x16x16x32xbf16>, vector<2x16x16x32xbf16>, vector<2x16x16x32xbf16>, vector<2x16x16x32xbf16>, vector<2x16x16x32xbf16>, vector<2x16x16x32xbf16>, vector<2x16x16x32xbf16> -> vector<2x16x16x288xbf16>
    %97 = vector.shape_cast %96 : vector<2x16x16x288xbf16> to vector<512x288xbf16>
    %c40 = arith.constant 40 : index
    %c0_30 = arith.constant 0 : index
    %98 = vector.load %arg3[%c40, %c0_30] : memref<456x64xbf16, #tpu.memory_space<vmem>>, vector<288x32xbf16>
    %cst_31 = arith.constant dense<0.000000e+00> : vector<512x32xf32>
    %99 = tpu.matmul %97, %98, %cst_31 {dimension_numbers = #tpu.dot_dimension_numbers<[1], [0], [0], [1], [0, 0, 1, 1], [], []>} : vector<512x288xbf16>, vector<288x32xbf16>, vector<512x32xf32> -> vector<512x32xf32>
    %100 = vector.extract_strided_slice %0 {offsets = [1, 0], sizes = [1, 32], strides = [1, 1]} : vector<8x64xf32> to vector<1x32xf32>
    %101 = vector.broadcast %100 : vector<1x32xf32> to vector<512x32xf32>
    %102 = arith.addf %99, %101 : vector<512x32xf32>
    %cst_32 = arith.constant 0.000000e+00 : f32
    %103 = vector.broadcast %cst_32 : f32 to vector<512x32xf32>
    %104 = arith.maximumf %102, %103 : vector<512x32xf32>
    %105 = vector.shape_cast %104 : vector<512x32xf32> to vector<2x16x16x32xf32>
    %106 = vector.shape_cast %105 : vector<2x16x16x32xf32> to vector<2x8x2x16x32xf32>
    %107 = vector.extract_strided_slice %106 {offsets = [0, 0, 0, 0, 0], sizes = [2, 8, 1, 16, 32], strides = [1, 1, 1, 1, 1]} : vector<2x8x2x16x32xf32> to vector<2x8x1x16x32xf32>
    %108 = vector.shape_cast %107 : vector<2x8x1x16x32xf32> to vector<2x8x16x32xf32>
    %109 = vector.extract_strided_slice %106 {offsets = [0, 0, 1, 0, 0], sizes = [2, 8, 1, 16, 32], strides = [1, 1, 1, 1, 1]} : vector<2x8x2x16x32xf32> to vector<2x8x1x16x32xf32>
    %110 = vector.shape_cast %109 : vector<2x8x1x16x32xf32> to vector<2x8x16x32xf32>
    %111 = arith.maximumf %108, %110 : vector<2x8x16x32xf32>
    %c15_i32_33 = arith.constant 15 : i32
    %112 = tpu.dynamic_rotate %111 by %c15_i32_33 dim 2 : vector<2x8x16x32xf32>, i32 -> vector<2x8x16x32xf32>
    %113 = arith.maximumf %111, %112 : vector<2x8x16x32xf32>
    %114 = tpu.iota {dimensions = array<i32: 2>} : vector<2x8x16x32xi32>
    %c2_i32 = arith.constant 2 : i32
    %c0_i32_34 = arith.constant 0 : i32
    %115 = arith.cmpi eq, %c2_i32, %c0_i32_34 : i32
    %c1_i32_35 = arith.constant 1 : i32
    %116 = arith.select %115, %c1_i32_35, %c2_i32 : i32
    %117 = vector.broadcast %116 : i32 to vector<2x8x16x32xi32>
    %118 = arith.remsi %114, %117 : vector<2x8x16x32xi32>
    %c0_i32_36 = arith.constant 0 : i32
    %119 = vector.broadcast %c0_i32_36 : i32 to vector<2x8x16x32xi32>
    %120 = arith.cmpi ne, %118, %119 : vector<2x8x16x32xi32>
    %c0_i32_37 = arith.constant 0 : i32
    %121 = vector.broadcast %c0_i32_37 : i32 to vector<2x8x16x32xi32>
    %122 = arith.cmpi slt, %118, %121 : vector<2x8x16x32xi32>
    %c0_i32_38 = arith.constant 0 : i32
    %123 = arith.cmpi slt, %116, %c0_i32_38 : i32
    %124 = vector.broadcast %123 : i1 to vector<2x8x16x32xi1>
    %125 = vector.broadcast %124 : vector<2x8x16x32xi1> to vector<2x8x16x32xi1>
    %126 = arith.xori %122, %125 : vector<2x8x16x32xi1>
    %127 = arith.andi %126, %120 : vector<2x8x16x32xi1>
    %128 = vector.broadcast %116 : i32 to vector<2x8x16x32xi32>
    %129 = arith.addi %118, %128 : vector<2x8x16x32xi32>
    %130 = arith.select %127, %129, %118 : vector<2x8x16x32xi1>, vector<2x8x16x32xi32>
    %c0_i32_39 = arith.constant 0 : i32
    %131 = vector.broadcast %c0_i32_39 : i32 to vector<2x8x16x32xi32>
    %132 = arith.cmpi eq, %130, %131 : vector<2x8x16x32xi32>
    %cst_40 = arith.constant 0.000000e+00 : f32
    %133 = vector.broadcast %cst_40 : f32 to vector<2x8x16x32xf32>
    %134 = arith.select %132, %113, %133 : vector<2x8x16x32xi1>, vector<2x8x16x32xf32>
    %135 = vector.extract_strided_slice %134 {offsets = [0, 0, 0, 0], sizes = [2, 4, 8, 32], strides = [1, 1, 1, 1]} : vector<2x8x16x32xf32> to vector<2x4x8x32xf32>
    %cst_41 = arith.constant dense<0.000000e+00> : vector<2x32xf32>
    %136 = vector.multi_reduction <add>, %135, %cst_41 [1, 2] : vector<2x4x8x32xf32> to vector<2x32xf32>
    %cst_42 = arith.constant 6.250000e-02 : f32
    %137 = vector.broadcast %cst_42 : f32 to vector<2x32xf32>
    %138 = arith.mulf %136, %137 : vector<2x32xf32>
    %139 = vector.extract_strided_slice %134 {offsets = [0, 0, 8, 0], sizes = [2, 4, 8, 32], strides = [1, 1, 1, 1]} : vector<2x8x16x32xf32> to vector<2x4x8x32xf32>
    %cst_43 = arith.constant dense<0.000000e+00> : vector<2x32xf32>
    %140 = vector.multi_reduction <add>, %139, %cst_43 [1, 2] : vector<2x4x8x32xf32> to vector<2x32xf32>
    %cst_44 = arith.constant 6.250000e-02 : f32
    %141 = vector.broadcast %cst_44 : f32 to vector<2x32xf32>
    %142 = arith.mulf %140, %141 : vector<2x32xf32>
    %143 = vector.extract_strided_slice %134 {offsets = [0, 4, 0, 0], sizes = [2, 4, 8, 32], strides = [1, 1, 1, 1]} : vector<2x8x16x32xf32> to vector<2x4x8x32xf32>
    %cst_45 = arith.constant dense<0.000000e+00> : vector<2x32xf32>
    %144 = vector.multi_reduction <add>, %143, %cst_45 [1, 2] : vector<2x4x8x32xf32> to vector<2x32xf32>
    %cst_46 = arith.constant 6.250000e-02 : f32
    %145 = vector.broadcast %cst_46 : f32 to vector<2x32xf32>
    %146 = arith.mulf %144, %145 : vector<2x32xf32>
    %147 = vector.extract_strided_slice %134 {offsets = [0, 4, 8, 0], sizes = [2, 4, 8, 32], strides = [1, 1, 1, 1]} : vector<2x8x16x32xf32> to vector<2x4x8x32xf32>
    %cst_47 = arith.constant dense<0.000000e+00> : vector<2x32xf32>
    %148 = vector.multi_reduction <add>, %147, %cst_47 [1, 2] : vector<2x4x8x32xf32> to vector<2x32xf32>
    %cst_48 = arith.constant 6.250000e-02 : f32
    %149 = vector.broadcast %cst_48 : f32 to vector<2x32xf32>
    %150 = arith.mulf %148, %149 : vector<2x32xf32>
    %151 = tpu.concatenate %138, %142, %146, %150 in 1 : vector<2x32xf32>, vector<2x32xf32>, vector<2x32xf32>, vector<2x32xf32> -> vector<2x128xf32>
    %c0_49 = arith.constant 0 : index
    %c0_50 = arith.constant 0 : index
    %152 = vector.load %arg2[%c0_49, %c0_50] : memref<2x2xf32, #tpu.memory_space<vmem>>, vector<2x2xf32>
    %153 = vector.extract_strided_slice %152 {offsets = [0, 0], sizes = [2, 1], strides = [1, 1]} : vector<2x2xf32> to vector<2x1xf32>
    %154 = vector.extract_strided_slice %152 {offsets = [0, 1], sizes = [2, 1], strides = [1, 1]} : vector<2x2xf32> to vector<2x1xf32>
    %155 = arith.truncf %151 : vector<2x128xf32> to vector<2x128xbf16>
    %c328 = arith.constant 328 : index
    %c0_51 = arith.constant 0 : index
    %156 = vector.load %arg3[%c328, %c0_51] : memref<456x64xbf16, #tpu.memory_space<vmem>>, vector<128x64xbf16>
    %cst_52 = arith.constant dense<0.000000e+00> : vector<2x64xf32>
    %157 = tpu.matmul %155, %156, %cst_52 {dimension_numbers = #tpu.dot_dimension_numbers<[1], [0], [0], [1], [0, 0, 1, 1], [], []>} : vector<2x128xbf16>, vector<128x64xbf16>, vector<2x64xf32> -> vector<2x64xf32>
    %158 = vector.extract_strided_slice %0 {offsets = [3, 0], sizes = [1, 64], strides = [1, 1]} : vector<8x64xf32> to vector<1x64xf32>
    %159 = vector.broadcast %153 : vector<2x1xf32> to vector<2x64xf32>
    %160 = vector.broadcast %158 : vector<1x64xf32> to vector<2x64xf32>
    %161 = arith.mulf %159, %160 : vector<2x64xf32>
    %162 = arith.addf %157, %161 : vector<2x64xf32>
    %163 = vector.extract_strided_slice %0 {offsets = [4, 0], sizes = [1, 64], strides = [1, 1]} : vector<8x64xf32> to vector<1x64xf32>
    %164 = vector.broadcast %154 : vector<2x1xf32> to vector<2x64xf32>
    %165 = vector.broadcast %163 : vector<1x64xf32> to vector<2x64xf32>
    %166 = arith.mulf %164, %165 : vector<2x64xf32>
    %167 = arith.addf %162, %166 : vector<2x64xf32>
    %168 = vector.extract_strided_slice %0 {offsets = [2, 0], sizes = [1, 64], strides = [1, 1]} : vector<8x64xf32> to vector<1x64xf32>
    %169 = vector.broadcast %168 : vector<1x64xf32> to vector<2x64xf32>
    %170 = arith.addf %167, %169 : vector<2x64xf32>
    %cst_53 = arith.constant 0.000000e+00 : f32
    %171 = vector.broadcast %cst_53 : f32 to vector<2x64xf32>
    %172 = arith.maximumf %170, %171 : vector<2x64xf32>
    %173 = vector.extract_strided_slice %0 {offsets = [5, 0], sizes = [1, 64], strides = [1, 1]} : vector<8x64xf32> to vector<1x64xf32>
    %174 = vector.broadcast %173 : vector<1x64xf32> to vector<2x64xf32>
    %175 = arith.mulf %172, %174 : vector<2x64xf32>
    %cst_54 = arith.constant dense<0.000000e+00> : vector<2xf32>
    %176 = vector.multi_reduction <add>, %175, %cst_54 [1] : vector<2x64xf32> to vector<2xf32>
    %177 = vector.shape_cast %176 : vector<2xf32> to vector<2x1xf32>
    %178 = vector.extract_strided_slice %0 {offsets = [6, 0], sizes = [1, 1], strides = [1, 1]} : vector<8x64xf32> to vector<1x1xf32>
    %179 = vector.broadcast %178 : vector<1x1xf32> to vector<2x1xf32>
    %180 = arith.addf %177, %179 : vector<2x1xf32>
    %c0_55 = arith.constant 0 : index
    %c0_56 = arith.constant 0 : index
    %181 = vector.load %arg5[%c0_55, %c0_56] : memref<2x1xf32, #tpu.memory_space<vmem>>, vector<2x1xf32>
    tpu.vector_store %arg5[%c0_55, %c0_56], %180 {strides = array<i32>} : memref<2x1xf32, #tpu.memory_space<vmem>>, vector<2x1xf32>,
    return
  }
  func.func @transform_0(%arg0: i32) -> (i32, i32, i32, i32) {
    %c0_i32 = arith.constant 0 : i32
    %c0_i32_0 = arith.constant 0 : i32
    %c0_i32_1 = arith.constant 0 : i32
    %c0_i32_2 = arith.constant 0 : i32
    %c0_i32_3 = arith.constant 0 : i32
    return %c0_i32, %c0_i32_0, %c0_i32_1, %c0_i32_2 : i32, i32, i32, i32
  }
  func.func @transform_1(%arg0: i32) -> (i32, i32) {
    %c0_i32 = arith.constant 0 : i32
    %c0_i32_0 = arith.constant 0 : i32
    %c0_i32_1 = arith.constant 0 : i32
    return %c0_i32, %c0_i32_0 : i32, i32
  }
  func.func @transform_2(%arg0: i32) -> (i32, i32) {
    %c0_i32 = arith.constant 0 : i32
    %c0_i32_0 = arith.constant 0 : i32
    %c0_i32_1 = arith.constant 0 : i32
    return %c0_i32, %c0_i32_0 : i32, i32
  }
  func.func @transform_3(%arg0: i32) -> (i32, i32) {
    %c0_i32 = arith.constant 0 : i32
    %c0_i32_0 = arith.constant 0 : i32
    %c0_i32_1 = arith.constant 0 : i32
    return %c0_i32, %c0_i32_0 : i32, i32
  }
  func.func @transform_4(%arg0: i32) -> (i32, i32) {
    %c0_i32 = arith.constant 0 : i32
    %c0_i32_0 = arith.constant 0 : i32
    %c0_i32_1 = arith.constant 0 : i32
    return %c0_i32, %c0_i32_0 : i32, i32
  }
}

</mosaic_0001>

<llo_original>
// kernel: cnn_forward.1
$region0: #{cnn_forward.1}
  #allocation0 [shape = 'u32[]', space=smem, size = 0x4, offset = 0x4, fixed_abs, tag = 'smem constant byte address 0x4 - core index']
  #allocation1 [shape = 'u32[144,128]{1,0:T(1,128)}', space=vmem, size = 0x12000, scoped, tag = 'internal scratch']
  %s0 = inlined_call_operand.vmem [shape: f32[2,16,16,4], index: 0, kind: input, shape index: {}]
  %s1 = inlined_call_operand.vmem [shape: f32[2,2], index: 1, kind: input, shape index: {}]
  %s2 = inlined_call_operand.vmem [shape: bf16[456,64], index: 2, kind: input, shape index: {}]
  %s3 = inlined_call_operand.vmem [shape: f32[8,64], index: 3, kind: input, shape index: {}]
  %s4 = inlined_call_operand.vmem [shape: f32[2,1], index: 4, kind: output, shape index: {}]
  %s5 = sld [smem:[#allocation0]]
  $region26: #{cnn_forward.1} parent=0
    _
  %s7 = ssub.s32 1, %s5
  %s8 = scalar_select 0, %s7, %s5
  // Predicated region
  $region2: #{cnn_forward.1} parent=0 // pred_check
    _
  $region3: #{cnn_forward.1} parent=0 // pred_check_branch
    %10 = sbr.rel (0) target = $region5
  $region4: #{cnn_forward.1} parent=0 // pred_region
    _
  $region5: #{cnn_forward.1} parent=0 // pred_fallthru
    _
  // Predicated region
  $region6: #{cnn_forward.1} parent=0 // pred_check
    _
  $region7: #{cnn_forward.1} parent=0 // pred_check_branch
    %12 = sbr.rel (0) target = $region9
  $region8: #{cnn_forward.1} parent=0 // pred_region
    _
  $region9: #{cnn_forward.1} parent=0 // pred_fallthru
    _
  // Predicated region
  $region10: #{cnn_forward.1} parent=0 // pred_check
    _
  $region11: #{cnn_forward.1} parent=0 // pred_check_branch
    %14 = sbr.rel (0) target = $region13
  $region12: #{cnn_forward.1} parent=0 // pred_region
    _
  $region13: #{cnn_forward.1} parent=0 // pred_fallthru
    _
  // Predicated region
  $region14: #{cnn_forward.1} parent=0 // pred_check
    _
  $region15: #{cnn_forward.1} parent=0 // pred_check_branch
    %16 = sbr.rel (0) target = $region17
  $region16: #{cnn_forward.1} parent=0 // pred_region
    _
  $region17: #{cnn_forward.1} parent=0 // pred_fallthru
    _
  %v18 = vld [vmem:[%s3] sm:$0xff]
  %v19 = vld [vmem:[%s0] sm:$0xff]
  %v20 = vld [vmem:[%s0 + $0x8] sm:$0xff]
  %v21 = vld [vmem:[%s0 + $0x10] sm:$0xff]
  %v22 = vld [vmem:[%s0 + $0x18] sm:$0xff]
  %v23 = vld [vmem:[%s0 + $0x20] sm:$0xff]
  %v24 = vld [vmem:[%s0 + $0x28] sm:$0xff]
  %v25 = vld [vmem:[%s0 + $0x30] sm:$0xff]
  %v26 = vld [vmem:[%s0 + $0x38] sm:$0xff]
  %v27 = vld [vmem:[%s0 + $0x40] sm:$0xff]
  %v28 = vld [vmem:[%s0 + $0x48] sm:$0xff]
  %v29 = vld [vmem:[%s0 + $0x50] sm:$0xff]
  %v30 = vld [vmem:[%s0 + $0x58] sm:$0xff]
  %v31 = vld [vmem:[%s0 + $0x60] sm:$0xff]
  %v32 = vld [vmem:[%s0 + $0x68] sm:$0xff]
  %v33 = vld [vmem:[%s0 + $0x70] sm:$0xff]
  %v34 = vld [vmem:[%s0 + $0x78] sm:$0xff]
  %v35 = vld [vmem:[%s0 + $0x80] sm:$0xff]
  %v36 = vld [vmem:[%s0 + $0x88] sm:$0xff]
  %v37 = vld [vmem:[%s0 + $0x90] sm:$0xff]
  %v38 = vld [vmem:[%s0 + $0x98] sm:$0xff]
  %v39 = vld [vmem:[%s0 + $0xa0] sm:$0xff]
  %v40 = vld [vmem:[%s0 + $0xa8] sm:$0xff]
  %v41 = vld [vmem:[%s0 + $0xb0] sm:$0xff]
  %v42 = vld [vmem:[%s0 + $0xb8] sm:$0xff]
  %v43 = vld [vmem:[%s0 + $0xc0] sm:$0xff]
  %v44 = vld [vmem:[%s0 + $0xc8] sm:$0xff]
  %v45 = vld [vmem:[%s0 + $0xd0] sm:$0xff]
  %v46 = vld [vmem:[%s0 + $0xd8] sm:$0xff]
  %v47 = vld [vmem:[%s0 + $0xe0] sm:$0xff]
  %v48 = vld [vmem:[%s0 + $0xe8] sm:$0xff]
  %v49 = vld [vmem:[%s0 + $0xf0] sm:$0xff]
  %v50 = vld [vmem:[%s0 + $0xf8] sm:$0xff]
  %v51 = vld [vmem:[%s0 + $0x100] sm:$0xff]
  %v52 = vld [vmem:[%s0 + $0x108] sm:$0xff]
  %v53 = vld [vmem:[%s0 + $0x110] sm:$0xff]
  %v54 = vld [vmem:[%s0 + $0x118] sm:$0xff]
  %v55 = vld [vmem:[%s0 + $0x120] sm:$0xff]
  %v56 = vld [vmem:[%s0 + $0x128] sm:$0xff]
  %v57 = vld [vmem:[%s0 + $0x130] sm:$0xff]
  %v58 = vld [vmem:[%s0 + $0x138] sm:$0xff]
  %v59 = vld [vmem:[%s0 + $0x140] sm:$0xff]
  %v60 = vld [vmem:[%s0 + $0x148] sm:$0xff]
  %v61 = vld [vmem:[%s0 + $0x150] sm:$0xff]
  %v62 = vld [vmem:[%s0 + $0x158] sm:$0xff]
  %v63 = vld [vmem:[%s0 + $0x160] sm:$0xff]
  %v64 = vld [vmem:[%s0 + $0x168] sm:$0xff]
  %v65 = vld [vmem:[%s0 + $0x170] sm:$0xff]
  %v66 = vld [vmem:[%s0 + $0x178] sm:$0xff]
  %v67 = vld [vmem:[%s0 + $0x180] sm:$0xff]
  %v68 = vld [vmem:[%s0 + $0x188] sm:$0xff]
  %v69 = vld [vmem:[%s0 + $0x190] sm:$0xff]
  %v70 = vld [vmem:[%s0 + $0x198] sm:$0xff]
  %v71 = vld [vmem:[%s0 + $0x1a0] sm:$0xff]
  %v72 = vld [vmem:[%s0 + $0x1a8] sm:$0xff]
  %v73 = vld [vmem:[%s0 + $0x1b0] sm:$0xff]
  %v74 = vld [vmem:[%s0 + $0x1b8] sm:$0xff]
  %v75 = vld [vmem:[%s0 + $0x1c0] sm:$0xff]
  %v76 = vld [vmem:[%s0 + $0x1c8] sm:$0xff]
  %v77 = vld [vmem:[%s0 + $0x1d0] sm:$0xff]
  %v78 = vld [vmem:[%s0 + $0x1d8] sm:$0xff]
  %v79 = vld [vmem:[%s0 + $0x1e0] sm:$0xff]
  %v80 = vld [vmem:[%s0 + $0x1e8] sm:$0xff]
  %v81 = vld [vmem:[%s0 + $0x1f0] sm:$0xff]
  %v82 = vld [vmem:[%s0 + $0x1f8] sm:$0xff]
  %v83 = vrot.slane %v19, 7
  %v84 = vrot.slane %v21, 7
  %v85 = vrot.slane %v23, 7
  %v86 = vrot.slane %v25, 7
  %v87 = vrot.slane %v27, 7
  %v88 = vrot.slane %v29, 7
  %v89 = vrot.slane %v31, 7
  %v90 = vrot.slane %v33, 7
  %v91 = vrot.slane %v35, 7
  %v92 = vrot.slane %v37, 7
  %v93 = vrot.slane %v39, 7
  %v94 = vrot.slane %v41, 7
  %v95 = vrot.slane %v43, 7
  %v96 = vrot.slane %v45, 7
  %v97 = vrot.slane %v47, 7
  %v98 = vrot.slane %v49, 7
  %v99 = vrot.slane %v51, 7
  %v100 = vrot.slane %v53, 7
  %v101 = vrot.slane %v55, 7
  %v102 = vrot.slane %v57, 7
  %v103 = vrot.slane %v59, 7
  %v104 = vrot.slane %v61, 7
  %v105 = vrot.slane %v63, 7
  %v106 = vrot.slane %v65, 7
  %v107 = vrot.slane %v67, 7
  %v108 = vrot.slane %v69, 7
  %v109 = vrot.slane %v71, 7
  %v110 = vrot.slane %v73, 7
  %v111 = vrot.slane %v75, 7
  %v112 = vrot.slane %v77, 7
  %v113 = vrot.slane %v79, 7
  %v114 = vrot.slane %v81, 7
  %v115 = vrot.slane %v20, 7
  %v116 = vrot.slane %v22, 7
  %v117 = vrot.slane %v24, 7
  %v118 = vrot.slane %v26, 7
  %v119 = vrot.slane %v28, 7
  %v120 = vrot.slane %v30, 7
  %v121 = vrot.slane %v32, 7
  %v122 = vrot.slane %v34, 7
  %v123 = vrot.slane %v36, 7
  %v124 = vrot.slane %v38, 7
  %v125 = vrot.slane %v40, 7
  %v126 = vrot.slane %v42, 7
  %v127 = vrot.slane %v44, 7
  %v128 = vrot.slane %v46, 7
  %v129 = vrot.slane %v48, 7
  %v130 = vrot.slane %v50, 7
  %v131 = vrot.slane %v52, 7
  %v132 = vrot.slane %v54, 7
  %v133 = vrot.slane %v56, 7
  %v134 = vrot.slane %v58, 7
  %v135 = vrot.slane %v60, 7
  %v136 = vrot.slane %v62, 7
  %v137 = vrot.slane %v64, 7
  %v138 = vrot.slane %v66, 7
  %v139 = vrot.slane %v68, 7
  %v140 = vrot.slane %v70, 7
  %v141 = vrot.slane %v72, 7
  %v142 = vrot.slane %v74, 7
  %v143 = vrot.slane %v76, 7
  %v144 = vrot.slane %v78, 7
  %v145 = vrot.slane %v80, 7
  %v146 = vrot.slane %v82, 7
  %v147 = vlaneseq
  %v148 = vshrl.u32 %v147, 7
  %vm149 = vcmp.lt.s32.totalorder %v148, 1
  %v150 = vsel %vm149, %v83, %v115
  %v151 = vsel %vm149, %v84, %v116
  %v152 = vsel %vm149, %v85, %v117
  %v153 = vsel %vm149, %v86, %v118
  %v154 = vsel %vm149, %v87, %v119
  %v155 = vsel %vm149, %v88, %v120
  %v156 = vsel %vm149, %v89, %v121
  %v157 = vsel %vm149, %v90, %v122
  %v158 = vsel %vm149, %v91, %v123
  %v159 = vsel %vm149, %v92, %v124
  %v160 = vsel %vm149, %v93, %v125
  %v161 = vsel %vm149, %v94, %v126
  %v162 = vsel %vm149, %v95, %v127
  %v163 = vsel %vm149, %v96, %v128
  %v164 = vsel %vm149, %v97, %v129
  %v165 = vsel %vm149, %v98, %v130
  %v166 = vsel %vm149, %v99, %v131
  %v167 = vsel %vm149, %v100, %v132
  %v168 = vsel %vm149, %v101, %v133
  %v169 = vsel %vm149, %v102, %v134
  %v170 = vsel %vm149, %v103, %v135
  %v171 = vsel %vm149, %v104, %v136
  %v172 = vsel %vm149, %v105, %v137
  %v173 = vsel %vm149, %v106, %v138
  %v174 = vsel %vm149, %v107, %v139
  %v175 = vsel %vm149, %v108, %v140
  %v176 = vsel %vm149, %v109, %v141
  %v177 = vsel %vm149, %v110, %v142
  %v178 = vsel %vm149, %v111, %v143
  %v179 = vsel %vm149, %v112, %v144
  %v180 = vsel %vm149, %v113, %v145
  %v181 = vsel %vm149, %v114, %v146
  %v182 = vsel %vm149, %v115, %v83
  %v183 = vsel %vm149, %v116, %v84
  %v184 = vsel %vm149, %v117, %v85
  %v185 = vsel %vm149, %v118, %v86
  %v186 = vsel %vm149, %v119, %v87
  %v187 = vsel %vm149, %v120, %v88
  %v188 = vsel %vm149, %v121, %v89
  %v189 = vsel %vm149, %v122, %v90
  %v190 = vsel %vm149, %v123, %v91
  %v191 = vsel %vm149, %v124, %v92
  %v192 = vsel %vm149, %v125, %v93
  %v193 = vsel %vm149, %v126, %v94
  %v194 = vsel %vm149, %v127, %v95
  %v195 = vsel %vm149, %v128, %v96
  %v196 = vsel %vm149, %v129, %v97
  %v197 = vsel %vm149, %v130, %v98
  %v198 = vsel %vm149, %v131, %v99
  %v199 = vsel %vm149, %v132, %v100
  %v200 = vsel %vm149, %v133, %v101
  %v201 = vsel %vm149, %v134, %v102
  %v202 = vsel %vm149, %v135, %v103
  %v203 = vsel %vm149, %v136, %v104
  %v204 = vsel %vm149, %v137, %v105
  %v205 = vsel %vm149, %v138, %v106
  %v206 = vsel %vm149, %v139, %v107
  %v207 = vsel %vm149, %v140, %v108
  %v208 = vsel %vm149, %v141, %v109
  %v209 = vsel %vm149, %v142, %v110
  %v210 = vsel %vm149, %v143, %v111
  %v211 = vsel %vm149, %v144, %v112
  %v212 = vsel %vm149, %v145, %v113
  %v213 = vsel %vm149, %v146, %v114
  %v214 = vadd.s32 %v148, 8
  %v215 = vadd.s32 %v148, 4294967295
  %v216 = vadd.s32 %v214, 4294967295
  %vm217 = vcmp.ge.s32.totalorder %v215, 0
  %vm218 = vcmp.ge.s32.totalorder %v216, 0
  %vm219 = vcmp.le.s32.totalorder %v215, 15
  %vm220 = vcmp.le.s32.totalorder %v216, 15
  %vm221 = vmand %vm217, %vm219
  %vm222 = vmand %vm218, %vm220
  %v223 = vsel %vm221, %v182, 0.0
  %v224 = vsel %vm222, %v150, 0.0
  %v225 = vsel %vm221, %v183, 0.0
  %v226 = vsel %vm222, %v151, 0.0
  %v227 = vsel %vm221, %v184, 0.0
  %v228 = vsel %vm222, %v152, 0.0
  %v229 = vsel %vm221, %v185, 0.0
  %v230 = vsel %vm222, %v153, 0.0
  %v231 = vsel %vm221, %v186, 0.0
  %v232 = vsel %vm222, %v154, 0.0
  %v233 = vsel %vm221, %v187, 0.0
  %v234 = vsel %vm222, %v155, 0.0
  %v235 = vsel %vm221, %v188, 0.0
  %v236 = vsel %vm222, %v156, 0.0
  %v237 = vsel %vm221, %v189, 0.0
  %v238 = vsel %vm222, %v157, 0.0
  %v239 = vsel %vm221, %v190, 0.0
  %v240 = vsel %vm222, %v158, 0.0
  %v241 = vsel %vm221, %v191, 0.0
  %v242 = vsel %vm222, %v159, 0.0
  %v243 = vsel %vm221, %v192, 0.0
  %v244 = vsel %vm222, %v160, 0.0
  %v245 = vsel %vm221, %v193, 0.0
  %v246 = vsel %vm222, %v161, 0.0
  %v247 = vsel %vm221, %v194, 0.0
  %v248 = vsel %vm222, %v162, 0.0
  %v249 = vsel %vm221, %v195, 0.0
  %v250 = vsel %vm222, %v163, 0.0
  %v251 = vsel %vm221, %v196, 0.0
  %v252 = vsel %vm222, %v164, 0.0
  %v253 = vsel %vm221, %v197, 0.0
  %v254 = vsel %vm222, %v165, 0.0
  %v255 = vsel %vm221, %v198, 0.0
  %v256 = vsel %vm222, %v166, 0.0
  %v257 = vsel %vm221, %v199, 0.0
  %v258 = vsel %vm222, %v167, 0.0
  %v259 = vsel %vm221, %v200, 0.0
  %v260 = vsel %vm222, %v168, 0.0
  %v261 = vsel %vm221, %v201, 0.0
  %v262 = vsel %vm222, %v169, 0.0
  %v263 = vsel %vm221, %v202, 0.0
  %v264 = vsel %vm222, %v170, 0.0
  %v265 = vsel %vm221, %v203, 0.0
  %v266 = vsel %vm222, %v171, 0.0
  %v267 = vsel %vm221, %v204, 0.0
  %v268 = vsel %vm222, %v172, 0.0
  %v269 = vsel %vm221, %v205, 0.0
  %v270 = vsel %vm222, %v173, 0.0
  %v271 = vsel %vm221, %v206, 0.0
  %v272 = vsel %vm222, %v174, 0.0
  %v273 = vsel %vm221, %v207, 0.0
  %v274 = vsel %vm222, %v175, 0.0
  %v275 = vsel %vm221, %v208, 0.0
  %v276 = vsel %vm222, %v176, 0.0
  %v277 = vsel %vm221, %v209, 0.0
  %v278 = vsel %vm222, %v177, 0.0
  %v279 = vsel %vm221, %v210, 0.0
  %v280 = vsel %vm222, %v178, 0.0
  %v281 = vsel %vm221, %v211, 0.0
  %v282 = vsel %vm222, %v179, 0.0
  %v283 = vsel %vm221, %v212, 0.0
  %v284 = vsel %vm222, %v180, 0.0
  %v285 = vsel %vm221, %v213, 0.0
  %v286 = vsel %vm222, %v181, 0.0
  %v287 = vpack.c.bf16 %v224, %v223
  %v288 = vpack.c.bf16 %v226, %v225
  %v289 = vpack.c.bf16 %v228, %v227
  %v290 = vpack.c.bf16 %v230, %v229
  %v291 = vpack.c.bf16 %v232, %v231
  %v292 = vpack.c.bf16 %v234, %v233
  %v293 = vpack.c.bf16 %v236, %v235
  %v294 = vpack.c.bf16 %v238, %v237
  %v295 = vpack.c.bf16 %v240, %v239
  %v296 = vpack.c.bf16 %v242, %v241
  %v297 = vpack.c.bf16 %v244, %v243
  %v298 = vpack.c.bf16 %v246, %v245
  %v299 = vpack.c.bf16 %v248, %v247
  %v300 = vpack.c.bf16 %v250, %v249
  %v301 = vpack.c.bf16 %v252, %v251
  %v302 = vpack.c.bf16 %v254, %v253
  %v303 = vpack.c.bf16 %v256, %v255
  %v304 = vpack.c.bf16 %v258, %v257
  %v305 = vpack.c.bf16 %v260, %v259
  %v306 = vpack.c.bf16 %v262, %v261
  %v307 = vpack.c.bf16 %v264, %v263
  %v308 = vpack.c.bf16 %v266, %v265
  %v309 = vpack.c.bf16 %v268, %v267
  %v310 = vpack.c.bf16 %v270, %v269
  %v311 = vpack.c.bf16 %v272, %v271
  %v312 = vpack.c.bf16 %v274, %v273
  %v313 = vpack.c.bf16 %v276, %v275
  %v314 = vpack.c.bf16 %v278, %v277
  %v315 = vpack.c.bf16 %v280, %v279
  %v316 = vpack.c.bf16 %v282, %v281
  %v317 = vpack.c.bf16 %v284, %v283
  %v318 = vpack.c.bf16 %v286, %v285
  %v319 = vpack.c.bf16 %v20, %v19
  %v320 = vpack.c.bf16 %v22, %v21
  %v321 = vpack.c.bf16 %v24, %v23
  %v322 = vpack.c.bf16 %v26, %v25
  %v323 = vpack.c.bf16 %v28, %v27
  %v324 = vpack.c.bf16 %v30, %v29
  %v325 = vpack.c.bf16 %v32, %v31
  %v326 = vpack.c.bf16 %v34, %v33
  %v327 = vpack.c.bf16 %v36, %v35
  %v328 = vpack.c.bf16 %v38, %v37
  %v329 = vpack.c.bf16 %v40, %v39
  %v330 = vpack.c.bf16 %v42, %v41
  %v331 = vpack.c.bf16 %v44, %v43
  %v332 = vpack.c.bf16 %v46, %v45
  %v333 = vpack.c.bf16 %v48, %v47
  %v334 = vpack.c.bf16 %v50, %v49
  %v335 = vpack.c.bf16 %v52, %v51
  %v336 = vpack.c.bf16 %v54, %v53
  %v337 = vpack.c.bf16 %v56, %v55
  %v338 = vpack.c.bf16 %v58, %v57
  %v339 = vpack.c.bf16 %v60, %v59
  %v340 = vpack.c.bf16 %v62, %v61
  %v341 = vpack.c.bf16 %v64, %v63
  %v342 = vpack.c.bf16 %v66, %v65
  %v343 = vpack.c.bf16 %v68, %v67
  %v344 = vpack.c.bf16 %v70, %v69
  %v345 = vpack.c.bf16 %v72, %v71
  %v346 = vpack.c.bf16 %v74, %v73
  %v347 = vpack.c.bf16 %v76, %v75
  %v348 = vpack.c.bf16 %v78, %v77
  %v349 = vpack.c.bf16 %v80, %v79
  %v350 = vpack.c.bf16 %v82, %v81
  %v351 = vrot.slane %v19, 1
  %v352 = vrot.slane %v21, 1
  %v353 = vrot.slane %v23, 1
  %v354 = vrot.slane %v25, 1
  %v355 = vrot.slane %v27, 1
  %v356 = vrot.slane %v29, 1
  %v357 = vrot.slane %v31, 1
  %v358 = vrot.slane %v33, 1
  %v359 = vrot.slane %v35, 1
  %v360 = vrot.slane %v37, 1
  %v361 = vrot.slane %v39, 1
  %v362 = vrot.slane %v41, 1
  %v363 = vrot.slane %v43, 1
  %v364 = vrot.slane %v45, 1
  %v365 = vrot.slane %v47, 1
  %v366 = vrot.slane %v49, 1
  %v367 = vrot.slane %v51, 1
  %v368 = vrot.slane %v53, 1
  %v369 = vrot.slane %v55, 1
  %v370 = vrot.slane %v57, 1
  %v371 = vrot.slane %v59, 1
  %v372 = vrot.slane %v61, 1
  %v373 = vrot.slane %v63, 1
  %v374 = vrot.slane %v65, 1
  %v375 = vrot.slane %v67, 1
  %v376 = vrot.slane %v69, 1
  %v377 = vrot.slane %v71, 1
  %v378 = vrot.slane %v73, 1
  %v379 = vrot.slane %v75, 1
  %v380 = vrot.slane %v77, 1
  %v381 = vrot.slane %v79, 1
  %v382 = vrot.slane %v81, 1
  %v383 = vrot.slane %v20, 1
  %v384 = vrot.slane %v22, 1
  %v385 = vrot.slane %v24, 1
  %v386 = vrot.slane %v26, 1
  %v387 = vrot.slane %v28, 1
  %v388 = vrot.slane %v30, 1
  %v389 = vrot.slane %v32, 1
  %v390 = vrot.slane %v34, 1
  %v391 = vrot.slane %v36, 1
  %v392 = vrot.slane %v38, 1
  %v393 = vrot.slane %v40, 1
  %v394 = vrot.slane %v42, 1
  %v395 = vrot.slane %v44, 1
  %v396 = vrot.slane %v46, 1
  %v397 = vrot.slane %v48, 1
  %v398 = vrot.slane %v50, 1
  %v399 = vrot.slane %v52, 1
  %v400 = vrot.slane %v54, 1
  %v401 = vrot.slane %v56, 1
  %v402 = vrot.slane %v58, 1
  %v403 = vrot.slane %v60, 1
  %v404 = vrot.slane %v62, 1
  %v405 = vrot.slane %v64, 1
  %v406 = vrot.slane %v66, 1
  %v407 = vrot.slane %v68, 1
  %v408 = vrot.slane %v70, 1
  %v409 = vrot.slane %v72, 1
  %v410 = vrot.slane %v74, 1
  %v411 = vrot.slane %v76, 1
  %v412 = vrot.slane %v78, 1
  %v413 = vrot.slane %v80, 1
  %v414 = vrot.slane %v82, 1
  %vm415 = vcmp.lt.s32.totalorder %v148, 7
  %v416 = vsel %vm415, %v351, %v383
  %v417 = vsel %vm415, %v352, %v384
  %v418 = vsel %vm415, %v353, %v385
  %v419 = vsel %vm415, %v354, %v386
  %v420 = vsel %vm415, %v355, %v387
  %v421 = vsel %vm415, %v356, %v388
  %v422 = vsel %vm415, %v357, %v389
  %v423 = vsel %vm415, %v358, %v390
  %v424 = vsel %vm415, %v359, %v391
  %v425 = vsel %vm415, %v360, %v392
  %v426 = vsel %vm415, %v361, %v393
  %v427 = vsel %vm415, %v362, %v394
  %v428 = vsel %vm415, %v363, %v395
  %v429 = vsel %vm415, %v364, %v396
  %v430 = vsel %vm415, %v365, %v397
  %v431 = vsel %vm415, %v366, %v398
  %v432 = vsel %vm415, %v367, %v399
  %v433 = vsel %vm415, %v368, %v400
  %v434 = vsel %vm415, %v369, %v401
  %v435 = vsel %vm415, %v370, %v402
  %v436 = vsel %vm415, %v371, %v403
  %v437 = vsel %vm415, %v372, %v404
  %v438 = vsel %vm415, %v373, %v405
  %v439 = vsel %vm415, %v374, %v406
  %v440 = vsel %vm415, %v375, %v407
  %v441 = vsel %vm415, %v376, %v408
  %v442 = vsel %vm415, %v377, %v409
  %v443 = vsel %vm415, %v378, %v410
  %v444 = vsel %vm415, %v379, %v411
  %v445 = vsel %vm415, %v380, %v412
  %v446 = vsel %vm415, %v381, %v413
  %v447 = vsel %vm415, %v382, %v414
  %v448 = vsel %vm415, %v383, %v351
  %v449 = vsel %vm415, %v384, %v352
  %v450 = vsel %vm415, %v385, %v353
  %v451 = vsel %vm415, %v386, %v354
  %v452 = vsel %vm415, %v387, %v355
  %v453 = vsel %vm415, %v388, %v356
  %v454 = vsel %vm415, %v389, %v357
  %v455 = vsel %vm415, %v390, %v358
  %v456 = vsel %vm415, %v391, %v359
  %v457 = vsel %vm415, %v392, %v360
  %v458 = vsel %vm415, %v393, %v361
  %v459 = vsel %vm415, %v394, %v362
  %v460 = vsel %vm415, %v395, %v363
  %v461 = vsel %vm415, %v396, %v364
  %v462 = vsel %vm415, %v397, %v365
  %v463 = vsel %vm415, %v398, %v366
  %v464 = vsel %vm415, %v399, %v367
  %v465 = vsel %vm415, %v400, %v368
  %v466 = vsel %vm415, %v401, %v369
  %v467 = vsel %vm415, %v402, %v370
  %v468 = vsel %vm415, %v403, %v371
  %v469 = vsel %vm415, %v404, %v372
  %v470 = vsel %vm415, %v405, %v373
  %v471 = vsel %vm415, %v406, %v374
  %v472 = vsel %vm415, %v407, %v375
  %v473 = vsel %vm415, %v408, %v376
  %v474 = vsel %vm415, %v409, %v377
  %v475 = vsel %vm415, %v410, %v378
  %v476 = vsel %vm415, %v411, %v379
  %v477 = vsel %vm415, %v412, %v380
  %v478 = vsel %vm415, %v413, %v381
  %v479 = vsel %vm415, %v414, %v382
  %v480 = vadd.s32 %v148, 1
  %v481 = vadd.s32 %v214, 1
  %vm482 = vcmp.ge.s32.totalorder %v480, 0
  %vm483 = vcmp.ge.s32.totalorder %v481, 0
  %vm484 = vcmp.le.s32.totalorder %v480, 15
  %vm485 = vcmp.le.s32.totalorder %v481, 15
  %vm486 = vmand %vm482, %vm484
  %vm487 = vmand %vm483, %vm485
  %v488 = vsel %vm486, %v416, 0.0
  %v489 = vsel %vm487, %v448, 0.0
  %v490 = vsel %vm486, %v417, 0.0
  %v491 = vsel %vm487, %v449, 0.0
  %v492 = vsel %vm486, %v418, 0.0
  %v493 = vsel %vm487, %v450, 0.0
  %v494 = vsel %vm486, %v419, 0.0
  %v495 = vsel %vm487, %v451, 0.0
  %v496 = vsel %vm486, %v420, 0.0
  %v497 = vsel %vm487, %v452, 0.0
  %v498 = vsel %vm486, %v421, 0.0
  %v499 = vsel %vm487, %v453, 0.0
  %v500 = vsel %vm486, %v422, 0.0
  %v501 = vsel %vm487, %v454, 0.0
  %v502 = vsel %vm486, %v423, 0.0
  %v503 = vsel %vm487, %v455, 0.0
  %v504 = vsel %vm486, %v424, 0.0
  %v505 = vsel %vm487, %v456, 0.0
  %v506 = vsel %vm486, %v425, 0.0
  %v507 = vsel %vm487, %v457, 0.0
  %v508 = vsel %vm486, %v426, 0.0
  %v509 = vsel %vm487, %v458, 0.0
  %v510 = vsel %vm486, %v427, 0.0
  %v511 = vsel %vm487, %v459, 0.0
  %v512 = vsel %vm486, %v428, 0.0
  %v513 = vsel %vm487, %v460, 0.0
  %v514 = vsel %vm486, %v429, 0.0
  %v515 = vsel %vm487, %v461, 0.0
  %v516 = vsel %vm486, %v430, 0.0
  %v517 = vsel %vm487, %v462, 0.0
  %v518 = vsel %vm486, %v431, 0.0
  %v519 = vsel %vm487, %v463, 0.0
  %v520 = vsel %vm486, %v432, 0.0
  %v521 = vsel %vm487, %v464, 0.0
  %v522 = vsel %vm486, %v433, 0.0
  %v523 = vsel %vm487, %v465, 0.0
  %v524 = vsel %vm486, %v434, 0.0
  %v525 = vsel %vm487, %v466, 0.0
  %v526 = vsel %vm486, %v435, 0.0
  %v527 = vsel %vm487, %v467, 0.0
  %v528 = vsel %vm486, %v436, 0.0
  %v529 = vsel %vm487, %v468, 0.0
  %v530 = vsel %vm486, %v437, 0.0
  %v531 = vsel %vm487, %v469, 0.0
  %v532 = vsel %vm486, %v438, 0.0
  %v533 = vsel %vm487, %v470, 0.0
  %v534 = vsel %vm486, %v439, 0.0
  %v535 = vsel %vm487, %v471, 0.0
  %v536 = vsel %vm486, %v440, 0.0
  %v537 = vsel %vm487, %v472, 0.0
  %v538 = vsel %vm486, %v441, 0.0
  %v539 = vsel %vm487, %v473, 0.0
  %v540 = vsel %vm486, %v442, 0.0
  %v541 = vsel %vm487, %v474, 0.0
  %v542 = vsel %vm486, %v443, 0.0
  %v543 = vsel %vm487, %v475, 0.0
  %v544 = vsel %vm486, %v444, 0.0
  %v545 = vsel %vm487, %v476, 0.0
  %v546 = vsel %vm486, %v445, 0.0
  %v547 = vsel %vm487, %v477, 0.0
  %v548 = vsel %vm486, %v446, 0.0
  %v549 = vsel %vm487, %v478, 0.0
  %v550 = vsel %vm486, %v447, 0.0
  %v551 = vsel %vm487, %v479, 0.0
  %v552 = vpack.c.bf16 %v489, %v488
  %v553 = vpack.c.bf16 %v491, %v490
  %v554 = vpack.c.bf16 %v493, %v492
  %v555 = vpack.c.bf16 %v495, %v494
  %v556 = vpack.c.bf16 %v497, %v496
  %v557 = vpack.c.bf16 %v499, %v498
  %v558 = vpack.c.bf16 %v501, %v500
  %v559 = vpack.c.bf16 %v503, %v502
  %v560 = vpack.c.bf16 %v505, %v504
  %v561 = vpack.c.bf16 %v507, %v506
  %v562 = vpack.c.bf16 %v509, %v508
  %v563 = vpack.c.bf16 %v511, %v510
  %v564 = vpack.c.bf16 %v513, %v512
  %v565 = vpack.c.bf16 %v515, %v514
  %v566 = vpack.c.bf16 %v517, %v516
  %v567 = vpack.c.bf16 %v519, %v518
  %v568 = vpack.c.bf16 %v521, %v520
  %v569 = vpack.c.bf16 %v523, %v522
  %v570 = vpack.c.bf16 %v525, %v524
  %v571 = vpack.c.bf16 %v527, %v526
  %v572 = vpack.c.bf16 %v529, %v528
  %v573 = vpack.c.bf16 %v531, %v530
  %v574 = vpack.c.bf16 %v533, %v532
  %v575 = vpack.c.bf16 %v535, %v534
  %v576 = vpack.c.bf16 %v537, %v536
  %v577 = vpack.c.bf16 %v539, %v538
  %v578 = vpack.c.bf16 %v541, %v540
  %v579 = vpack.c.bf16 %v543, %v542
  %v580 = vpack.c.bf16 %v545, %v544
  %v581 = vpack.c.bf16 %v547, %v546
  %v582 = vpack.c.bf16 %v549, %v548
  %v583 = vpack.c.bf16 %v551, %v550
  %615 = vrot.lane.b32.xlu0 0, 4
  %v616 = vpop.permute.xlu0 %615
  %617 = vrot.lane.b32.xlu0 %v319, 4
  %v618 = vpop.permute.xlu0 %617
  %619 = vrot.lane.b32.xlu0 %v320, 4
  %v620 = vpop.permute.xlu0 %619
  %621 = vrot.lane.b32.xlu0 %v321, 4
  %v622 = vpop.permute.xlu0 %621
  %623 = vrot.lane.b32.xlu0 %v322, 4
  %v624 = vpop.permute.xlu0 %623
  %625 = vrot.lane.b32.xlu0 %v323, 4
  %v626 = vpop.permute.xlu0 %625
  %627 = vrot.lane.b32.xlu0 %v324, 4
  %v628 = vpop.permute.xlu0 %627
  %629 = vrot.lane.b32.xlu0 %v325, 4
  %v630 = vpop.permute.xlu0 %629
  %631 = vrot.lane.b32.xlu0 %v326, 4
  %v632 = vpop.permute.xlu0 %631
  %633 = vrot.lane.b32.xlu0 %v327, 4
  %v634 = vpop.permute.xlu0 %633
  %635 = vrot.lane.b32.xlu0 %v328, 4
  %v636 = vpop.permute.xlu0 %635
  %637 = vrot.lane.b32.xlu0 %v329, 4
  %v638 = vpop.permute.xlu0 %637
  %639 = vrot.lane.b32.xlu0 %v330, 4
  %v640 = vpop.permute.xlu0 %639
  %641 = vrot.lane.b32.xlu0 %v331, 4
  %v642 = vpop.permute.xlu0 %641
  %643 = vrot.lane.b32.xlu0 %v332, 4
  %v644 = vpop.permute.xlu0 %643
  %645 = vrot.lane.b32.xlu0 %v333, 4
  %v646 = vpop.permute.xlu0 %645
  %647 = vrot.lane.b32.xlu0 %v335, 4
  %v648 = vpop.permute.xlu0 %647
  %649 = vrot.lane.b32.xlu0 %v336, 4
  %v650 = vpop.permute.xlu0 %649
  %651 = vrot.lane.b32.xlu0 %v337, 4
  %v652 = vpop.permute.xlu0 %651
  %653 = vrot.lane.b32.xlu0 %v338, 4
  %v654 = vpop.permute.xlu0 %653
  %655 = vrot.lane.b32.xlu0 %v339, 4
  %v656 = vpop.permute.xlu0 %655
  %657 = vrot.lane.b32.xlu0 %v340, 4
  %v658 = vpop.permute.xlu0 %657
  %659 = vrot.lane.b32.xlu0 %v341, 4
  %v660 = vpop.permute.xlu0 %659
  %661 = vrot.lane.b32.xlu0 %v342, 4
  %v662 = vpop.permute.xlu0 %661
  %663 = vrot.lane.b32.xlu0 %v343, 4
  %v664 = vpop.permute.xlu0 %663
  %665 = vrot.lane.b32.xlu0 %v344, 4
  %v666 = vpop.permute.xlu0 %665
  %667 = vrot.lane.b32.xlu0 %v345, 4
  %v668 = vpop.permute.xlu0 %667
  %669 = vrot.lane.b32.xlu0 %v346, 4
  %v670 = vpop.permute.xlu0 %669
  %671 = vrot.lane.b32.xlu0 %v347, 4
  %v672 = vpop.permute.xlu0 %671
  %673 = vrot.lane.b32.xlu0 %v348, 4
  %v674 = vpop.permute.xlu0 %673
  %675 = vrot.lane.b32.xlu0 %v349, 4
  %v676 = vpop.permute.xlu0 %675
  %707 = vrot.lane.b32.xlu0 0, 8
  %v708 = vpop.permute.xlu0 %707
  %709 = vrot.lane.b32.xlu0 %v552, 8
  %v710 = vpop.permute.xlu0 %709
  %711 = vrot.lane.b32.xlu0 %v553, 8
  %v712 = vpop.permute.xlu0 %711
  %713 = vrot.lane.b32.xlu0 %v554, 8
  %v714 = vpop.permute.xlu0 %713
  %715 = vrot.lane.b32.xlu0 %v555, 8
  %v716 = vpop.permute.xlu0 %715
  %717 = vrot.lane.b32.xlu0 %v556, 8
  %v718 = vpop.permute.xlu0 %717
  %719 = vrot.lane.b32.xlu0 %v557, 8
  %v720 = vpop.permute.xlu0 %719
  %721 = vrot.lane.b32.xlu0 %v558, 8
  %v722 = vpop.permute.xlu0 %721
  %723 = vrot.lane.b32.xlu0 %v559, 8
  %v724 = vpop.permute.xlu0 %723
  %725 = vrot.lane.b32.xlu0 %v560, 8
  %v726 = vpop.permute.xlu0 %725
  %727 = vrot.lane.b32.xlu0 %v561, 8
  %v728 = vpop.permute.xlu0 %727
  %729 = vrot.lane.b32.xlu0 %v562, 8
  %v730 = vpop.permute.xlu0 %729
  %731 = vrot.lane.b32.xlu0 %v563, 8
  %v732 = vpop.permute.xlu0 %731
  %733 = vrot.lane.b32.xlu0 %v564, 8
  %v734 = vpop.permute.xlu0 %733
  %735 = vrot.lane.b32.xlu0 %v565, 8
  %v736 = vpop.permute.xlu0 %735
  %737 = vrot.lane.b32.xlu0 %v566, 8
  %v738 = vpop.permute.xlu0 %737
  %739 = vrot.lane.b32.xlu0 %v568, 8
  %v740 = vpop.permute.xlu0 %739
  %741 = vrot.lane.b32.xlu0 %v569, 8
  %v742 = vpop.permute.xlu0 %741
  %743 = vrot.lane.b32.xlu0 %v570, 8
  %v744 = vpop.permute.xlu0 %743
  %745 = vrot.lane.b32.xlu0 %v571, 8
  %v746 = vpop.permute.xlu0 %745
  %747 = vrot.lane.b32.xlu0 %v572, 8
  %v748 = vpop.permute.xlu0 %747
  %749 = vrot.lane.b32.xlu0 %v573, 8
  %v750 = vpop.permute.xlu0 %749
  %751 = vrot.lane.b32.xlu0 %v574, 8
  %v752 = vpop.permute.xlu0 %751
  %753 = vrot.lane.b32.xlu0 %v575, 8
  %v754 = vpop.permute.xlu0 %753
  %755 = vrot.lane.b32.xlu0 %v576, 8
  %v756 = vpop.permute.xlu0 %755
  %757 = vrot.lane.b32.xlu0 %v577, 8
  %v758 = vpop.permute.xlu0 %757
  %759 = vrot.lane.b32.xlu0 %v578, 8
  %v760 = vpop.permute.xlu0 %759
  %761 = vrot.lane.b32.xlu0 %v579, 8
  %v762 = vpop.permute.xlu0 %761
  %763 = vrot.lane.b32.xlu0 %v580, 8
  %v764 = vpop.permute.xlu0 %763
  %765 = vrot.lane.b32.xlu0 %v581, 8
  %v766 = vpop.permute.xlu0 %765
  %767 = vrot.lane.b32.xlu0 %v582, 8
  %v768 = vpop.permute.xlu0 %767
  %801 = vrot.lane.b32.xlu0 %v287, 12
  %v802 = vpop.permute.xlu0 %801
  %803 = vrot.lane.b32.xlu0 %v288, 12
  %v804 = vpop.permute.xlu0 %803
  %805 = vrot.lane.b32.xlu0 %v289, 12
  %v806 = vpop.permute.xlu0 %805
  %807 = vrot.lane.b32.xlu0 %v290, 12
  %v808 = vpop.permute.xlu0 %807
  %809 = vrot.lane.b32.xlu0 %v291, 12
  %v810 = vpop.permute.xlu0 %809
  %811 = vrot.lane.b32.xlu0 %v292, 12
  %v812 = vpop.permute.xlu0 %811
  %813 = vrot.lane.b32.xlu0 %v293, 12
  %v814 = vpop.permute.xlu0 %813
  %815 = vrot.lane.b32.xlu0 %v294, 12
  %v816 = vpop.permute.xlu0 %815
  %817 = vrot.lane.b32.xlu0 %v295, 12
  %v818 = vpop.permute.xlu0 %817
  %819 = vrot.lane.b32.xlu0 %v296, 12
  %v820 = vpop.permute.xlu0 %819
  %821 = vrot.lane.b32.xlu0 %v297, 12
  %v822 = vpop.permute.xlu0 %821
  %823 = vrot.lane.b32.xlu0 %v298, 12
  %v824 = vpop.permute.xlu0 %823
  %825 = vrot.lane.b32.xlu0 %v299, 12
  %v826 = vpop.permute.xlu0 %825
  %827 = vrot.lane.b32.xlu0 %v300, 12
  %v828 = vpop.permute.xlu0 %827
  %829 = vrot.lane.b32.xlu0 %v301, 12
  %v830 = vpop.permute.xlu0 %829
  %831 = vrot.lane.b32.xlu0 %v302, 12
  %v832 = vpop.permute.xlu0 %831
  %833 = vrot.lane.b32.xlu0 %v303, 12
  %v834 = vpop.permute.xlu0 %833
  %835 = vrot.lane.b32.xlu0 %v304, 12
  %v836 = vpop.permute.xlu0 %835
  %837 = vrot.lane.b32.xlu0 %v305, 12
  %v838 = vpop.permute.xlu0 %837
  %839 = vrot.lane.b32.xlu0 %v306, 12
  %v840 = vpop.permute.xlu0 %839
  %841 = vrot.lane.b32.xlu0 %v307, 12
  %v842 = vpop.permute.xlu0 %841
  %843 = vrot.lane.b32.xlu0 %v308, 12
  %v844 = vpop.permute.xlu0 %843
  %845 = vrot.lane.b32.xlu0 %v309, 12
  %v846 = vpop.permute.xlu0 %845
  %847 = vrot.lane.b32.xlu0 %v310, 12
  %v848 = vpop.permute.xlu0 %847
  %849 = vrot.lane.b32.xlu0 %v311, 12
  %v850 = vpop.permute.xlu0 %849
  %851 = vrot.lane.b32.xlu0 %v312, 12
  %v852 = vpop.permute.xlu0 %851
  %853 = vrot.lane.b32.xlu0 %v313, 12
  %v854 = vpop.permute.xlu0 %853
  %855 = vrot.lane.b32.xlu0 %v314, 12
  %v856 = vpop.permute.xlu0 %855
  %857 = vrot.lane.b32.xlu0 %v315, 12
  %v858 = vpop.permute.xlu0 %857
  %859 = vrot.lane.b32.xlu0 %v316, 12
  %v860 = vpop.permute.xlu0 %859
  %861 = vrot.lane.b32.xlu0 %v317, 12
  %v862 = vpop.permute.xlu0 %861
  %863 = vrot.lane.b32.xlu0 %v318, 12
  %v864 = vpop.permute.xlu0 %863
  %867 = vrot.lane.b32.xlu0 %v319, 16
  %v868 = vpop.permute.xlu0 %867
  %869 = vrot.lane.b32.xlu0 %v320, 16
  %v870 = vpop.permute.xlu0 %869
  %871 = vrot.lane.b32.xlu0 %v321, 16
  %v872 = vpop.permute.xlu0 %871
  %873 = vrot.lane.b32.xlu0 %v322, 16
  %v874 = vpop.permute.xlu0 %873
  %875 = vrot.lane.b32.xlu0 %v323, 16
  %v876 = vpop.permute.xlu0 %875
  %877 = vrot.lane.b32.xlu0 %v324, 16
  %v878 = vpop.permute.xlu0 %877
  %879 = vrot.lane.b32.xlu0 %v325, 16
  %v880 = vpop.permute.xlu0 %879
  %881 = vrot.lane.b32.xlu0 %v326, 16
  %v882 = vpop.permute.xlu0 %881
  %883 = vrot.lane.b32.xlu0 %v327, 16
  %v884 = vpop.permute.xlu0 %883
  %885 = vrot.lane.b32.xlu0 %v328, 16
  %v886 = vpop.permute.xlu0 %885
  %887 = vrot.lane.b32.xlu0 %v329, 16
  %v888 = vpop.permute.xlu0 %887
  %889 = vrot.lane.b32.xlu0 %v330, 16
  %v890 = vpop.permute.xlu0 %889
  %891 = vrot.lane.b32.xlu0 %v331, 16
  %v892 = vpop.permute.xlu0 %891
  %893 = vrot.lane.b32.xlu0 %v332, 16
  %v894 = vpop.permute.xlu0 %893
  %895 = vrot.lane.b32.xlu0 %v333, 16
  %v896 = vpop.permute.xlu0 %895
  %897 = vrot.lane.b32.xlu0 %v334, 16
  %v898 = vpop.permute.xlu0 %897
  %899 = vrot.lane.b32.xlu0 %v335, 16
  %v900 = vpop.permute.xlu0 %899
  %901 = vrot.lane.b32.xlu0 %v336, 16
  %v902 = vpop.permute.xlu0 %901
  %903 = vrot.lane.b32.xlu0 %v337, 16
  %v904 = vpop.permute.xlu0 %903
  %905 = vrot.lane.b32.xlu0 %v338, 16
  %v906 = vpop.permute.xlu0 %905
  %907 = vrot.lane.b32.xlu0 %v339, 16
  %v908 = vpop.permute.xlu0 %907
  %909 = vrot.lane.b32.xlu0 %v340, 16
  %v910 = vpop.permute.xlu0 %909
  %911 = vrot.lane.b32.xlu0 %v341, 16
  %v912 = vpop.permute.xlu0 %911
  %913 = vrot.lane.b32.xlu0 %v342, 16
  %v914 = vpop.permute.xlu0 %913
  %915 = vrot.lane.b32.xlu0 %v343, 16
  %v916 = vpop.permute.xlu0 %915
  %917 = vrot.lane.b32.xlu0 %v344, 16
  %v918 = vpop.permute.xlu0 %917
  %919 = vrot.lane.b32.xlu0 %v345, 16
  %v920 = vpop.permute.xlu0 %919
  %921 = vrot.lane.b32.xlu0 %v346, 16
  %v922 = vpop.permute.xlu0 %921
  %923 = vrot.lane.b32.xlu0 %v347, 16
  %v924 = vpop.permute.xlu0 %923
  %925 = vrot.lane.b32.xlu0 %v348, 16
  %v926 = vpop.permute.xlu0 %925
  %927 = vrot.lane.b32.xlu0 %v349, 16
  %v928 = vpop.permute.xlu0 %927
  %929 = vrot.lane.b32.xlu0 %v350, 16
  %v930 = vpop.permute.xlu0 %929
  %933 = vrot.lane.b32.xlu0 %v552, 20
  %v934 = vpop.permute.xlu0 %933
  %935 = vrot.lane.b32.xlu0 %v553, 20
  %v936 = vpop.permute.xlu0 %935
  %937 = vrot.lane.b32.xlu0 %v554, 20
  %v938 = vpop.permute.xlu0 %937
  %939 = vrot.lane.b32.xlu0 %v555, 20
  %v940 = vpop.permute.xlu0 %939
  %941 = vrot.lane.b32.xlu0 %v556, 20
  %v942 = vpop.permute.xlu0 %941
  %943 = vrot.lane.b32.xlu0 %v557, 20
  %v944 = vpop.permute.xlu0 %943
  %945 = vrot.lane.b32.xlu0 %v558, 20
  %v946 = vpop.permute.xlu0 %945
  %947 = vrot.lane.b32.xlu0 %v559, 20
  %v948 = vpop.permute.xlu0 %947
  %949 = vrot.lane.b32.xlu0 %v560, 20
  %v950 = vpop.permute.xlu0 %949
  %951 = vrot.lane.b32.xlu0 %v561, 20
  %v952 = vpop.permute.xlu0 %951
  %953 = vrot.lane.b32.xlu0 %v562, 20
  %v954 = vpop.permute.xlu0 %953
  %955 = vrot.lane.b32.xlu0 %v563, 20
  %v956 = vpop.permute.xlu0 %955
  %957 = vrot.lane.b32.xlu0 %v564, 20
  %v958 = vpop.permute.xlu0 %957
  %959 = vrot.lane.b32.xlu0 %v565, 20
  %v960 = vpop.permute.xlu0 %959
  %961 = vrot.lane.b32.xlu0 %v566, 20
  %v962 = vpop.permute.xlu0 %961
  %963 = vrot.lane.b32.xlu0 %v567, 20
  %v964 = vpop.permute.xlu0 %963
  %965 = vrot.lane.b32.xlu0 %v568, 20
  %v966 = vpop.permute.xlu0 %965
  %967 = vrot.lane.b32.xlu0 %v569, 20
  %v968 = vpop.permute.xlu0 %967
  %969 = vrot.lane.b32.xlu0 %v570, 20
  %v970 = vpop.permute.xlu0 %969
  %971 = vrot.lane.b32.xlu0 %v571, 20
  %v972 = vpop.permute.xlu0 %971
  %973 = vrot.lane.b32.xlu0 %v572, 20
  %v974 = vpop.permute.xlu0 %973
  %975 = vrot.lane.b32.xlu0 %v573, 20
  %v976 = vpop.permute.xlu0 %975
  %977 = vrot.lane.b32.xlu0 %v574, 20
  %v978 = vpop.permute.xlu0 %977
  %979 = vrot.lane.b32.xlu0 %v575, 20
  %v980 = vpop.permute.xlu0 %979
  %981 = vrot.lane.b32.xlu0 %v576, 20
  %v982 = vpop.permute.xlu0 %981
  %983 = vrot.lane.b32.xlu0 %v577, 20
  %v984 = vpop.permute.xlu0 %983
  %985 = vrot.lane.b32.xlu0 %v578, 20
  %v986 = vpop.permute.xlu0 %985
  %987 = vrot.lane.b32.xlu0 %v579, 20
  %v988 = vpop.permute.xlu0 %987
  %989 = vrot.lane.b32.xlu0 %v580, 20
  %v990 = vpop.permute.xlu0 %989
  %991 = vrot.lane.b32.xlu0 %v581, 20
  %v992 = vpop.permute.xlu0 %991
  %993 = vrot.lane.b32.xlu0 %v582, 20
  %v994 = vpop.permute.xlu0 %993
  %995 = vrot.lane.b32.xlu0 %v583, 20
  %v996 = vpop.permute.xlu0 %995
  %997 = vrot.lane.b32.xlu0 %v288, 24
  %v998 = vpop.permute.xlu0 %997
  %999 = vrot.lane.b32.xlu0 %v289, 24
  %v1000 = vpop.permute.xlu0 %999
  %1001 = vrot.lane.b32.xlu0 %v290, 24
  %v1002 = vpop.permute.xlu0 %1001
  %1003 = vrot.lane.b32.xlu0 %v291, 24
  %v1004 = vpop.permute.xlu0 %1003
  %1005 = vrot.lane.b32.xlu0 %v292, 24
  %v1006 = vpop.permute.xlu0 %1005
  %1007 = vrot.lane.b32.xlu0 %v293, 24
  %v1008 = vpop.permute.xlu0 %1007
  %1009 = vrot.lane.b32.xlu0 %v294, 24
  %v1010 = vpop.permute.xlu0 %1009
  %1011 = vrot.lane.b32.xlu0 %v295, 24
  %v1012 = vpop.permute.xlu0 %1011
  %1013 = vrot.lane.b32.xlu0 %v296, 24
  %v1014 = vpop.permute.xlu0 %1013
  %1015 = vrot.lane.b32.xlu0 %v297, 24
  %v1016 = vpop.permute.xlu0 %1015
  %1017 = vrot.lane.b32.xlu0 %v298, 24
  %v1018 = vpop.permute.xlu0 %1017
  %1019 = vrot.lane.b32.xlu0 %v299, 24
  %v1020 = vpop.permute.xlu0 %1019
  %1021 = vrot.lane.b32.xlu0 %v300, 24
  %v1022 = vpop.permute.xlu0 %1021
  %1023 = vrot.lane.b32.xlu0 %v301, 24
  %v1024 = vpop.permute.xlu0 %1023
  %1025 = vrot.lane.b32.xlu0 %v302, 24
  %v1026 = vpop.permute.xlu0 %1025
  %1027 = vrot.lane.b32.xlu0 0, 24
  %v1028 = vpop.permute.xlu0 %1027
  %1029 = vrot.lane.b32.xlu0 %v304, 24
  %v1030 = vpop.permute.xlu0 %1029
  %1031 = vrot.lane.b32.xlu0 %v305, 24
  %v1032 = vpop.permute.xlu0 %1031
  %1033 = vrot.lane.b32.xlu0 %v306, 24
  %v1034 = vpop.permute.xlu0 %1033
  %1035 = vrot.lane.b32.xlu0 %v307, 24
  %v1036 = vpop.permute.xlu0 %1035
  %1037 = vrot.lane.b32.xlu0 %v308, 24
  %v1038 = vpop.permute.xlu0 %1037
  %1039 = vrot.lane.b32.xlu0 %v309, 24
  %v1040 = vpop.permute.xlu0 %1039
  %1041 = vrot.lane.b32.xlu0 %v310, 24
  %v1042 = vpop.permute.xlu0 %1041
  %1043 = vrot.lane.b32.xlu0 %v311, 24
  %v1044 = vpop.permute.xlu0 %1043
  %1045 = vrot.lane.b32.xlu0 %v312, 24
  %v1046 = vpop.permute.xlu0 %1045
  %1047 = vrot.lane.b32.xlu0 %v313, 24
  %v1048 = vpop.permute.xlu0 %1047
  %1049 = vrot.lane.b32.xlu0 %v314, 24
  %v1050 = vpop.permute.xlu0 %1049
  %1051 = vrot.lane.b32.xlu0 %v315, 24
  %v1052 = vpop.permute.xlu0 %1051
  %1053 = vrot.lane.b32.xlu0 %v316, 24
  %v1054 = vpop.permute.xlu0 %1053
  %1055 = vrot.lane.b32.xlu0 %v317, 24
  %v1056 = vpop.permute.xlu0 %1055
  %1057 = vrot.lane.b32.xlu0 %v318, 24
  %v1058 = vpop.permute.xlu0 %1057
  %1059 = vrot.lane.b32.xlu0 %v320, 28
  %v1060 = vpop.permute.xlu0 %1059
  %1061 = vrot.lane.b32.xlu0 %v321, 28
  %v1062 = vpop.permute.xlu0 %1061
  %1063 = vrot.lane.b32.xlu0 %v322, 28
  %v1064 = vpop.permute.xlu0 %1063
  %1065 = vrot.lane.b32.xlu0 %v323, 28
  %v1066 = vpop.permute.xlu0 %1065
  %1067 = vrot.lane.b32.xlu0 %v324, 28
  %v1068 = vpop.permute.xlu0 %1067
  %1069 = vrot.lane.b32.xlu0 %v325, 28
  %v1070 = vpop.permute.xlu0 %1069
  %1071 = vrot.lane.b32.xlu0 %v326, 28
  %v1072 = vpop.permute.xlu0 %1071
  %1073 = vrot.lane.b32.xlu0 %v327, 28
  %v1074 = vpop.permute.xlu0 %1073
  %1075 = vrot.lane.b32.xlu0 %v328, 28
  %v1076 = vpop.permute.xlu0 %1075
  %1077 = vrot.lane.b32.xlu0 %v329, 28
  %v1078 = vpop.permute.xlu0 %1077
  %1079 = vrot.lane.b32.xlu0 %v330, 28
  %v1080 = vpop.permute.xlu0 %1079
  %1081 = vrot.lane.b32.xlu0 %v331, 28
  %v1082 = vpop.permute.xlu0 %1081
  %1083 = vrot.lane.b32.xlu0 %v332, 28
  %v1084 = vpop.permute.xlu0 %1083
  %1085 = vrot.lane.b32.xlu0 %v333, 28
  %v1086 = vpop.permute.xlu0 %1085
  %1087 = vrot.lane.b32.xlu0 %v334, 28
  %v1088 = vpop.permute.xlu0 %1087
  %1089 = vrot.lane.b32.xlu0 0, 28
  %v1090 = vpop.permute.xlu0 %1089
  %1091 = vrot.lane.b32.xlu0 %v336, 28
  %v1092 = vpop.permute.xlu0 %1091
  %1093 = vrot.lane.b32.xlu0 %v337, 28
  %v1094 = vpop.permute.xlu0 %1093
  %1095 = vrot.lane.b32.xlu0 %v338, 28
  %v1096 = vpop.permute.xlu0 %1095
  %1097 = vrot.lane.b32.xlu0 %v339, 28
  %v1098 = vpop.permute.xlu0 %1097
  %1099 = vrot.lane.b32.xlu0 %v340, 28
  %v1100 = vpop.permute.xlu0 %1099
  %1101 = vrot.lane.b32.xlu0 %v341, 28
  %v1102 = vpop.permute.xlu0 %1101
  %1103 = vrot.lane.b32.xlu0 %v342, 28
  %v1104 = vpop.permute.xlu0 %1103
  %1105 = vrot.lane.b32.xlu0 %v343, 28
  %v1106 = vpop.permute.xlu0 %1105
  %1107 = vrot.lane.b32.xlu0 %v344, 28
  %v1108 = vpop.permute.xlu0 %1107
  %1109 = vrot.lane.b32.xlu0 %v345, 28
  %v1110 = vpop.permute.xlu0 %1109
  %1111 = vrot.lane.b32.xlu0 %v346, 28
  %v1112 = vpop.permute.xlu0 %1111
  %1113 = vrot.lane.b32.xlu0 %v347, 28
  %v1114 = vpop.permute.xlu0 %1113
  %1115 = vrot.lane.b32.xlu0 %v348, 28
  %v1116 = vpop.permute.xlu0 %1115
  %1117 = vrot.lane.b32.xlu0 %v349, 28
  %v1118 = vpop.permute.xlu0 %1117
  %1119 = vrot.lane.b32.xlu0 %v350, 28
  %v1120 = vpop.permute.xlu0 %1119
  %1121 = vrot.lane.b32.xlu0 %v553, 32
  %v1122 = vpop.permute.xlu0 %1121
  %1123 = vrot.lane.b32.xlu0 %v554, 32
  %v1124 = vpop.permute.xlu0 %1123
  %1125 = vrot.lane.b32.xlu0 %v555, 32
  %v1126 = vpop.permute.xlu0 %1125
  %1127 = vrot.lane.b32.xlu0 %v556, 32
  %v1128 = vpop.permute.xlu0 %1127
  %1129 = vrot.lane.b32.xlu0 %v557, 32
  %v1130 = vpop.permute.xlu0 %1129
  %1131 = vrot.lane.b32.xlu0 %v558, 32
  %v1132 = vpop.permute.xlu0 %1131
  %1133 = vrot.lane.b32.xlu0 %v559, 32
  %v1134 = vpop.permute.xlu0 %1133
  %1135 = vrot.lane.b32.xlu0 %v560, 32
  %v1136 = vpop.permute.xlu0 %1135
  %1137 = vrot.lane.b32.xlu0 %v561, 32
  %v1138 = vpop.permute.xlu0 %1137
  %1139 = vrot.lane.b32.xlu0 %v562, 32
  %v1140 = vpop.permute.xlu0 %1139
  %1141 = vrot.lane.b32.xlu0 %v563, 32
  %v1142 = vpop.permute.xlu0 %1141
  %1143 = vrot.lane.b32.xlu0 %v564, 32
  %v1144 = vpop.permute.xlu0 %1143
  %1145 = vrot.lane.b32.xlu0 %v565, 32
  %v1146 = vpop.permute.xlu0 %1145
  %1147 = vrot.lane.b32.xlu0 %v566, 32
  %v1148 = vpop.permute.xlu0 %1147
  %1149 = vrot.lane.b32.xlu0 %v567, 32
  %v1150 = vpop.permute.xlu0 %1149
  %1151 = vrot.lane.b32.xlu0 0, 32
  %v1152 = vpop.permute.xlu0 %1151
  %1153 = vrot.lane.b32.xlu0 %v569, 32
  %v1154 = vpop.permute.xlu0 %1153
  %1155 = vrot.lane.b32.xlu0 %v570, 32
  %v1156 = vpop.permute.xlu0 %1155
  %1157 = vrot.lane.b32.xlu0 %v571, 32
  %v1158 = vpop.permute.xlu0 %1157
  %1159 = vrot.lane.b32.xlu0 %v572, 32
  %v1160 = vpop.permute.xlu0 %1159
  %1161 = vrot.lane.b32.xlu0 %v573, 32
  %v1162 = vpop.permute.xlu0 %1161
  %1163 = vrot.lane.b32.xlu0 %v574, 32
  %v1164 = vpop.permute.xlu0 %1163
  %1165 = vrot.lane.b32.xlu0 %v575, 32
  %v1166 = vpop.permute.xlu0 %1165
  %1167 = vrot.lane.b32.xlu0 %v576, 32
  %v1168 = vpop.permute.xlu0 %1167
  %1169 = vrot.lane.b32.xlu0 %v577, 32
  %v1170 = vpop.permute.xlu0 %1169
  %1171 = vrot.lane.b32.xlu0 %v578, 32
  %v1172 = vpop.permute.xlu0 %1171
  %1173 = vrot.lane.b32.xlu0 %v579, 32
  %v1174 = vpop.permute.xlu0 %1173
  %1175 = vrot.lane.b32.xlu0 %v580, 32
  %v1176 = vpop.permute.xlu0 %1175
  %1177 = vrot.lane.b32.xlu0 %v581, 32
  %v1178 = vpop.permute.xlu0 %1177
  %1179 = vrot.lane.b32.xlu0 %v582, 32
  %v1180 = vpop.permute.xlu0 %1179
  %1181 = vrot.lane.b32.xlu0 %v583, 32
  %v1182 = vpop.permute.xlu0 %1181
  %vm1183 = vcmask 31744
  %v1186 = vsel %vm1183, 0, %v616
  %v1189 = vsel %vm1183, %v287, %v618
  %v1192 = vsel %vm1183, %v288, %v620
  %v1195 = vsel %vm1183, %v289, %v622
  %v1198 = vsel %vm1183, %v290, %v624
  %v1201 = vsel %vm1183, %v291, %v626
  %v1204 = vsel %vm1183, %v292, %v628
  %v1207 = vsel %vm1183, %v293, %v630
  %v1210 = vsel %vm1183, %v294, %v632
  %v1213 = vsel %vm1183, %v295, %v634
  %v1216 = vsel %vm1183, %v296, %v636
  %v1219 = vsel %vm1183, %v297, %v638
  %v1222 = vsel %vm1183, %v298, %v640
  %v1225 = vsel %vm1183, %v299, %v642
  %v1228 = vsel %vm1183, %v300, %v644
  %v1231 = vsel %vm1183, %v301, %v646
  %v1234 = vsel %vm1183, %v303, %v648
  %v1237 = vsel %vm1183, %v304, %v650
  %v1240 = vsel %vm1183, %v305, %v652
  %v1243 = vsel %vm1183, %v306, %v654
  %v1246 = vsel %vm1183, %v307, %v656
  %v1249 = vsel %vm1183, %v308, %v658
  %v1252 = vsel %vm1183, %v309, %v660
  %v1255 = vsel %vm1183, %v310, %v662
  %v1258 = vsel %vm1183, %v311, %v664
  %v1261 = vsel %vm1183, %v312, %v666
  %v1264 = vsel %vm1183, %v313, %v668
  %v1267 = vsel %vm1183, %v314, %v670
  %v1270 = vsel %vm1183, %v315, %v672
  %v1273 = vsel %vm1183, %v316, %v674
  %v1276 = vsel %vm1183, %v317, %v676
  %vm1277 = vcmask 64512
  %v1279 = vsel %vm1277, %v1186, %v708
  %v1281 = vsel %vm1277, %v1189, %v710
  %v1283 = vsel %vm1277, %v1192, %v712
  %v1285 = vsel %vm1277, %v1195, %v714
  %v1287 = vsel %vm1277, %v1198, %v716
  %v1289 = vsel %vm1277, %v1201, %v718
  %v1291 = vsel %vm1277, %v1204, %v720
  %v1293 = vsel %vm1277, %v1207, %v722
  %v1295 = vsel %vm1277, %v1210, %v724
  %v1297 = vsel %vm1277, %v1213, %v726
  %v1299 = vsel %vm1277, %v1216, %v728
  %v1301 = vsel %vm1277, %v1219, %v730
  %v1303 = vsel %vm1277, %v1222, %v732
  %v1305 = vsel %vm1277, %v1225, %v734
  %v1307 = vsel %vm1277, %v1228, %v736
  %v1309 = vsel %vm1277, %v1231, %v738
  %v1311 = vsel %vm1277, %v1234, %v740
  %v1313 = vsel %vm1277, %v1237, %v742
  %v1315 = vsel %vm1277, %v1240, %v744
  %v1317 = vsel %vm1277, %v1243, %v746
  %v1319 = vsel %vm1277, %v1246, %v748
  %v1321 = vsel %vm1277, %v1249, %v750
  %v1323 = vsel %vm1277, %v1252, %v752
  %v1325 = vsel %vm1277, %v1255, %v754
  %v1327 = vsel %vm1277, %v1258, %v756
  %v1329 = vsel %vm1277, %v1261, %v758
  %v1331 = vsel %vm1277, %v1264, %v760
  %v1333 = vsel %vm1277, %v1267, %v762
  %v1335 = vsel %vm1277, %v1270, %v764
  %v1337 = vsel %vm1277, %v1273, %v766
  %v1339 = vsel %vm1277, %v1276, %v768
  %vm1340 = vcmask 97280
  %v1342 = vsel %vm1340, %v1279, %v802
  %v1344 = vsel %vm1340, %v1281, %v804
  %v1346 = vsel %vm1340, %v1283, %v806
  %v1348 = vsel %vm1340, %v1285, %v808
  %v1350 = vsel %vm1340, %v1287, %v810
  %v1352 = vsel %vm1340, %v1289, %v812
  %v1354 = vsel %vm1340, %v1291, %v814
  %v1356 = vsel %vm1340, %v1293, %v816
  %v1358 = vsel %vm1340, %v1295, %v818
  %v1360 = vsel %vm1340, %v1297, %v820
  %v1362 = vsel %vm1340, %v1299, %v822
  %v1364 = vsel %vm1340, %v1301, %v824
  %v1366 = vsel %vm1340, %v1303, %v826
  %v1368 = vsel %vm1340, %v1305, %v828
  %v1370 = vsel %vm1340, %v1307, %v830
  %v1372 = vsel %vm1340, %v1309, %v832
  %v1374 = vsel %vm1340, %v1279, %v834
  %v1376 = vsel %vm1340, %v1311, %v836
  %v1378 = vsel %vm1340, %v1313, %v838
  %v1380 = vsel %vm1340, %v1315, %v840
  %v1382 = vsel %vm1340, %v1317, %v842
  %v1384 = vsel %vm1340, %v1319, %v844
  %v1386 = vsel %vm1340, %v1321, %v846
  %v1388 = vsel %vm1340, %v1323, %v848
  %v1390 = vsel %vm1340, %v1325, %v850
  %v1392 = vsel %vm1340, %v1327, %v852
  %v1394 = vsel %vm1340, %v1329, %v854
  %v1396 = vsel %vm1340, %v1331, %v856
  %v1398 = vsel %vm1340, %v1333, %v858
  %v1400 = vsel %vm1340, %v1335, %v860
  %v1402 = vsel %vm1340, %v1337, %v862
  %v1404 = vsel %vm1340, %v1339, %v864
  %vm1405 = vcmask 130048
  %v1407 = vsel %vm1405, %v1342, %v868
  %v1409 = vsel %vm1405, %v1344, %v870
  %v1411 = vsel %vm1405, %v1346, %v872
  %v1413 = vsel %vm1405, %v1348, %v874
  %v1415 = vsel %vm1405, %v1350, %v876
  %v1417 = vsel %vm1405, %v1352, %v878
  %v1419 = vsel %vm1405, %v1354, %v880
  %v1421 = vsel %vm1405, %v1356, %v882
  %v1423 = vsel %vm1405, %v1358, %v884
  %v1425 = vsel %vm1405, %v1360, %v886
  %v1427 = vsel %vm1405, %v1362, %v888
  %v1429 = vsel %vm1405, %v1364, %v890
  %v1431 = vsel %vm1405, %v1366, %v892
  %v1433 = vsel %vm1405, %v1368, %v894
  %v1435 = vsel %vm1405, %v1370, %v896
  %v1437 = vsel %vm1405, %v1372, %v898
  %v1439 = vsel %vm1405, %v1374, %v900
  %v1441 = vsel %vm1405, %v1376, %v902
  %v1443 = vsel %vm1405, %v1378, %v904
  %v1445 = vsel %vm1405, %v1380, %v906
  %v1447 = vsel %vm1405, %v1382, %v908
  %v1449 = vsel %vm1405, %v1384, %v910
  %v1451 = vsel %vm1405, %v1386, %v912
  %v1453 = vsel %vm1405, %v1388, %v914
  %v1455 = vsel %vm1405, %v1390, %v916
  %v1457 = vsel %vm1405, %v1392, %v918
  %v1459 = vsel %vm1405, %v1394, %v920
  %v1461 = vsel %vm1405, %v1396, %v922
  %v1463 = vsel %vm1405, %v1398, %v924
  %v1465 = vsel %vm1405, %v1400, %v926
  %v1467 = vsel %vm1405, %v1402, %v928
  %v1469 = vsel %vm1405, %v1404, %v930
  %vm1470 = vcmask 162816
  %v1472 = vsel %vm1470, %v1407, %v934
  %v1474 = vsel %vm1470, %v1409, %v936
  %v1476 = vsel %vm1470, %v1411, %v938
  %v1478 = vsel %vm1470, %v1413, %v940
  %v1480 = vsel %vm1470, %v1415, %v942
  %v1482 = vsel %vm1470, %v1417, %v944
  %v1484 = vsel %vm1470, %v1419, %v946
  %v1486 = vsel %vm1470, %v1421, %v948
  %v1488 = vsel %vm1470, %v1423, %v950
  %v1490 = vsel %vm1470, %v1425, %v952
  %v1492 = vsel %vm1470, %v1427, %v954
  %v1494 = vsel %vm1470, %v1429, %v956
  %v1496 = vsel %vm1470, %v1431, %v958
  %v1498 = vsel %vm1470, %v1433, %v960
  %v1500 = vsel %vm1470, %v1435, %v962
  %v1502 = vsel %vm1470, %v1437, %v964
  %v1504 = vsel %vm1470, %v1439, %v966
  %v1506 = vsel %vm1470, %v1441, %v968
  %v1508 = vsel %vm1470, %v1443, %v970
  %v1510 = vsel %vm1470, %v1445, %v972
  %v1512 = vsel %vm1470, %v1447, %v974
  %v1514 = vsel %vm1470, %v1449, %v976
  %v1516 = vsel %vm1470, %v1451, %v978
  %v1518 = vsel %vm1470, %v1453, %v980
  %v1520 = vsel %vm1470, %v1455, %v982
  %v1522 = vsel %vm1470, %v1457, %v984
  %v1524 = vsel %vm1470, %v1459, %v986
  %v1526 = vsel %vm1470, %v1461, %v988
  %v1528 = vsel %vm1470, %v1463, %v990
  %v1530 = vsel %vm1470, %v1465, %v992
  %v1532 = vsel %vm1470, %v1467, %v994
  %v1534 = vsel %vm1470, %v1469, %v996
  %vm1535 = vcmask 195584
  %v1537 = vsel %vm1535, %v1472, %v998
  %v1539 = vsel %vm1535, %v1474, %v1000
  %v1541 = vsel %vm1535, %v1476, %v1002
  %v1543 = vsel %vm1535, %v1478, %v1004
  %v1545 = vsel %vm1535, %v1480, %v1006
  %v1547 = vsel %vm1535, %v1482, %v1008
  %v1549 = vsel %vm1535, %v1484, %v1010
  %v1551 = vsel %vm1535, %v1486, %v1012
  %v1553 = vsel %vm1535, %v1488, %v1014
  %v1555 = vsel %vm1535, %v1490, %v1016
  %v1557 = vsel %vm1535, %v1492, %v1018
  %v1559 = vsel %vm1535, %v1494, %v1020
  %v1561 = vsel %vm1535, %v1496, %v1022
  %v1563 = vsel %vm1535, %v1498, %v1024
  %v1565 = vsel %vm1535, %v1500, %v1026
  %v1567 = vsel %vm1535, %v1502, %v1028
  %v1569 = vsel %vm1535, %v1504, %v1030
  %v1571 = vsel %vm1535, %v1506, %v1032
  %v1573 = vsel %vm1535, %v1508, %v1034
  %v1575 = vsel %vm1535, %v1510, %v1036
  %v1577 = vsel %vm1535, %v1512, %v1038
  %v1579 = vsel %vm1535, %v1514, %v1040
  %v1581 = vsel %vm1535, %v1516, %v1042
  %v1583 = vsel %vm1535, %v1518, %v1044
  %v1585 = vsel %vm1535, %v1520, %v1046
  %v1587 = vsel %vm1535, %v1522, %v1048
  %v1589 = vsel %vm1535, %v1524, %v1050
  %v1591 = vsel %vm1535, %v1526, %v1052
  %v1593 = vsel %vm1535, %v1528, %v1054
  %v1595 = vsel %vm1535, %v1530, %v1056
  %v1597 = vsel %vm1535, %v1532, %v1058
  %v1598 = vsel %vm1535, %v1534, %v1028
  %vm1599 = vcmask 228352
  %v1601 = vsel %vm1599, %v1537, %v1060
  %v1603 = vsel %vm1599, %v1539, %v1062
  %v1605 = vsel %vm1599, %v1541, %v1064
  %v1607 = vsel %vm1599, %v1543, %v1066
  %v1609 = vsel %vm1599, %v1545, %v1068
  %v1611 = vsel %vm1599, %v1547, %v1070
  %v1613 = vsel %vm1599, %v1549, %v1072
  %v1615 = vsel %vm1599, %v1551, %v1074
  %v1617 = vsel %vm1599, %v1553, %v1076
  %v1619 = vsel %vm1599, %v1555, %v1078
  %v1621 = vsel %vm1599, %v1557, %v1080
  %v1623 = vsel %vm1599, %v1559, %v1082
  %v1625 = vsel %vm1599, %v1561, %v1084
  %v1627 = vsel %vm1599, %v1563, %v1086
  %v1629 = vsel %vm1599, %v1565, %v1088
  %v1631 = vsel %vm1599, %v1567, %v1090
  %v1633 = vsel %vm1599, %v1569, %v1092
  %v1635 = vsel %vm1599, %v1571, %v1094
  %v1637 = vsel %vm1599, %v1573, %v1096
  %v1639 = vsel %vm1599, %v1575, %v1098
  %v1641 = vsel %vm1599, %v1577, %v1100
  %v1643 = vsel %vm1599, %v1579, %v1102
  %v1645 = vsel %vm1599, %v1581, %v1104
  %v1647 = vsel %vm1599, %v1583, %v1106
  %v1649 = vsel %vm1599, %v1585, %v1108
  %v1651 = vsel %vm1599, %v1587, %v1110
  %v1653 = vsel %vm1599, %v1589, %v1112
  %v1655 = vsel %vm1599, %v1591, %v1114
  %v1657 = vsel %vm1599, %v1593, %v1116
  %v1659 = vsel %vm1599, %v1595, %v1118
  %v1661 = vsel %vm1599, %v1597, %v1120
  %v1662 = vsel %vm1599, %v1598, %v1090
  %vm1663 = vcmask 261120
  %v1665 = vsel %vm1663, %v1601, %v1122
  %v1667 = vsel %vm1663, %v1603, %v1124
  %v1669 = vsel %vm1663, %v1605, %v1126
  %v1671 = vsel %vm1663, %v1607, %v1128
  %v1673 = vsel %vm1663, %v1609, %v1130
  %v1675 = vsel %vm1663, %v1611, %v1132
  %v1677 = vsel %vm1663, %v1613, %v1134
  %v1679 = vsel %vm1663, %v1615, %v1136
  %v1681 = vsel %vm1663, %v1617, %v1138
  %v1683 = vsel %vm1663, %v1619, %v1140
  %v1685 = vsel %vm1663, %v1621, %v1142
  %v1687 = vsel %vm1663, %v1623, %v1144
  %v1689 = vsel %vm1663, %v1625, %v1146
  %v1691 = vsel %vm1663, %v1627, %v1148
  %v1693 = vsel %vm1663, %v1629, %v1150
  %v1695 = vsel %vm1663, %v1631, %v1152
  %v1697 = vsel %vm1663, %v1633, %v1154
  %v1699 = vsel %vm1663, %v1635, %v1156
  %v1701 = vsel %vm1663, %v1637, %v1158
  %v1703 = vsel %vm1663, %v1639, %v1160
  %v1705 = vsel %vm1663, %v1641, %v1162
  %v1707 = vsel %vm1663, %v1643, %v1164
  %v1709 = vsel %vm1663, %v1645, %v1166
  %v1711 = vsel %vm1663, %v1647, %v1168
  %v1713 = vsel %vm1663, %v1649, %v1170
  %v1715 = vsel %vm1663, %v1651, %v1172
  %v1717 = vsel %vm1663, %v1653, %v1174
  %v1719 = vsel %vm1663, %v1655, %v1176
  %v1721 = vsel %vm1663, %v1657, %v1178
  %v1723 = vsel %vm1663, %v1659, %v1180
  %v1725 = vsel %vm1663, %v1661, %v1182
  %v1726 = vsel %vm1663, %v1662, %v1152
  %v1727 = vld [vmem:[%s2] sm:$0xf]
  %v1728 = vld [vmem:[%s2 + $0x4] sm:$0xf]
  %v1729 = vld [vmem:[%s2 + $0x8] sm:$0xf]
  %v1730 = vld [vmem:[%s2 + $0xc] sm:$0xf]
  %v1731 = vld [vmem:[%s2 + $0x10] sm:$0x3]
  %v1732 = vlaneseq
  %v1733 = vshrl.u32 %v1732, 7
  %v1734 = vsub.s32 0, %v1733
  %v1735 = vrot.slane %v18, %v1734
  %v1741 = vunpack.c.l.b16 %v1727
  %v1742 = vunpack.c.l.b16 %v1728
  %v1743 = vunpack.c.l.b16 %v1729
  %v1744 = vunpack.c.l.b16 %v1730
  %v1745 = vunpack.c.l.b16 %v1731
  %v1746 = vpack.c.b16 %v1742, %v1741
  %v1747 = vpack.c.b16 %v1744, %v1743
  %v1748 = vpack.c.b16 %v1745, %v1745
  %vm1751 = vcmask 293888
  %v1752 = vsel %vm1751, %v1665, 0
  %v1754 = vsel %vm1751, %v1667, 0
  %v1756 = vsel %vm1751, %v1669, 0
  %v1758 = vsel %vm1751, %v1671, 0
  %v1760 = vsel %vm1751, %v1673, 0
  %v1762 = vsel %vm1751, %v1675, 0
  %v1764 = vsel %vm1751, %v1677, 0
  %v1766 = vsel %vm1751, %v1679, 0
  %v1768 = vsel %vm1751, %v1681, 0
  %v1770 = vsel %vm1751, %v1683, 0
  %v1772 = vsel %vm1751, %v1685, 0
  %v1774 = vsel %vm1751, %v1687, 0
  %v1776 = vsel %vm1751, %v1689, 0
  %v1778 = vsel %vm1751, %v1691, 0
  %v1780 = vsel %vm1751, %v1693, 0
  %v1782 = vsel %vm1751, %v1695, 0
  %v1784 = vsel %vm1751, %v1697, 0
  %v1786 = vsel %vm1751, %v1699, 0
  %v1788 = vsel %vm1751, %v1701, 0
  %v1790 = vsel %vm1751, %v1703, 0
  %v1792 = vsel %vm1751, %v1705, 0
  %v1794 = vsel %vm1751, %v1707, 0
  %v1796 = vsel %vm1751, %v1709, 0
  %v1798 = vsel %vm1751, %v1711, 0
  %v1800 = vsel %vm1751, %v1713, 0
  %v1802 = vsel %vm1751, %v1715, 0
  %v1804 = vsel %vm1751, %v1717, 0
  %v1806 = vsel %vm1751, %v1719, 0
  %v1808 = vsel %vm1751, %v1721, 0
  %v1810 = vsel %vm1751, %v1723, 0
  %v1812 = vsel %vm1751, %v1725, 0
  %v1814 = vsel %vm1751, %v1726, 0
  %vm1816 = vcmask 1041408
  %v1818 = vsel %vm1816, %v1748, 0
  %1820 = vmatprep.subr.bf16.mxu0 0
  %1821 = vmatpush1.bf16.msra.mxu0 %v1746
  %1822 = vmatprep.subr.bf16.mxu0 0
  %1823 = vmatpush1.bf16.msra.mxu0 %v1747
  %1824 = vmatprep.subr.bf16.mxu0 0
  %1825 = vmatpush1.bf16.msra.mxu0 %v1818
  %1826 = vmatprep.subr.bf16.mxu0 0
  %1827 = vmatpush1.bf16.msra.mxu0 0
  %1828 = vmatprep.subr.bf16.mxu0 0
  %1829 = vmatpush1.bf16.msra.mxu0 0
  %1830 = vmatprep.subr.bf16.mxu0 0
  %1831 = vmatpush1.bf16.msra.mxu0 0
  %1832 = vmatprep.subr.bf16.mxu0 0
  %1833 = vmatpush1.bf16.msra.mxu0 0
  %1834 = vmatprep.subr.bf16.mxu0 0
  %1835 = vmatpush1.bf16.msra.mxu0 0
  %1836 = vmatprep.subr.bf16.mxu0 0
  %1837 = vmatpush1.bf16.msra.mxu0 0
  %1838 = vmatprep.subr.bf16.mxu0 0
  %1839 = vmatpush1.bf16.msra.mxu0 0
  %1840 = vmatprep.subr.bf16.mxu0 0
  %1841 = vmatpush1.bf16.msra.mxu0 0
  %1842 = vmatprep.subr.bf16.mxu0 0
  %1843 = vmatpush1.bf16.msra.mxu0 0
  %1844 = vmatprep.subr.bf16.mxu0 0
  %1845 = vmatpush1.bf16.msra.mxu0 0
  %1846 = vmatprep.subr.bf16.mxu0 0
  %1847 = vmatpush1.bf16.msra.mxu0 0
  %1848 = vmatprep.subr.bf16.mxu0 0
  %1849 = vmatpush1.bf16.msra.mxu0 0
  %1850 = vmatprep.subr.bf16.mxu0 0
  %1851 = vmatpush1.bf16.msra.mxu0 0
  %1852 = vmatprep.mubr.bf16.mxu0 0
  %1853 = vmatmul.mubr.bf16.gmra.mrb[0].mxu0 %v1752
  %v1854 = vpop.f32.mrb[0].mxu0
  %v1855 = vadd.f32 %v1735, %v1854
  %v1856 = vpop.f32.mrb[0].mxu0
  %v1857 = vpop.f32.mrb[0].mxu0
  %v1858 = vadd.f32 %v1735, %v1857
  %v1859 = vpop.f32.mrb[0].mxu0
  %1860 = vmatprep.mubr.bf16.mxu0 0
  %1861 = vmatmul.mubr.bf16.gmra.mrb[0].mxu0 %v1754
  %v1862 = vpop.f32.mrb[0].mxu0
  %v1863 = vadd.f32 %v1735, %v1862
  %v1864 = vpop.f32.mrb[0].mxu0
  %v1865 = vpop.f32.mrb[0].mxu0
  %v1866 = vadd.f32 %v1735, %v1865
  %v1867 = vpop.f32.mrb[0].mxu0
  %1868 = vmatprep.mubr.bf16.mxu0 0
  %1869 = vmatmul.mubr.bf16.gmra.mrb[0].mxu0 %v1756
  %v1870 = vpop.f32.mrb[0].mxu0
  %v1871 = vadd.f32 %v1735, %v1870
  %v1872 = vpop.f32.mrb[0].mxu0
  %v1873 = vpop.f32.mrb[0].mxu0
  %v1874 = vadd.f32 %v1735, %v1873
  %v1875 = vpop.f32.mrb[0].mxu0
  %1876 = vmatprep.mubr.bf16.mxu0 0
  %1877 = vmatmul.mubr.bf16.gmra.mrb[0].mxu0 %v1758
  %v1878 = vpop.f32.mrb[0].mxu0
  %v1879 = vadd.f32 %v1735, %v1878
  %v1880 = vpop.f32.mrb[0].mxu0
  %v1881 = vpop.f32.mrb[0].mxu0
  %v1882 = vadd.f32 %v1735, %v1881
  %v1883 = vpop.f32.mrb[0].mxu0
  %1884 = vmatprep.mubr.bf16.mxu0 0
  %1885 = vmatmul.mubr.bf16.gmra.mrb[0].mxu0 %v1760
  %v1886 = vpop.f32.mrb[0].mxu0
  %v1887 = vadd.f32 %v1735, %v1886
  %v1888 = vpop.f32.mrb[0].mxu0
  %v1889 = vpop.f32.mrb[0].mxu0
  %v1890 = vadd.f32 %v1735, %v1889
  %v1891 = vpop.f32.mrb[0].mxu0
  %1892 = vmatprep.mubr.bf16.mxu0 0
  %1893 = vmatmul.mubr.bf16.gmra.mrb[0].mxu0 %v1762
  %v1894 = vpop.f32.mrb[0].mxu0
  %v1895 = vadd.f32 %v1735, %v1894
  %v1896 = vpop.f32.mrb[0].mxu0
  %v1897 = vpop.f32.mrb[0].mxu0
  %v1898 = vadd.f32 %v1735, %v1897
  %v1899 = vpop.f32.mrb[0].mxu0
  %1900 = vmatprep.mubr.bf16.mxu0 0
  %1901 = vmatmul.mubr.bf16.gmra.mrb[0].mxu0 %v1764
  %v1902 = vpop.f32.mrb[0].mxu0
  %v1903 = vadd.f32 %v1735, %v1902
  %v1904 = vpop.f32.mrb[0].mxu0
  %v1905 = vpop.f32.mrb[0].mxu0
  %v1906 = vadd.f32 %v1735, %v1905
  %v1907 = vpop.f32.mrb[0].mxu0
  %1908 = vmatprep.mubr.bf16.mxu0 0
  %1909 = vmatmul.mubr.bf16.gmra.mrb[0].mxu0 %v1766
  %v1910 = vpop.f32.mrb[0].mxu0
  %v1911 = vadd.f32 %v1735, %v1910
  %v1912 = vpop.f32.mrb[0].mxu0
  %v1913 = vpop.f32.mrb[0].mxu0
  %v1914 = vadd.f32 %v1735, %v1913
  %v1915 = vpop.f32.mrb[0].mxu0
  %1916 = vmatprep.mubr.bf16.mxu0 0
  %1917 = vmatmul.mubr.bf16.gmra.mrb[0].mxu0 %v1768
  %v1918 = vpop.f32.mrb[0].mxu0
  %v1919 = vadd.f32 %v1735, %v1918
  %v1920 = vpop.f32.mrb[0].mxu0
  %v1921 = vpop.f32.mrb[0].mxu0
  %v1922 = vadd.f32 %v1735, %v1921
  %v1923 = vpop.f32.mrb[0].mxu0
  %1924 = vmatprep.mubr.bf16.mxu0 0
  %1925 = vmatmul.mubr.bf16.gmra.mrb[0].mxu0 %v1770
  %v1926 = vpop.f32.mrb[0].mxu0
  %v1927 = vadd.f32 %v1735, %v1926
  %v1928 = vpop.f32.mrb[0].mxu0
  %v1929 = vpop.f32.mrb[0].mxu0
  %v1930 = vadd.f32 %v1735, %v1929
  %v1931 = vpop.f32.mrb[0].mxu0
  %1932 = vmatprep.mubr.bf16.mxu0 0
  %1933 = vmatmul.mubr.bf16.gmra.mrb[0].mxu0 %v1772
  %v1934 = vpop.f32.mrb[0].mxu0
  %v1935 = vadd.f32 %v1735, %v1934
  %v1936 = vpop.f32.mrb[0].mxu0
  %v1937 = vpop.f32.mrb[0].mxu0
  %v1938 = vadd.f32 %v1735, %v1937
  %v1939 = vpop.f32.mrb[0].mxu0
  %1940 = vmatprep.mubr.bf16.mxu0 0
  %1941 = vmatmul.mubr.bf16.gmra.mrb[0].mxu0 %v1774
  %v1942 = vpop.f32.mrb[0].mxu0
  %v1943 = vadd.f32 %v1735, %v1942
  %v1944 = vpop.f32.mrb[0].mxu0
  %v1945 = vpop.f32.mrb[0].mxu0
  %v1946 = vadd.f32 %v1735, %v1945
  %v1947 = vpop.f32.mrb[0].mxu0
  %1948 = vmatprep.mubr.bf16.mxu0 0
  %1949 = vmatmul.mubr.bf16.gmra.mrb[0].mxu0 %v1776
  %v1950 = vpop.f32.mrb[0].mxu0
  %v1951 = vadd.f32 %v1735, %v1950
  %v1952 = vpop.f32.mrb[0].mxu0
  %v1953 = vpop.f32.mrb[0].mxu0
  %v1954 = vadd.f32 %v1735, %v1953
  %v1955 = vpop.f32.mrb[0].mxu0
  %1956 = vmatprep.mubr.bf16.mxu0 0
  %1957 = vmatmul.mubr.bf16.gmra.mrb[0].mxu0 %v1778
  %v1958 = vpop.f32.mrb[0].mxu0
  %v1959 = vadd.f32 %v1735, %v1958
  %v1960 = vpop.f32.mrb[0].mxu0
  %v1961 = vpop.f32.mrb[0].mxu0
  %v1962 = vadd.f32 %v1735, %v1961
  %v1963 = vpop.f32.mrb[0].mxu0
  %1964 = vmatprep.mubr.bf16.mxu0 0
  %1965 = vmatmul.mubr.bf16.gmra.mrb[0].mxu0 %v1780
  %v1966 = vpop.f32.mrb[0].mxu0
  %v1967 = vadd.f32 %v1735, %v1966
  %v1968 = vpop.f32.mrb[0].mxu0
  %v1969 = vpop.f32.mrb[0].mxu0
  %v1970 = vadd.f32 %v1735, %v1969
  %v1971 = vpop.f32.mrb[0].mxu0
  %1972 = vmatprep.mubr.bf16.mxu0 0
  %1973 = vmatmul.mubr.bf16.gmra.mrb[0].mxu0 %v1782
  %v1974 = vpop.f32.mrb[0].mxu0
  %v1975 = vadd.f32 %v1735, %v1974
  %v1976 = vpop.f32.mrb[0].mxu0
  %v1977 = vpop.f32.mrb[0].mxu0
  %v1978 = vadd.f32 %v1735, %v1977
  %v1979 = vpop.f32.mrb[0].mxu0
  %1980 = vmatprep.mubr.bf16.mxu0 0
  %1981 = vmatmul.mubr.bf16.gmra.mrb[0].mxu0 %v1784
  %v1982 = vpop.f32.mrb[0].mxu0
  %v1983 = vadd.f32 %v1735, %v1982
  %v1984 = vpop.f32.mrb[0].mxu0
  %v1985 = vpop.f32.mrb[0].mxu0
  %v1986 = vadd.f32 %v1735, %v1985
  %v1987 = vpop.f32.mrb[0].mxu0
  %1988 = vmatprep.mubr.bf16.mxu0 0
  %1989 = vmatmul.mubr.bf16.gmra.mrb[0].mxu0 %v1786
  %v1990 = vpop.f32.mrb[0].mxu0
  %v1991 = vadd.f32 %v1735, %v1990
  %v1992 = vpop.f32.mrb[0].mxu0
  %v1993 = vpop.f32.mrb[0].mxu0
  %v1994 = vadd.f32 %v1735, %v1993
  %v1995 = vpop.f32.mrb[0].mxu0
  %1996 = vmatprep.mubr.bf16.mxu0 0
  %1997 = vmatmul.mubr.bf16.gmra.mrb[0].mxu0 %v1788
  %v1998 = vpop.f32.mrb[0].mxu0
  %v1999 = vadd.f32 %v1735, %v1998
  %v2000 = vpop.f32.mrb[0].mxu0
  %v2001 = vpop.f32.mrb[0].mxu0
  %v2002 = vadd.f32 %v1735, %v2001
  %v2003 = vpop.f32.mrb[0].mxu0
  %2004 = vmatprep.mubr.bf16.mxu0 0
  %2005 = vmatmul.mubr.bf16.gmra.mrb[0].mxu0 %v1790
  %v2006 = vpop.f32.mrb[0].mxu0
  %v2007 = vadd.f32 %v1735, %v2006
  %v2008 = vpop.f32.mrb[0].mxu0
  %v2009 = vpop.f32.mrb[0].mxu0
  %v2010 = vadd.f32 %v1735, %v2009
  %v2011 = vpop.f32.mrb[0].mxu0
  %2012 = vmatprep.mubr.bf16.mxu0 0
  %2013 = vmatmul.mubr.bf16.gmra.mrb[0].mxu0 %v1792
  %v2014 = vpop.f32.mrb[0].mxu0
  %v2015 = vadd.f32 %v1735, %v2014
  %v2016 = vpop.f32.mrb[0].mxu0
  %v2017 = vpop.f32.mrb[0].mxu0
  %v2018 = vadd.f32 %v1735, %v2017
  %v2019 = vpop.f32.mrb[0].mxu0
  %2020 = vmatprep.mubr.bf16.mxu0 0
  %2021 = vmatmul.mubr.bf16.gmra.mrb[0].mxu0 %v1794
  %v2022 = vpop.f32.mrb[0].mxu0
  %v2023 = vadd.f32 %v1735, %v2022
  %v2024 = vpop.f32.mrb[0].mxu0
  %v2025 = vpop.f32.mrb[0].mxu0
  %v2026 = vadd.f32 %v1735, %v2025
  %v2027 = vpop.f32.mrb[0].mxu0
  %2028 = vmatprep.mubr.bf16.mxu0 0
  %2029 = vmatmul.mubr.bf16.gmra.mrb[0].mxu0 %v1796
  %v2030 = vpop.f32.mrb[0].mxu0
  %v2031 = vadd.f32 %v1735, %v2030
  %v2032 = vpop.f32.mrb[0].mxu0
  %v2033 = vpop.f32.mrb[0].mxu0
  %v2034 = vadd.f32 %v1735, %v2033
  %v2035 = vpop.f32.mrb[0].mxu0
  %2036 = vmatprep.mubr.bf16.mxu0 0
  %2037 = vmatmul.mubr.bf16.gmra.mrb[0].mxu0 %v1798
  %v2038 = vpop.f32.mrb[0].mxu0
  %v2039 = vadd.f32 %v1735, %v2038
  %v2040 = vpop.f32.mrb[0].mxu0
  %v2041 = vpop.f32.mrb[0].mxu0
  %v2042 = vadd.f32 %v1735, %v2041
  %v2043 = vpop.f32.mrb[0].mxu0
  %2044 = vmatprep.mubr.bf16.mxu0 0
  %2045 = vmatmul.mubr.bf16.gmra.mrb[0].mxu0 %v1800
  %v2046 = vpop.f32.mrb[0].mxu0
  %v2047 = vadd.f32 %v1735, %v2046
  %v2048 = vpop.f32.mrb[0].mxu0
  %v2049 = vpop.f32.mrb[0].mxu0
  %v2050 = vadd.f32 %v1735, %v2049
  %v2051 = vpop.f32.mrb[0].mxu0
  %2052 = vmatprep.mubr.bf16.mxu0 0
  %2053 = vmatmul.mubr.bf16.gmra.mrb[0].mxu0 %v1802
  %v2054 = vpop.f32.mrb[0].mxu0
  %v2055 = vadd.f32 %v1735, %v2054
  %v2056 = vpop.f32.mrb[0].mxu0
  %v2057 = vpop.f32.mrb[0].mxu0
  %v2058 = vadd.f32 %v1735, %v2057
  %v2059 = vpop.f32.mrb[0].mxu0
  %2060 = vmatprep.mubr.bf16.mxu0 0
  %2061 = vmatmul.mubr.bf16.gmra.mrb[0].mxu0 %v1804
  %v2062 = vpop.f32.mrb[0].mxu0
  %v2063 = vadd.f32 %v1735, %v2062
  %v2064 = vpop.f32.mrb[0].mxu0
  %v2065 = vpop.f32.mrb[0].mxu0
  %v2066 = vadd.f32 %v1735, %v2065
  %v2067 = vpop.f32.mrb[0].mxu0
  %2068 = vmatprep.mubr.bf16.mxu0 0
  %2069 = vmatmul.mubr.bf16.gmra.mrb[0].mxu0 %v1806
  %v2070 = vpop.f32.mrb[0].mxu0
  %v2071 = vadd.f32 %v1735, %v2070
  %v2072 = vpop.f32.mrb[0].mxu0
  %v2073 = vpop.f32.mrb[0].mxu0
  %v2074 = vadd.f32 %v1735, %v2073
  %v2075 = vpop.f32.mrb[0].mxu0
  %2076 = vmatprep.mubr.bf16.mxu0 0
  %2077 = vmatmul.mubr.bf16.gmra.mrb[0].mxu0 %v1808
  %v2078 = vpop.f32.mrb[0].mxu0
  %v2079 = vadd.f32 %v1735, %v2078
  %v2080 = vpop.f32.mrb[0].mxu0
  %v2081 = vpop.f32.mrb[0].mxu0
  %v2082 = vadd.f32 %v1735, %v2081
  %v2083 = vpop.f32.mrb[0].mxu0
  %2084 = vmatprep.mubr.bf16.mxu0 0
  %2085 = vmatmul.mubr.bf16.gmra.mrb[0].mxu0 %v1810
  %v2086 = vpop.f32.mrb[0].mxu0
  %v2087 = vadd.f32 %v1735, %v2086
  %v2088 = vpop.f32.mrb[0].mxu0
  %v2089 = vpop.f32.mrb[0].mxu0
  %v2090 = vadd.f32 %v1735, %v2089
  %v2091 = vpop.f32.mrb[0].mxu0
  %2092 = vmatprep.mubr.bf16.mxu0 0
  %2093 = vmatmul.mubr.bf16.gmra.mrb[0].mxu0 %v1812
  %v2094 = vpop.f32.mrb[0].mxu0
  %v2095 = vadd.f32 %v1735, %v2094
  %v2096 = vpop.f32.mrb[0].mxu0
  %v2097 = vpop.f32.mrb[0].mxu0
  %v2098 = vadd.f32 %v1735, %v2097
  %v2099 = vpop.f32.mrb[0].mxu0
  %2100 = vmatprep.mubr.bf16.mxu0 0
  %2101 = vmatmul.mubr.bf16.gmra.mrb[0].mxu0 %v1814
  %v2102 = vpop.f32.mrb[0].mxu0
  %v2103 = vadd.f32 %v1735, %v2102
  %v2104 = vpop.f32.mrb[0].mxu0
  %v2105 = vpop.f32.mrb[0].mxu0
  %v2106 = vadd.f32 %v1735, %v2105
  %v2107 = vpop.f32.mrb[0].mxu0
  %2108 = vdwg.mxu0
  %v2109 = vmax.f32 %v1855, 0.0
  %v2110 = vmax.f32 %v1858, 0.0
  %v2111 = vmax.f32 %v1863, 0.0
  %v2112 = vmax.f32 %v1866, 0.0
  %v2113 = vmax.f32 %v1871, 0.0
  %v2114 = vmax.f32 %v1874, 0.0
  %v2115 = vmax.f32 %v1879, 0.0
  %v2116 = vmax.f32 %v1882, 0.0
  %v2117 = vmax.f32 %v1887, 0.0
  %v2118 = vmax.f32 %v1890, 0.0
  %v2119 = vmax.f32 %v1895, 0.0
  %v2120 = vmax.f32 %v1898, 0.0
  %v2121 = vmax.f32 %v1903, 0.0
  %v2122 = vmax.f32 %v1906, 0.0
  %v2123 = vmax.f32 %v1911, 0.0
  %v2124 = vmax.f32 %v1914, 0.0
  %v2125 = vmax.f32 %v1919, 0.0
  %v2126 = vmax.f32 %v1922, 0.0
  %v2127 = vmax.f32 %v1927, 0.0
  %v2128 = vmax.f32 %v1930, 0.0
  %v2129 = vmax.f32 %v1935, 0.0
  %v2130 = vmax.f32 %v1938, 0.0
  %v2131 = vmax.f32 %v1943, 0.0
  %v2132 = vmax.f32 %v1946, 0.0
  %v2133 = vmax.f32 %v1951, 0.0
  %v2134 = vmax.f32 %v1954, 0.0
  %v2135 = vmax.f32 %v1959, 0.0
  %v2136 = vmax.f32 %v1962, 0.0
  %v2137 = vmax.f32 %v1967, 0.0
  %v2138 = vmax.f32 %v1970, 0.0
  %v2139 = vmax.f32 %v1975, 0.0
  %v2140 = vmax.f32 %v1978, 0.0
  %v2141 = vmax.f32 %v1983, 0.0
  %v2142 = vmax.f32 %v1986, 0.0
  %v2143 = vmax.f32 %v1991, 0.0
  %v2144 = vmax.f32 %v1994, 0.0
  %v2145 = vmax.f32 %v1999, 0.0
  %v2146 = vmax.f32 %v2002, 0.0
  %v2147 = vmax.f32 %v2007, 0.0
  %v2148 = vmax.f32 %v2010, 0.0
  %v2149 = vmax.f32 %v2015, 0.0
  %v2150 = vmax.f32 %v2018, 0.0
  %v2151 = vmax.f32 %v2023, 0.0
  %v2152 = vmax.f32 %v2026, 0.0
  %v2153 = vmax.f32 %v2031, 0.0
  %v2154 = vmax.f32 %v2034, 0.0
  %v2155 = vmax.f32 %v2039, 0.0
  %v2156 = vmax.f32 %v2042, 0.0
  %v2157 = vmax.f32 %v2047, 0.0
  %v2158 = vmax.f32 %v2050, 0.0
  %v2159 = vmax.f32 %v2055, 0.0
  %v2160 = vmax.f32 %v2058, 0.0
  %v2161 = vmax.f32 %v2063, 0.0
  %v2162 = vmax.f32 %v2066, 0.0
  %v2163 = vmax.f32 %v2071, 0.0
  %v2164 = vmax.f32 %v2074, 0.0
  %v2165 = vmax.f32 %v2079, 0.0
  %v2166 = vmax.f32 %v2082, 0.0
  %v2167 = vmax.f32 %v2087, 0.0
  %v2168 = vmax.f32 %v2090, 0.0
  %v2169 = vmax.f32 %v2095, 0.0
  %v2170 = vmax.f32 %v2098, 0.0
  %v2171 = vmax.f32 %v2103, 0.0
  %v2172 = vmax.f32 %v2106, 0.0
  %v2173 = vrot.slane %v2109, 7
  %v2174 = vrot.slane %v2111, 7
  %v2175 = vrot.slane %v2113, 7
  %v2176 = vrot.slane %v2115, 7
  %v2177 = vrot.slane %v2117, 7
  %v2178 = vrot.slane %v2119, 7
  %v2179 = vrot.slane %v2121, 7
  %v2180 = vrot.slane %v2123, 7
  %v2181 = vrot.slane %v2125, 7
  %v2182 = vrot.slane %v2127, 7
  %v2183 = vrot.slane %v2129, 7
  %v2184 = vrot.slane %v2131, 7
  %v2185 = vrot.slane %v2133, 7
  %v2186 = vrot.slane %v2135, 7
  %v2187 = vrot.slane %v2137, 7
  %v2188 = vrot.slane %v2139, 7
  %v2189 = vrot.slane %v2141, 7
  %v2190 = vrot.slane %v2143, 7
  %v2191 = vrot.slane %v2145, 7
  %v2192 = vrot.slane %v2147, 7
  %v2193 = vrot.slane %v2149, 7
  %v2194 = vrot.slane %v2151, 7
  %v2195 = vrot.slane %v2153, 7
  %v2196 = vrot.slane %v2155, 7
  %v2197 = vrot.slane %v2157, 7
  %v2198 = vrot.slane %v2159, 7
  %v2199 = vrot.slane %v2161, 7
  %v2200 = vrot.slane %v2163, 7
  %v2201 = vrot.slane %v2165, 7
  %v2202 = vrot.slane %v2167, 7
  %v2203 = vrot.slane %v2169, 7
  %v2204 = vrot.slane %v2171, 7
  %v2205 = vrot.slane %v2110, 7
  %v2206 = vrot.slane %v2112, 7
  %v2207 = vrot.slane %v2114, 7
  %v2208 = vrot.slane %v2116, 7
  %v2209 = vrot.slane %v2118, 7
  %v2210 = vrot.slane %v2120, 7
  %v2211 = vrot.slane %v2122, 7
  %v2212 = vrot.slane %v2124, 7
  %v2213 = vrot.slane %v2126, 7
  %v2214 = vrot.slane %v2128, 7
  %v2215 = vrot.slane %v2130, 7
  %v2216 = vrot.slane %v2132, 7
  %v2217 = vrot.slane %v2134, 7
  %v2218 = vrot.slane %v2136, 7
  %v2219 = vrot.slane %v2138, 7
  %v2220 = vrot.slane %v2140, 7
  %v2221 = vrot.slane %v2142, 7
  %v2222 = vrot.slane %v2144, 7
  %v2223 = vrot.slane %v2146, 7
  %v2224 = vrot.slane %v2148, 7
  %v2225 = vrot.slane %v2150, 7
  %v2226 = vrot.slane %v2152, 7
  %v2227 = vrot.slane %v2154, 7
  %v2228 = vrot.slane %v2156, 7
  %v2229 = vrot.slane %v2158, 7
  %v2230 = vrot.slane %v2160, 7
  %v2231 = vrot.slane %v2162, 7
  %v2232 = vrot.slane %v2164, 7
  %v2233 = vrot.slane %v2166, 7
  %v2234 = vrot.slane %v2168, 7
  %v2235 = vrot.slane %v2170, 7
  %v2236 = vrot.slane %v2172, 7
  %v2237 = vsel %vm149, %v2173, %v2205
  %v2238 = vsel %vm149, %v2174, %v2206
  %v2239 = vsel %vm149, %v2175, %v2207
  %v2240 = vsel %vm149, %v2176, %v2208
  %v2241 = vsel %vm149, %v2177, %v2209
  %v2242 = vsel %vm149, %v2178, %v2210
  %v2243 = vsel %vm149, %v2179, %v2211
  %v2244 = vsel %vm149, %v2180, %v2212
  %v2245 = vsel %vm149, %v2181, %v2213
  %v2246 = vsel %vm149, %v2182, %v2214
  %v2247 = vsel %vm149, %v2183, %v2215
  %v2248 = vsel %vm149, %v2184, %v2216
  %v2249 = vsel %vm149, %v2185, %v2217
  %v2250 = vsel %vm149, %v2186, %v2218
  %v2251 = vsel %vm149, %v2187, %v2219
  %v2252 = vsel %vm149, %v2188, %v2220
  %v2253 = vsel %vm149, %v2189, %v2221
  %v2254 = vsel %vm149, %v2190, %v2222
  %v2255 = vsel %vm149, %v2191, %v2223
  %v2256 = vsel %vm149, %v2192, %v2224
  %v2257 = vsel %vm149, %v2193, %v2225
  %v2258 = vsel %vm149, %v2194, %v2226
  %v2259 = vsel %vm149, %v2195, %v2227
  %v2260 = vsel %vm149, %v2196, %v2228
  %v2261 = vsel %vm149, %v2197, %v2229
  %v2262 = vsel %vm149, %v2198, %v2230
  %v2263 = vsel %vm149, %v2199, %v2231
  %v2264 = vsel %vm149, %v2200, %v2232
  %v2265 = vsel %vm149, %v2201, %v2233
  %v2266 = vsel %vm149, %v2202, %v2234
  %v2267 = vsel %vm149, %v2203, %v2235
  %v2268 = vsel %vm149, %v2204, %v2236
  %v2269 = vsel %vm149, %v2205, %v2173
  %v2270 = vsel %vm149, %v2206, %v2174
  %v2271 = vsel %vm149, %v2207, %v2175
  %v2272 = vsel %vm149, %v2208, %v2176
  %v2273 = vsel %vm149, %v2209, %v2177
  %v2274 = vsel %vm149, %v2210, %v2178
  %v2275 = vsel %vm149, %v2211, %v2179
  %v2276 = vsel %vm149, %v2212, %v2180
  %v2277 = vsel %vm149, %v2213, %v2181
  %v2278 = vsel %vm149, %v2214, %v2182
  %v2279 = vsel %vm149, %v2215, %v2183
  %v2280 = vsel %vm149, %v2216, %v2184
  %v2281 = vsel %vm149, %v2217, %v2185
  %v2282 = vsel %vm149, %v2218, %v2186
  %v2283 = vsel %vm149, %v2219, %v2187
  %v2284 = vsel %vm149, %v2220, %v2188
  %v2285 = vsel %vm149, %v2221, %v2189
  %v2286 = vsel %vm149, %v2222, %v2190
  %v2287 = vsel %vm149, %v2223, %v2191
  %v2288 = vsel %vm149, %v2224, %v2192
  %v2289 = vsel %vm149, %v2225, %v2193
  %v2290 = vsel %vm149, %v2226, %v2194
  %v2291 = vsel %vm149, %v2227, %v2195
  %v2292 = vsel %vm149, %v2228, %v2196
  %v2293 = vsel %vm149, %v2229, %v2197
  %v2294 = vsel %vm149, %v2230, %v2198
  %v2295 = vsel %vm149, %v2231, %v2199
  %v2296 = vsel %vm149, %v2232, %v2200
  %v2297 = vsel %vm149, %v2233, %v2201
  %v2298 = vsel %vm149, %v2234, %v2202
  %v2299 = vsel %vm149, %v2235, %v2203
  %v2300 = vsel %vm149, %v2236, %v2204
  %v2301 = vsel %vm221, %v2269, 0.0
  %v2302 = vsel %vm222, %v2237, 0.0
  %v2303 = vsel %vm221, %v2270, 0.0
  %v2304 = vsel %vm222, %v2238, 0.0
  %v2305 = vsel %vm221, %v2271, 0.0
  %v2306 = vsel %vm222, %v2239, 0.0
  %v2307 = vsel %vm221, %v2272, 0.0
  %v2308 = vsel %vm222, %v2240, 0.0
  %v2309 = vsel %vm221, %v2273, 0.0
  %v2310 = vsel %vm222, %v2241, 0.0
  %v2311 = vsel %vm221, %v2274, 0.0
  %v2312 = vsel %vm222, %v2242, 0.0
  %v2313 = vsel %vm221, %v2275, 0.0
  %v2314 = vsel %vm222, %v2243, 0.0
  %v2315 = vsel %vm221, %v2276, 0.0
  %v2316 = vsel %vm222, %v2244, 0.0
  %v2317 = vsel %vm221, %v2277, 0.0
  %v2318 = vsel %vm222, %v2245, 0.0
  %v2319 = vsel %vm221, %v2278, 0.0
  %v2320 = vsel %vm222, %v2246, 0.0
  %v2321 = vsel %vm221, %v2279, 0.0
  %v2322 = vsel %vm222, %v2247, 0.0
  %v2323 = vsel %vm221, %v2280, 0.0
  %v2324 = vsel %vm222, %v2248, 0.0
  %v2325 = vsel %vm221, %v2281, 0.0
  %v2326 = vsel %vm222, %v2249, 0.0
  %v2327 = vsel %vm221, %v2282, 0.0
  %v2328 = vsel %vm222, %v2250, 0.0
  %v2329 = vsel %vm221, %v2283, 0.0
  %v2330 = vsel %vm222, %v2251, 0.0
  %v2331 = vsel %vm221, %v2284, 0.0
  %v2332 = vsel %vm222, %v2252, 0.0
  %v2333 = vsel %vm221, %v2285, 0.0
  %v2334 = vsel %vm222, %v2253, 0.0
  %v2335 = vsel %vm221, %v2286, 0.0
  %v2336 = vsel %vm222, %v2254, 0.0
  %v2337 = vsel %vm221, %v2287, 0.0
  %v2338 = vsel %vm222, %v2255, 0.0
  %v2339 = vsel %vm221, %v2288, 0.0
  %v2340 = vsel %vm222, %v2256, 0.0
  %v2341 = vsel %vm221, %v2289, 0.0
  %v2342 = vsel %vm222, %v2257, 0.0
  %v2343 = vsel %vm221, %v2290, 0.0
  %v2344 = vsel %vm222, %v2258, 0.0
  %v2345 = vsel %vm221, %v2291, 0.0
  %v2346 = vsel %vm222, %v2259, 0.0
  %v2347 = vsel %vm221, %v2292, 0.0
  %v2348 = vsel %vm222, %v2260, 0.0
  %v2349 = vsel %vm221, %v2293, 0.0
  %v2350 = vsel %vm222, %v2261, 0.0
  %v2351 = vsel %vm221, %v2294, 0.0
  %v2352 = vsel %vm222, %v2262, 0.0
  %v2353 = vsel %vm221, %v2295, 0.0
  %v2354 = vsel %vm222, %v2263, 0.0
  %v2355 = vsel %vm221, %v2296, 0.0
  %v2356 = vsel %vm222, %v2264, 0.0
  %v2357 = vsel %vm221, %v2297, 0.0
  %v2358 = vsel %vm222, %v2265, 0.0
  %v2359 = vsel %vm221, %v2298, 0.0
  %v2360 = vsel %vm222, %v2266, 0.0
  %v2361 = vsel %vm221, %v2299, 0.0
  %v2362 = vsel %vm222, %v2267, 0.0
  %v2363 = vsel %vm221, %v2300, 0.0
  %v2364 = vsel %vm222, %v2268, 0.0
  %v2365 = vpack.c.bf16 %v2302, %v2301
  %v2366 = vpack.c.bf16 %v2304, %v2303
  %v2367 = vpack.c.bf16 %v2306, %v2305
  %v2368 = vpack.c.bf16 %v2308, %v2307
  %v2369 = vpack.c.bf16 %v2310, %v2309
  %v2370 = vpack.c.bf16 %v2312, %v2311
  %v2371 = vpack.c.bf16 %v2314, %v2313
  %v2372 = vpack.c.bf16 %v2316, %v2315
  %v2373 = vpack.c.bf16 %v2318, %v2317
  %v2374 = vpack.c.bf16 %v2320, %v2319
  %v2375 = vpack.c.bf16 %v2322, %v2321
  %v2376 = vpack.c.bf16 %v2324, %v2323
  %v2377 = vpack.c.bf16 %v2326, %v2325
  %v2378 = vpack.c.bf16 %v2328, %v2327
  %v2379 = vpack.c.bf16 %v2330, %v2329
  %v2380 = vpack.c.bf16 %v2332, %v2331
  %v2381 = vpack.c.bf16 %v2334, %v2333
  %v2382 = vpack.c.bf16 %v2336, %v2335
  %v2383 = vpack.c.bf16 %v2338, %v2337
  %v2384 = vpack.c.bf16 %v2340, %v2339
  %v2385 = vpack.c.bf16 %v2342, %v2341
  %v2386 = vpack.c.bf16 %v2344, %v2343
  %v2387 = vpack.c.bf16 %v2346, %v2345
  %v2388 = vpack.c.bf16 %v2348, %v2347
  %v2389 = vpack.c.bf16 %v2350, %v2349
  %v2390 = vpack.c.bf16 %v2352, %v2351
  %v2391 = vpack.c.bf16 %v2354, %v2353
  %v2392 = vpack.c.bf16 %v2356, %v2355
  %v2393 = vpack.c.bf16 %v2358, %v2357
  %v2394 = vpack.c.bf16 %v2360, %v2359
  %v2395 = vpack.c.bf16 %v2362, %v2361
  %v2396 = vpack.c.bf16 %v2364, %v2363
  %v2397 = vpack.c.bf16 %v2110, %v2109
  %v2398 = vpack.c.bf16 %v2112, %v2111
  %v2399 = vpack.c.bf16 %v2114, %v2113
  %v2400 = vpack.c.bf16 %v2116, %v2115
  %v2401 = vpack.c.bf16 %v2118, %v2117
  %v2402 = vpack.c.bf16 %v2120, %v2119
  %v2403 = vpack.c.bf16 %v2122, %v2121
  %v2404 = vpack.c.bf16 %v2124, %v2123
  %v2405 = vpack.c.bf16 %v2126, %v2125
  %v2406 = vpack.c.bf16 %v2128, %v2127
  %v2407 = vpack.c.bf16 %v2130, %v2129
  %v2408 = vpack.c.bf16 %v2132, %v2131
  %v2409 = vpack.c.bf16 %v2134, %v2133
  %v2410 = vpack.c.bf16 %v2136, %v2135
  %v2411 = vpack.c.bf16 %v2138, %v2137
  %v2412 = vpack.c.bf16 %v2140, %v2139
  %v2413 = vpack.c.bf16 %v2142, %v2141
  %v2414 = vpack.c.bf16 %v2144, %v2143
  %v2415 = vpack.c.bf16 %v2146, %v2145
  %v2416 = vpack.c.bf16 %v2148, %v2147
  %v2417 = vpack.c.bf16 %v2150, %v2149
  %v2418 = vpack.c.bf16 %v2152, %v2151
  %v2419 = vpack.c.bf16 %v2154, %v2153
  %v2420 = vpack.c.bf16 %v2156, %v2155
  %v2421 = vpack.c.bf16 %v2158, %v2157
  %v2422 = vpack.c.bf16 %v2160, %v2159
  %v2423 = vpack.c.bf16 %v2162, %v2161
  %v2424 = vpack.c.bf16 %v2164, %v2163
  %v2425 = vpack.c.bf16 %v2166, %v2165
  %v2426 = vpack.c.bf16 %v2168, %v2167
  %v2427 = vpack.c.bf16 %v2170, %v2169
  %v2428 = vpack.c.bf16 %v2172, %v2171
  %v2429 = vrot.slane %v2109, 1
  %v2430 = vrot.slane %v2111, 1
  %v2431 = vrot.slane %v2113, 1
  %v2432 = vrot.slane %v2115, 1
  %v2433 = vrot.slane %v2117, 1
  %v2434 = vrot.slane %v2119, 1
  %v2435 = vrot.slane %v2121, 1
  %v2436 = vrot.slane %v2123, 1
  %v2437 = vrot.slane %v2125, 1
  %v2438 = vrot.slane %v2127, 1
  %v2439 = vrot.slane %v2129, 1
  %v2440 = vrot.slane %v2131, 1
  %v2441 = vrot.slane %v2133, 1
  %v2442 = vrot.slane %v2135, 1
  %v2443 = vrot.slane %v2137, 1
  %v2444 = vrot.slane %v2139, 1
  %v2445 = vrot.slane %v2141, 1
  %v2446 = vrot.slane %v2143, 1
  %v2447 = vrot.slane %v2145, 1
  %v2448 = vrot.slane %v2147, 1
  %v2449 = vrot.slane %v2149, 1
  %v2450 = vrot.slane %v2151, 1
  %v2451 = vrot.slane %v2153, 1
  %v2452 = vrot.slane %v2155, 1
  %v2453 = vrot.slane %v2157, 1
  %v2454 = vrot.slane %v2159, 1
  %v2455 = vrot.slane %v2161, 1
  %v2456 = vrot.slane %v2163, 1
  %v2457 = vrot.slane %v2165, 1
  %v2458 = vrot.slane %v2167, 1
  %v2459 = vrot.slane %v2169, 1
  %v2460 = vrot.slane %v2171, 1
  %v2461 = vrot.slane %v2110, 1
  %v2462 = vrot.slane %v2112, 1
  %v2463 = vrot.slane %v2114, 1
  %v2464 = vrot.slane %v2116, 1
  %v2465 = vrot.slane %v2118, 1
  %v2466 = vrot.slane %v2120, 1
  %v2467 = vrot.slane %v2122, 1
  %v2468 = vrot.slane %v2124, 1
  %v2469 = vrot.slane %v2126, 1
  %v2470 = vrot.slane %v2128, 1
  %v2471 = vrot.slane %v2130, 1
  %v2472 = vrot.slane %v2132, 1
  %v2473 = vrot.slane %v2134, 1
  %v2474 = vrot.slane %v2136, 1
  %v2475 = vrot.slane %v2138, 1
  %v2476 = vrot.slane %v2140, 1
  %v2477 = vrot.slane %v2142, 1
  %v2478 = vrot.slane %v2144, 1
  %v2479 = vrot.slane %v2146, 1
  %v2480 = vrot.slane %v2148, 1
  %v2481 = vrot.slane %v2150, 1
  %v2482 = vrot.slane %v2152, 1
  %v2483 = vrot.slane %v2154, 1
  %v2484 = vrot.slane %v2156, 1
  %v2485 = vrot.slane %v2158, 1
  %v2486 = vrot.slane %v2160, 1
  %v2487 = vrot.slane %v2162, 1
  %v2488 = vrot.slane %v2164, 1
  %v2489 = vrot.slane %v2166, 1
  %v2490 = vrot.slane %v2168, 1
  %v2491 = vrot.slane %v2170, 1
  %v2492 = vrot.slane %v2172, 1
  %v2493 = vsel %vm415, %v2429, %v2461
  %v2494 = vsel %vm415, %v2430, %v2462
  %v2495 = vsel %vm415, %v2431, %v2463
  %v2496 = vsel %vm415, %v2432, %v2464
  %v2497 = vsel %vm415, %v2433, %v2465
  %v2498 = vsel %vm415, %v2434, %v2466
  %v2499 = vsel %vm415, %v2435, %v2467
  %v2500 = vsel %vm415, %v2436, %v2468
  %v2501 = vsel %vm415, %v2437, %v2469
  %v2502 = vsel %vm415, %v2438, %v2470
  %v2503 = vsel %vm415, %v2439, %v2471
  %v2504 = vsel %vm415, %v2440, %v2472
  %v2505 = vsel %vm415, %v2441, %v2473
  %v2506 = vsel %vm415, %v2442, %v2474
  %v2507 = vsel %vm415, %v2443, %v2475
  %v2508 = vsel %vm415, %v2444, %v2476
  %v2509 = vsel %vm415, %v2445, %v2477
  %v2510 = vsel %vm415, %v2446, %v2478
  %v2511 = vsel %vm415, %v2447, %v2479
  %v2512 = vsel %vm415, %v2448, %v2480
  %v2513 = vsel %vm415, %v2449, %v2481
  %v2514 = vsel %vm415, %v2450, %v2482
  %v2515 = vsel %vm415, %v2451, %v2483
  %v2516 = vsel %vm415, %v2452, %v2484
  %v2517 = vsel %vm415, %v2453, %v2485
  %v2518 = vsel %vm415, %v2454, %v2486
  %v2519 = vsel %vm415, %v2455, %v2487
  %v2520 = vsel %vm415, %v2456, %v2488
  %v2521 = vsel %vm415, %v2457, %v2489
  %v2522 = vsel %vm415, %v2458, %v2490
  %v2523 = vsel %vm415, %v2459, %v2491
  %v2524 = vsel %vm415, %v2460, %v2492
  %v2525 = vsel %vm415, %v2461, %v2429
  %v2526 = vsel %vm415, %v2462, %v2430
  %v2527 = vsel %vm415, %v2463, %v2431
  %v2528 = vsel %vm415, %v2464, %v2432
  %v2529 = vsel %vm415, %v2465, %v2433
  %v2530 = vsel %vm415, %v2466, %v2434
  %v2531 = vsel %vm415, %v2467, %v2435
  %v2532 = vsel %vm415, %v2468, %v2436
  %v2533 = vsel %vm415, %v2469, %v2437
  %v2534 = vsel %vm415, %v2470, %v2438
  %v2535 = vsel %vm415, %v2471, %v2439
  %v2536 = vsel %vm415, %v2472, %v2440
  %v2537 = vsel %vm415, %v2473, %v2441
  %v2538 = vsel %vm415, %v2474, %v2442
  %v2539 = vsel %vm415, %v2475, %v2443
  %v2540 = vsel %vm415, %v2476, %v2444
  %v2541 = vsel %vm415, %v2477, %v2445
  %v2542 = vsel %vm415, %v2478, %v2446
  %v2543 = vsel %vm415, %v2479, %v2447
  %v2544 = vsel %vm415, %v2480, %v2448
  %v2545 = vsel %vm415, %v2481, %v2449
  %v2546 = vsel %vm415, %v2482, %v2450
  %v2547 = vsel %vm415, %v2483, %v2451
  %v2548 = vsel %vm415, %v2484, %v2452
  %v2549 = vsel %vm415, %v2485, %v2453
  %v2550 = vsel %vm415, %v2486, %v2454
  %v2551 = vsel %vm415, %v2487, %v2455
  %v2552 = vsel %vm415, %v2488, %v2456
  %v2553 = vsel %vm415, %v2489, %v2457
  %v2554 = vsel %vm415, %v2490, %v2458
  %v2555 = vsel %vm415, %v2491, %v2459
  %v2556 = vsel %vm415, %v2492, %v2460
  %v2557 = vsel %vm486, %v2493, 0.0
  %v2558 = vsel %vm487, %v2525, 0.0
  %v2559 = vsel %vm486, %v2494, 0.0
  %v2560 = vsel %vm487, %v2526, 0.0
  %v2561 = vsel %vm486, %v2495, 0.0
  %v2562 = vsel %vm487, %v2527, 0.0
  %v2563 = vsel %vm486, %v2496, 0.0
  %v2564 = vsel %vm487, %v2528, 0.0
  %v2565 = vsel %vm486, %v2497, 0.0
  %v2566 = vsel %vm487, %v2529, 0.0
  %v2567 = vsel %vm486, %v2498, 0.0
  %v2568 = vsel %vm487, %v2530, 0.0
  %v2569 = vsel %vm486, %v2499, 0.0
  %v2570 = vsel %vm487, %v2531, 0.0
  %v2571 = vsel %vm486, %v2500, 0.0
  %v2572 = vsel %vm487, %v2532, 0.0
  %v2573 = vsel %vm486, %v2501, 0.0
  %v2574 = vsel %vm487, %v2533, 0.0
  %v2575 = vsel %vm486, %v2502, 0.0
  %v2576 = vsel %vm487, %v2534, 0.0
  %v2577 = vsel %vm486, %v2503, 0.0
  %v2578 = vsel %vm487, %v2535, 0.0
  %v2579 = vsel %vm486, %v2504, 0.0
  %v2580 = vsel %vm487, %v2536, 0.0
  %v2581 = vsel %vm486, %v2505, 0.0
  %v2582 = vsel %vm487, %v2537, 0.0
  %v2583 = vsel %vm486, %v2506, 0.0
  %v2584 = vsel %vm487, %v2538, 0.0
  %v2585 = vsel %vm486, %v2507, 0.0
  %v2586 = vsel %vm487, %v2539, 0.0
  %v2587 = vsel %vm486, %v2508, 0.0
  %v2588 = vsel %vm487, %v2540, 0.0
  %v2589 = vsel %vm486, %v2509, 0.0
  %v2590 = vsel %vm487, %v2541, 0.0
  %v2591 = vsel %vm486, %v2510, 0.0
  %v2592 = vsel %vm487, %v2542, 0.0
  %v2593 = vsel %vm486, %v2511, 0.0
  %v2594 = vsel %vm487, %v2543, 0.0
  %v2595 = vsel %vm486, %v2512, 0.0
  %v2596 = vsel %vm487, %v2544, 0.0
  %v2597 = vsel %vm486, %v2513, 0.0
  %v2598 = vsel %vm487, %v2545, 0.0
  %v2599 = vsel %vm486, %v2514, 0.0
  %v2600 = vsel %vm487, %v2546, 0.0
  %v2601 = vsel %vm486, %v2515, 0.0
  %v2602 = vsel %vm487, %v2547, 0.0
  %v2603 = vsel %vm486, %v2516, 0.0
  %v2604 = vsel %vm487, %v2548, 0.0
  %v2605 = vsel %vm486, %v2517, 0.0
  %v2606 = vsel %vm487, %v2549, 0.0
  %v2607 = vsel %vm486, %v2518, 0.0
  %v2608 = vsel %vm487, %v2550, 0.0
  %v2609 = vsel %vm486, %v2519, 0.0
  %v2610 = vsel %vm487, %v2551, 0.0
  %v2611 = vsel %vm486, %v2520, 0.0
  %v2612 = vsel %vm487, %v2552, 0.0
  %v2613 = vsel %vm486, %v2521, 0.0
  %v2614 = vsel %vm487, %v2553, 0.0
  %v2615 = vsel %vm486, %v2522, 0.0
  %v2616 = vsel %vm487, %v2554, 0.0
  %v2617 = vsel %vm486, %v2523, 0.0
  %v2618 = vsel %vm487, %v2555, 0.0
  %v2619 = vsel %vm486, %v2524, 0.0
  %v2620 = vsel %vm487, %v2556, 0.0
  %v2621 = vpack.c.bf16 %v2558, %v2557
  %v2622 = vpack.c.bf16 %v2560, %v2559
  %v2623 = vpack.c.bf16 %v2562, %v2561
  %v2624 = vpack.c.bf16 %v2564, %v2563
  %v2625 = vpack.c.bf16 %v2566, %v2565
  %v2626 = vpack.c.bf16 %v2568, %v2567
  %v2627 = vpack.c.bf16 %v2570, %v2569
  %v2628 = vpack.c.bf16 %v2572, %v2571
  %v2629 = vpack.c.bf16 %v2574, %v2573
  %v2630 = vpack.c.bf16 %v2576, %v2575
  %v2631 = vpack.c.bf16 %v2578, %v2577
  %v2632 = vpack.c.bf16 %v2580, %v2579
  %v2633 = vpack.c.bf16 %v2582, %v2581
  %v2634 = vpack.c.bf16 %v2584, %v2583
  %v2635 = vpack.c.bf16 %v2586, %v2585
  %v2636 = vpack.c.bf16 %v2588, %v2587
  %v2637 = vpack.c.bf16 %v2590, %v2589
  %v2638 = vpack.c.bf16 %v2592, %v2591
  %v2639 = vpack.c.bf16 %v2594, %v2593
  %v2640 = vpack.c.bf16 %v2596, %v2595
  %v2641 = vpack.c.bf16 %v2598, %v2597
  %v2642 = vpack.c.bf16 %v2600, %v2599
  %v2643 = vpack.c.bf16 %v2602, %v2601
  %v2644 = vpack.c.bf16 %v2604, %v2603
  %v2645 = vpack.c.bf16 %v2606, %v2605
  %v2646 = vpack.c.bf16 %v2608, %v2607
  %v2647 = vpack.c.bf16 %v2610, %v2609
  %v2648 = vpack.c.bf16 %v2612, %v2611
  %v2649 = vpack.c.bf16 %v2614, %v2613
  %v2650 = vpack.c.bf16 %v2616, %v2615
  %v2651 = vpack.c.bf16 %v2618, %v2617
  %v2652 = vpack.c.bf16 %v2620, %v2619
  %2683 = vrot.lane.b32.xlu0 %v2397, 32
  %v2684 = vpop.permute.xlu0 %2683
  %2685 = vrot.lane.b32.xlu0 %v2398, 32
  %v2686 = vpop.permute.xlu0 %2685
  %2687 = vrot.lane.b32.xlu0 %v2399, 32
  %v2688 = vpop.permute.xlu0 %2687
  %2689 = vrot.lane.b32.xlu0 %v2400, 32
  %v2690 = vpop.permute.xlu0 %2689
  %2691 = vrot.lane.b32.xlu0 %v2401, 32
  %v2692 = vpop.permute.xlu0 %2691
  %2693 = vrot.lane.b32.xlu0 %v2402, 32
  %v2694 = vpop.permute.xlu0 %2693
  %2695 = vrot.lane.b32.xlu0 %v2403, 32
  %v2696 = vpop.permute.xlu0 %2695
  %2697 = vrot.lane.b32.xlu0 %v2404, 32
  %v2698 = vpop.permute.xlu0 %2697
  %2699 = vrot.lane.b32.xlu0 %v2405, 32
  %v2700 = vpop.permute.xlu0 %2699
  %2701 = vrot.lane.b32.xlu0 %v2406, 32
  %v2702 = vpop.permute.xlu0 %2701
  %2703 = vrot.lane.b32.xlu0 %v2407, 32
  %v2704 = vpop.permute.xlu0 %2703
  %2705 = vrot.lane.b32.xlu0 %v2408, 32
  %v2706 = vpop.permute.xlu0 %2705
  %2707 = vrot.lane.b32.xlu0 %v2409, 32
  %v2708 = vpop.permute.xlu0 %2707
  %2709 = vrot.lane.b32.xlu0 %v2410, 32
  %v2710 = vpop.permute.xlu0 %2709
  %2711 = vrot.lane.b32.xlu0 %v2411, 32
  %v2712 = vpop.permute.xlu0 %2711
  %2713 = vrot.lane.b32.xlu0 %v2413, 32
  %v2714 = vpop.permute.xlu0 %2713
  %2715 = vrot.lane.b32.xlu0 %v2414, 32
  %v2716 = vpop.permute.xlu0 %2715
  %2717 = vrot.lane.b32.xlu0 %v2415, 32
  %v2718 = vpop.permute.xlu0 %2717
  %2719 = vrot.lane.b32.xlu0 %v2416, 32
  %v2720 = vpop.permute.xlu0 %2719
  %2721 = vrot.lane.b32.xlu0 %v2417, 32
  %v2722 = vpop.permute.xlu0 %2721
  %2723 = vrot.lane.b32.xlu0 %v2418, 32
  %v2724 = vpop.permute.xlu0 %2723
  %2725 = vrot.lane.b32.xlu0 %v2419, 32
  %v2726 = vpop.permute.xlu0 %2725
  %2727 = vrot.lane.b32.xlu0 %v2420, 32
  %v2728 = vpop.permute.xlu0 %2727
  %2729 = vrot.lane.b32.xlu0 %v2421, 32
  %v2730 = vpop.permute.xlu0 %2729
  %2731 = vrot.lane.b32.xlu0 %v2422, 32
  %v2732 = vpop.permute.xlu0 %2731
  %2733 = vrot.lane.b32.xlu0 %v2423, 32
  %v2734 = vpop.permute.xlu0 %2733
  %2735 = vrot.lane.b32.xlu0 %v2424, 32
  %v2736 = vpop.permute.xlu0 %2735
  %2737 = vrot.lane.b32.xlu0 %v2425, 32
  %v2738 = vpop.permute.xlu0 %2737
  %2739 = vrot.lane.b32.xlu0 %v2426, 32
  %v2740 = vpop.permute.xlu0 %2739
  %2741 = vrot.lane.b32.xlu0 %v2427, 32
  %v2742 = vpop.permute.xlu0 %2741
  %2773 = vrot.lane.b32.xlu0 0, 64
  %v2774 = vpop.permute.xlu0 %2773
  %2775 = vrot.lane.b32.xlu0 %v2621, 64
  %v2776 = vpop.permute.xlu0 %2775
  %2777 = vrot.lane.b32.xlu0 %v2622, 64
  %v2778 = vpop.permute.xlu0 %2777
  %2779 = vrot.lane.b32.xlu0 %v2623, 64
  %v2780 = vpop.permute.xlu0 %2779
  %2781 = vrot.lane.b32.xlu0 %v2624, 64
  %v2782 = vpop.permute.xlu0 %2781
  %2783 = vrot.lane.b32.xlu0 %v2625, 64
  %v2784 = vpop.permute.xlu0 %2783
  %2785 = vrot.lane.b32.xlu0 %v2626, 64
  %v2786 = vpop.permute.xlu0 %2785
  %2787 = vrot.lane.b32.xlu0 %v2627, 64
  %v2788 = vpop.permute.xlu0 %2787
  %2789 = vrot.lane.b32.xlu0 %v2628, 64
  %v2790 = vpop.permute.xlu0 %2789
  %2791 = vrot.lane.b32.xlu0 %v2629, 64
  %v2792 = vpop.permute.xlu0 %2791
  %2793 = vrot.lane.b32.xlu0 %v2630, 64
  %v2794 = vpop.permute.xlu0 %2793
  %2795 = vrot.lane.b32.xlu0 %v2631, 64
  %v2796 = vpop.permute.xlu0 %2795
  %2797 = vrot.lane.b32.xlu0 %v2632, 64
  %v2798 = vpop.permute.xlu0 %2797
  %2799 = vrot.lane.b32.xlu0 %v2633, 64
  %v2800 = vpop.permute.xlu0 %2799
  %2801 = vrot.lane.b32.xlu0 %v2634, 64
  %v2802 = vpop.permute.xlu0 %2801
  %2803 = vrot.lane.b32.xlu0 %v2635, 64
  %v2804 = vpop.permute.xlu0 %2803
  %2805 = vrot.lane.b32.xlu0 %v2637, 64
  %v2806 = vpop.permute.xlu0 %2805
  %2807 = vrot.lane.b32.xlu0 %v2638, 64
  %v2808 = vpop.permute.xlu0 %2807
  %2809 = vrot.lane.b32.xlu0 %v2639, 64
  %v2810 = vpop.permute.xlu0 %2809
  %2811 = vrot.lane.b32.xlu0 %v2640, 64
  %v2812 = vpop.permute.xlu0 %2811
  %2813 = vrot.lane.b32.xlu0 %v2641, 64
  %v2814 = vpop.permute.xlu0 %2813
  %2815 = vrot.lane.b32.xlu0 %v2642, 64
  %v2816 = vpop.permute.xlu0 %2815
  %2817 = vrot.lane.b32.xlu0 %v2643, 64
  %v2818 = vpop.permute.xlu0 %2817
  %2819 = vrot.lane.b32.xlu0 %v2644, 64
  %v2820 = vpop.permute.xlu0 %2819
  %2821 = vrot.lane.b32.xlu0 %v2645, 64
  %v2822 = vpop.permute.xlu0 %2821
  %2823 = vrot.lane.b32.xlu0 %v2646, 64
  %v2824 = vpop.permute.xlu0 %2823
  %2825 = vrot.lane.b32.xlu0 %v2647, 64
  %v2826 = vpop.permute.xlu0 %2825
  %2827 = vrot.lane.b32.xlu0 %v2648, 64
  %v2828 = vpop.permute.xlu0 %2827
  %2829 = vrot.lane.b32.xlu0 %v2649, 64
  %v2830 = vpop.permute.xlu0 %2829
  %2831 = vrot.lane.b32.xlu0 %v2650, 64
  %v2832 = vpop.permute.xlu0 %2831
  %2833 = vrot.lane.b32.xlu0 %v2651, 64
  %v2834 = vpop.permute.xlu0 %2833
  %2867 = vrot.lane.b32.xlu0 %v2365, 96
  %v2868 = vpop.permute.xlu0 %2867
  %2869 = vrot.lane.b32.xlu0 %v2366, 96
  %v2870 = vpop.permute.xlu0 %2869
  %2871 = vrot.lane.b32.xlu0 %v2367, 96
  %v2872 = vpop.permute.xlu0 %2871
  %2873 = vrot.lane.b32.xlu0 %v2368, 96
  %v2874 = vpop.permute.xlu0 %2873
  %2875 = vrot.lane.b32.xlu0 %v2369, 96
  %v2876 = vpop.permute.xlu0 %2875
  %2877 = vrot.lane.b32.xlu0 %v2370, 96
  %v2878 = vpop.permute.xlu0 %2877
  %2879 = vrot.lane.b32.xlu0 %v2371, 96
  %v2880 = vpop.permute.xlu0 %2879
  %2881 = vrot.lane.b32.xlu0 %v2372, 96
  %v2882 = vpop.permute.xlu0 %2881
  %2883 = vrot.lane.b32.xlu0 %v2373, 96
  %v2884 = vpop.permute.xlu0 %2883
  %2885 = vrot.lane.b32.xlu0 %v2374, 96
  %v2886 = vpop.permute.xlu0 %2885
  %2887 = vrot.lane.b32.xlu0 %v2375, 96
  %v2888 = vpop.permute.xlu0 %2887
  %2889 = vrot.lane.b32.xlu0 %v2376, 96
  %v2890 = vpop.permute.xlu0 %2889
  %2891 = vrot.lane.b32.xlu0 %v2377, 96
  %v2892 = vpop.permute.xlu0 %2891
  %2893 = vrot.lane.b32.xlu0 %v2378, 96
  %v2894 = vpop.permute.xlu0 %2893
  %2895 = vrot.lane.b32.xlu0 %v2379, 96
  %v2896 = vpop.permute.xlu0 %2895
  %2897 = vrot.lane.b32.xlu0 %v2380, 96
  %v2898 = vpop.permute.xlu0 %2897
  %2899 = vrot.lane.b32.xlu0 %v2381, 96
  %v2900 = vpop.permute.xlu0 %2899
  %2901 = vrot.lane.b32.xlu0 %v2382, 96
  %v2902 = vpop.permute.xlu0 %2901
  %2903 = vrot.lane.b32.xlu0 %v2383, 96
  %v2904 = vpop.permute.xlu0 %2903
  %2905 = vrot.lane.b32.xlu0 %v2384, 96
  %v2906 = vpop.permute.xlu0 %2905
  %2907 = vrot.lane.b32.xlu0 %v2385, 96
  %v2908 = vpop.permute.xlu0 %2907
  %2909 = vrot.lane.b32.xlu0 %v2386, 96
  %v2910 = vpop.permute.xlu0 %2909
  %2911 = vrot.lane.b32.xlu0 %v2387, 96
  %v2912 = vpop.permute.xlu0 %2911
  %2913 = vrot.lane.b32.xlu0 %v2388, 96
  %v2914 = vpop.permute.xlu0 %2913
  %2915 = vrot.lane.b32.xlu0 %v2389, 96
  %v2916 = vpop.permute.xlu0 %2915
  %2917 = vrot.lane.b32.xlu0 %v2390, 96
  %v2918 = vpop.permute.xlu0 %2917
  %2919 = vrot.lane.b32.xlu0 %v2391, 96
  %v2920 = vpop.permute.xlu0 %2919
  %2921 = vrot.lane.b32.xlu0 %v2392, 96
  %v2922 = vpop.permute.xlu0 %2921
  %2923 = vrot.lane.b32.xlu0 %v2393, 96
  %v2924 = vpop.permute.xlu0 %2923
  %2925 = vrot.lane.b32.xlu0 %v2394, 96
  %v2926 = vpop.permute.xlu0 %2925
  %2927 = vrot.lane.b32.xlu0 %v2395, 96
  %v2928 = vpop.permute.xlu0 %2927
  %2929 = vrot.lane.b32.xlu0 %v2396, 96
  %v2930 = vpop.permute.xlu0 %2929
  %2933 = vrot.lane.b32.xlu0 %v2621, 32
  %v2934 = vpop.permute.xlu0 %2933
  %2935 = vrot.lane.b32.xlu0 %v2622, 32
  %v2936 = vpop.permute.xlu0 %2935
  %2937 = vrot.lane.b32.xlu0 %v2623, 32
  %v2938 = vpop.permute.xlu0 %2937
  %2939 = vrot.lane.b32.xlu0 %v2624, 32
  %v2940 = vpop.permute.xlu0 %2939
  %2941 = vrot.lane.b32.xlu0 %v2625, 32
  %v2942 = vpop.permute.xlu0 %2941
  %2943 = vrot.lane.b32.xlu0 %v2626, 32
  %v2944 = vpop.permute.xlu0 %2943
  %2945 = vrot.lane.b32.xlu0 %v2627, 32
  %v2946 = vpop.permute.xlu0 %2945
  %2947 = vrot.lane.b32.xlu0 %v2628, 32
  %v2948 = vpop.permute.xlu0 %2947
  %2949 = vrot.lane.b32.xlu0 %v2629, 32
  %v2950 = vpop.permute.xlu0 %2949
  %2951 = vrot.lane.b32.xlu0 %v2630, 32
  %v2952 = vpop.permute.xlu0 %2951
  %2953 = vrot.lane.b32.xlu0 %v2631, 32
  %v2954 = vpop.permute.xlu0 %2953
  %2955 = vrot.lane.b32.xlu0 %v2632, 32
  %v2956 = vpop.permute.xlu0 %2955
  %2957 = vrot.lane.b32.xlu0 %v2633, 32
  %v2958 = vpop.permute.xlu0 %2957
  %2959 = vrot.lane.b32.xlu0 %v2634, 32
  %v2960 = vpop.permute.xlu0 %2959
  %2961 = vrot.lane.b32.xlu0 %v2635, 32
  %v2962 = vpop.permute.xlu0 %2961
  %2963 = vrot.lane.b32.xlu0 %v2636, 32
  %v2964 = vpop.permute.xlu0 %2963
  %2965 = vrot.lane.b32.xlu0 %v2637, 32
  %v2966 = vpop.permute.xlu0 %2965
  %2967 = vrot.lane.b32.xlu0 %v2638, 32
  %v2968 = vpop.permute.xlu0 %2967
  %2969 = vrot.lane.b32.xlu0 %v2639, 32
  %v2970 = vpop.permute.xlu0 %2969
  %2971 = vrot.lane.b32.xlu0 %v2640, 32
  %v2972 = vpop.permute.xlu0 %2971
  %2973 = vrot.lane.b32.xlu0 %v2641, 32
  %v2974 = vpop.permute.xlu0 %2973
  %2975 = vrot.lane.b32.xlu0 %v2642, 32
  %v2976 = vpop.permute.xlu0 %2975
  %2977 = vrot.lane.b32.xlu0 %v2643, 32
  %v2978 = vpop.permute.xlu0 %2977
  %2979 = vrot.lane.b32.xlu0 %v2644, 32
  %v2980 = vpop.permute.xlu0 %2979
  %2981 = vrot.lane.b32.xlu0 %v2645, 32
  %v2982 = vpop.permute.xlu0 %2981
  %2983 = vrot.lane.b32.xlu0 %v2646, 32
  %v2984 = vpop.permute.xlu0 %2983
  %2985 = vrot.lane.b32.xlu0 %v2647, 32
  %v2986 = vpop.permute.xlu0 %2985
  %2987 = vrot.lane.b32.xlu0 %v2648, 32
  %v2988 = vpop.permute.xlu0 %2987
  %2989 = vrot.lane.b32.xlu0 %v2649, 32
  %v2990 = vpop.permute.xlu0 %2989
  %2991 = vrot.lane.b32.xlu0 %v2650, 32
  %v2992 = vpop.permute.xlu0 %2991
  %2993 = vrot.lane.b32.xlu0 %v2651, 32
  %v2994 = vpop.permute.xlu0 %2993
  %2995 = vrot.lane.b32.xlu0 %v2652, 32
  %v2996 = vpop.permute.xlu0 %2995
  %2997 = vrot.lane.b32.xlu0 %v2366, 64
  %v2998 = vpop.permute.xlu0 %2997
  %2999 = vrot.lane.b32.xlu0 %v2367, 64
  %v3000 = vpop.permute.xlu0 %2999
  %3001 = vrot.lane.b32.xlu0 %v2368, 64
  %v3002 = vpop.permute.xlu0 %3001
  %3003 = vrot.lane.b32.xlu0 %v2369, 64
  %v3004 = vpop.permute.xlu0 %3003
  %3005 = vrot.lane.b32.xlu0 %v2370, 64
  %v3006 = vpop.permute.xlu0 %3005
  %3007 = vrot.lane.b32.xlu0 %v2371, 64
  %v3008 = vpop.permute.xlu0 %3007
  %3009 = vrot.lane.b32.xlu0 %v2372, 64
  %v3010 = vpop.permute.xlu0 %3009
  %3011 = vrot.lane.b32.xlu0 %v2373, 64
  %v3012 = vpop.permute.xlu0 %3011
  %3013 = vrot.lane.b32.xlu0 %v2374, 64
  %v3014 = vpop.permute.xlu0 %3013
  %3015 = vrot.lane.b32.xlu0 %v2375, 64
  %v3016 = vpop.permute.xlu0 %3015
  %3017 = vrot.lane.b32.xlu0 %v2376, 64
  %v3018 = vpop.permute.xlu0 %3017
  %3019 = vrot.lane.b32.xlu0 %v2377, 64
  %v3020 = vpop.permute.xlu0 %3019
  %3021 = vrot.lane.b32.xlu0 %v2378, 64
  %v3022 = vpop.permute.xlu0 %3021
  %3023 = vrot.lane.b32.xlu0 %v2379, 64
  %v3024 = vpop.permute.xlu0 %3023
  %3025 = vrot.lane.b32.xlu0 %v2380, 64
  %v3026 = vpop.permute.xlu0 %3025
  %3027 = vrot.lane.b32.xlu0 %v2382, 64
  %v3028 = vpop.permute.xlu0 %3027
  %3029 = vrot.lane.b32.xlu0 %v2383, 64
  %v3030 = vpop.permute.xlu0 %3029
  %3031 = vrot.lane.b32.xlu0 %v2384, 64
  %v3032 = vpop.permute.xlu0 %3031
  %3033 = vrot.lane.b32.xlu0 %v2385, 64
  %v3034 = vpop.permute.xlu0 %3033
  %3035 = vrot.lane.b32.xlu0 %v2386, 64
  %v3036 = vpop.permute.xlu0 %3035
  %3037 = vrot.lane.b32.xlu0 %v2387, 64
  %v3038 = vpop.permute.xlu0 %3037
  %3039 = vrot.lane.b32.xlu0 %v2388, 64
  %v3040 = vpop.permute.xlu0 %3039
  %3041 = vrot.lane.b32.xlu0 %v2389, 64
  %v3042 = vpop.permute.xlu0 %3041
  %3043 = vrot.lane.b32.xlu0 %v2390, 64
  %v3044 = vpop.permute.xlu0 %3043
  %3045 = vrot.lane.b32.xlu0 %v2391, 64
  %v3046 = vpop.permute.xlu0 %3045
  %3047 = vrot.lane.b32.xlu0 %v2392, 64
  %v3048 = vpop.permute.xlu0 %3047
  %3049 = vrot.lane.b32.xlu0 %v2393, 64
  %v3050 = vpop.permute.xlu0 %3049
  %3051 = vrot.lane.b32.xlu0 %v2394, 64
  %v3052 = vpop.permute.xlu0 %3051
  %3053 = vrot.lane.b32.xlu0 %v2395, 64
  %v3054 = vpop.permute.xlu0 %3053
  %3055 = vrot.lane.b32.xlu0 %v2396, 64
  %v3056 = vpop.permute.xlu0 %3055
  %3059 = vrot.lane.b32.xlu0 %v2398, 96
  %v3060 = vpop.permute.xlu0 %3059
  %3061 = vrot.lane.b32.xlu0 %v2399, 96
  %v3062 = vpop.permute.xlu0 %3061
  %3063 = vrot.lane.b32.xlu0 %v2400, 96
  %v3064 = vpop.permute.xlu0 %3063
  %3065 = vrot.lane.b32.xlu0 %v2401, 96
  %v3066 = vpop.permute.xlu0 %3065
  %3067 = vrot.lane.b32.xlu0 %v2402, 96
  %v3068 = vpop.permute.xlu0 %3067
  %3069 = vrot.lane.b32.xlu0 %v2403, 96
  %v3070 = vpop.permute.xlu0 %3069
  %3071 = vrot.lane.b32.xlu0 %v2404, 96
  %v3072 = vpop.permute.xlu0 %3071
  %3073 = vrot.lane.b32.xlu0 %v2405, 96
  %v3074 = vpop.permute.xlu0 %3073
  %3075 = vrot.lane.b32.xlu0 %v2406, 96
  %v3076 = vpop.permute.xlu0 %3075
  %3077 = vrot.lane.b32.xlu0 %v2407, 96
  %v3078 = vpop.permute.xlu0 %3077
  %3079 = vrot.lane.b32.xlu0 %v2408, 96
  %v3080 = vpop.permute.xlu0 %3079
  %3081 = vrot.lane.b32.xlu0 %v2409, 96
  %v3082 = vpop.permute.xlu0 %3081
  %3083 = vrot.lane.b32.xlu0 %v2410, 96
  %v3084 = vpop.permute.xlu0 %3083
  %3085 = vrot.lane.b32.xlu0 %v2411, 96
  %v3086 = vpop.permute.xlu0 %3085
  %3087 = vrot.lane.b32.xlu0 %v2412, 96
  %v3088 = vpop.permute.xlu0 %3087
  %3089 = vrot.lane.b32.xlu0 0, 96
  %v3090 = vpop.permute.xlu0 %3089
  %3091 = vrot.lane.b32.xlu0 %v2414, 96
  %v3092 = vpop.permute.xlu0 %3091
  %3093 = vrot.lane.b32.xlu0 %v2415, 96
  %v3094 = vpop.permute.xlu0 %3093
  %3095 = vrot.lane.b32.xlu0 %v2416, 96
  %v3096 = vpop.permute.xlu0 %3095
  %3097 = vrot.lane.b32.xlu0 %v2417, 96
  %v3098 = vpop.permute.xlu0 %3097
  %3099 = vrot.lane.b32.xlu0 %v2418, 96
  %v3100 = vpop.permute.xlu0 %3099
  %3101 = vrot.lane.b32.xlu0 %v2419, 96
  %v3102 = vpop.permute.xlu0 %3101
  %3103 = vrot.lane.b32.xlu0 %v2420, 96
  %v3104 = vpop.permute.xlu0 %3103
  %3105 = vrot.lane.b32.xlu0 %v2421, 96
  %v3106 = vpop.permute.xlu0 %3105
  %3107 = vrot.lane.b32.xlu0 %v2422, 96
  %v3108 = vpop.permute.xlu0 %3107
  %3109 = vrot.lane.b32.xlu0 %v2423, 96
  %v3110 = vpop.permute.xlu0 %3109
  %3111 = vrot.lane.b32.xlu0 %v2424, 96
  %v3112 = vpop.permute.xlu0 %3111
  %3113 = vrot.lane.b32.xlu0 %v2425, 96
  %v3114 = vpop.permute.xlu0 %3113
  %3115 = vrot.lane.b32.xlu0 %v2426, 96
  %v3116 = vpop.permute.xlu0 %3115
  %3117 = vrot.lane.b32.xlu0 %v2427, 96
  %v3118 = vpop.permute.xlu0 %3117
  %3119 = vrot.lane.b32.xlu0 %v2428, 96
  %v3120 = vpop.permute.xlu0 %3119
  %v3121 = vsel %vm1663, 0, %v1152
  %v3124 = vsel %vm1663, %v2365, %v2684
  %v3127 = vsel %vm1663, %v2366, %v2686
  %v3130 = vsel %vm1663, %v2367, %v2688
  %v3133 = vsel %vm1663, %v2368, %v2690
  %v3136 = vsel %vm1663, %v2369, %v2692
  %v3139 = vsel %vm1663, %v2370, %v2694
  %v3142 = vsel %vm1663, %v2371, %v2696
  %v3145 = vsel %vm1663, %v2372, %v2698
  %v3148 = vsel %vm1663, %v2373, %v2700
  %v3151 = vsel %vm1663, %v2374, %v2702
  %v3154 = vsel %vm1663, %v2375, %v2704
  %v3157 = vsel %vm1663, %v2376, %v2706
  %v3160 = vsel %vm1663, %v2377, %v2708
  %v3163 = vsel %vm1663, %v2378, %v2710
  %v3166 = vsel %vm1663, %v2379, %v2712
  %v3169 = vsel %vm1663, %v2381, %v2714
  %v3172 = vsel %vm1663, %v2382, %v2716
  %v3175 = vsel %vm1663, %v2383, %v2718
  %v3178 = vsel %vm1663, %v2384, %v2720
  %v3181 = vsel %vm1663, %v2385, %v2722
  %v3184 = vsel %vm1663, %v2386, %v2724
  %v3187 = vsel %vm1663, %v2387, %v2726
  %v3190 = vsel %vm1663, %v2388, %v2728
  %v3193 = vsel %vm1663, %v2389, %v2730
  %v3196 = vsel %vm1663, %v2390, %v2732
  %v3199 = vsel %vm1663, %v2391, %v2734
  %v3202 = vsel %vm1663, %v2392, %v2736
  %v3205 = vsel %vm1663, %v2393, %v2738
  %v3208 = vsel %vm1663, %v2394, %v2740
  %v3211 = vsel %vm1663, %v2395, %v2742
  %vm3212 = vcmask 523264
  %v3214 = vsel %vm3212, %v3121, %v2774
  %v3216 = vsel %vm3212, %v3124, %v2776
  %v3218 = vsel %vm3212, %v3127, %v2778
  %v3220 = vsel %vm3212, %v3130, %v2780
  %v3222 = vsel %vm3212, %v3133, %v2782
  %v3224 = vsel %vm3212, %v3136, %v2784
  %v3226 = vsel %vm3212, %v3139, %v2786
  %v3228 = vsel %vm3212, %v3142, %v2788
  %v3230 = vsel %vm3212, %v3145, %v2790
  %v3232 = vsel %vm3212, %v3148, %v2792
  %v3234 = vsel %vm3212, %v3151, %v2794
  %v3236 = vsel %vm3212, %v3154, %v2796
  %v3238 = vsel %vm3212, %v3157, %v2798
  %v3240 = vsel %vm3212, %v3160, %v2800
  %v3242 = vsel %vm3212, %v3163, %v2802
  %v3244 = vsel %vm3212, %v3166, %v2804
  %v3246 = vsel %vm3212, %v3169, %v2806
  %v3248 = vsel %vm3212, %v3172, %v2808
  %v3250 = vsel %vm3212, %v3175, %v2810
  %v3252 = vsel %vm3212, %v3178, %v2812
  %v3254 = vsel %vm3212, %v3181, %v2814
  %v3256 = vsel %vm3212, %v3184, %v2816
  %v3258 = vsel %vm3212, %v3187, %v2818
  %v3260 = vsel %vm3212, %v3190, %v2820
  %v3262 = vsel %vm3212, %v3193, %v2822
  %v3264 = vsel %vm3212, %v3196, %v2824
  %v3266 = vsel %vm3212, %v3199, %v2826
  %v3268 = vsel %vm3212, %v3202, %v2828
  %v3270 = vsel %vm3212, %v3205, %v2830
  %v3272 = vsel %vm3212, %v3208, %v2832
  %v3274 = vsel %vm3212, %v3211, %v2834
  %vm3275 = vcmask 785408
  %v3277 = vsel %vm3275, %v3214, %v2868
  %v3280 = vsel %vm3275, %v3216, %v2870
  %v3283 = vsel %vm3275, %v3218, %v2872
  %v3286 = vsel %vm3275, %v3220, %v2874
  %v3289 = vsel %vm3275, %v3222, %v2876
  %v3292 = vsel %vm3275, %v3224, %v2878
  %v3295 = vsel %vm3275, %v3226, %v2880
  %v3298 = vsel %vm3275, %v3228, %v2882
  %v3301 = vsel %vm3275, %v3230, %v2884
  %v3304 = vsel %vm3275, %v3232, %v2886
  %v3307 = vsel %vm3275, %v3234, %v2888
  %v3310 = vsel %vm3275, %v3236, %v2890
  %v3313 = vsel %vm3275, %v3238, %v2892
  %v3316 = vsel %vm3275, %v3240, %v2894
  %v3319 = vsel %vm3275, %v3242, %v2896
  %v3322 = vsel %vm3275, %v3244, %v2898
  %v3325 = vsel %vm3275, %v3214, %v2900
  %v3328 = vsel %vm3275, %v3246, %v2902
  %v3331 = vsel %vm3275, %v3248, %v2904
  %v3334 = vsel %vm3275, %v3250, %v2906
  %v3337 = vsel %vm3275, %v3252, %v2908
  %v3340 = vsel %vm3275, %v3254, %v2910
  %v3343 = vsel %vm3275, %v3256, %v2912
  %v3346 = vsel %vm3275, %v3258, %v2914
  %v3349 = vsel %vm3275, %v3260, %v2916
  %v3352 = vsel %vm3275, %v3262, %v2918
  %v3355 = vsel %vm3275, %v3264, %v2920
  %v3358 = vsel %vm3275, %v3266, %v2922
  %v3361 = vsel %vm3275, %v3268, %v2924
  %v3364 = vsel %vm3275, %v3270, %v2926
  %v3367 = vsel %vm3275, %v3272, %v2928
  %v3370 = vsel %vm3275, %v3274, %v2930
  %v3374 = vsel %vm1663, %v2397, %v2934
  %v3377 = vsel %vm1663, %v2398, %v2936
  %v3380 = vsel %vm1663, %v2399, %v2938
  %v3383 = vsel %vm1663, %v2400, %v2940
  %v3386 = vsel %vm1663, %v2401, %v2942
  %v3389 = vsel %vm1663, %v2402, %v2944
  %v3392 = vsel %vm1663, %v2403, %v2946
  %v3395 = vsel %vm1663, %v2404, %v2948
  %v3398 = vsel %vm1663, %v2405, %v2950
  %v3401 = vsel %vm1663, %v2406, %v2952
  %v3404 = vsel %vm1663, %v2407, %v2954
  %v3407 = vsel %vm1663, %v2408, %v2956
  %v3410 = vsel %vm1663, %v2409, %v2958
  %v3413 = vsel %vm1663, %v2410, %v2960
  %v3416 = vsel %vm1663, %v2411, %v2962
  %v3419 = vsel %vm1663, %v2412, %v2964
  %v3422 = vsel %vm1663, %v2413, %v2966
  %v3425 = vsel %vm1663, %v2414, %v2968
  %v3428 = vsel %vm1663, %v2415, %v2970
  %v3431 = vsel %vm1663, %v2416, %v2972
  %v3434 = vsel %vm1663, %v2417, %v2974
  %v3437 = vsel %vm1663, %v2418, %v2976
  %v3440 = vsel %vm1663, %v2419, %v2978
  %v3443 = vsel %vm1663, %v2420, %v2980
  %v3446 = vsel %vm1663, %v2421, %v2982
  %v3449 = vsel %vm1663, %v2422, %v2984
  %v3452 = vsel %vm1663, %v2423, %v2986
  %v3455 = vsel %vm1663, %v2424, %v2988
  %v3458 = vsel %vm1663, %v2425, %v2990
  %v3461 = vsel %vm1663, %v2426, %v2992
  %v3464 = vsel %vm1663, %v2427, %v2994
  %v3467 = vsel %vm1663, %v2428, %v2996
  %v3469 = vsel %vm3212, %v3374, %v2998
  %v3471 = vsel %vm3212, %v3377, %v3000
  %v3473 = vsel %vm3212, %v3380, %v3002
  %v3475 = vsel %vm3212, %v3383, %v3004
  %v3477 = vsel %vm3212, %v3386, %v3006
  %v3479 = vsel %vm3212, %v3389, %v3008
  %v3481 = vsel %vm3212, %v3392, %v3010
  %v3483 = vsel %vm3212, %v3395, %v3012
  %v3485 = vsel %vm3212, %v3398, %v3014
  %v3487 = vsel %vm3212, %v3401, %v3016
  %v3489 = vsel %vm3212, %v3404, %v3018
  %v3491 = vsel %vm3212, %v3407, %v3020
  %v3493 = vsel %vm3212, %v3410, %v3022
  %v3495 = vsel %vm3212, %v3413, %v3024
  %v3497 = vsel %vm3212, %v3416, %v3026
  %v3498 = vsel %vm3212, %v3419, %v2774
  %v3500 = vsel %vm3212, %v3422, %v3028
  %v3502 = vsel %vm3212, %v3425, %v3030
  %v3504 = vsel %vm3212, %v3428, %v3032
  %v3506 = vsel %vm3212, %v3431, %v3034
  %v3508 = vsel %vm3212, %v3434, %v3036
  %v3510 = vsel %vm3212, %v3437, %v3038
  %v3512 = vsel %vm3212, %v3440, %v3040
  %v3514 = vsel %vm3212, %v3443, %v3042
  %v3516 = vsel %vm3212, %v3446, %v3044
  %v3518 = vsel %vm3212, %v3449, %v3046
  %v3520 = vsel %vm3212, %v3452, %v3048
  %v3522 = vsel %vm3212, %v3455, %v3050
  %v3524 = vsel %vm3212, %v3458, %v3052
  %v3526 = vsel %vm3212, %v3461, %v3054
  %v3528 = vsel %vm3212, %v3464, %v3056
  %v3529 = vsel %vm3212, %v3467, %v2774
  %v3531 = vsel %vm3275, %v3469, %v3060
  %v3534 = vsel %vm3275, %v3471, %v3062
  %v3537 = vsel %vm3275, %v3473, %v3064
  %v3540 = vsel %vm3275, %v3475, %v3066
  %v3543 = vsel %vm3275, %v3477, %v3068
  %v3546 = vsel %vm3275, %v3479, %v3070
  %v3549 = vsel %vm3275, %v3481, %v3072
  %v3552 = vsel %vm3275, %v3483, %v3074
  %v3555 = vsel %vm3275, %v3485, %v3076
  %v3558 = vsel %vm3275, %v3487, %v3078
  %v3561 = vsel %vm3275, %v3489, %v3080
  %v3564 = vsel %vm3275, %v3491, %v3082
  %v3567 = vsel %vm3275, %v3493, %v3084
  %v3570 = vsel %vm3275, %v3495, %v3086
  %v3573 = vsel %vm3275, %v3497, %v3088
  %v3576 = vsel %vm3275, %v3498, %v3090
  %v3579 = vsel %vm3275, %v3500, %v3092
  %v3582 = vsel %vm3275, %v3502, %v3094
  %v3585 = vsel %vm3275, %v3504, %v3096
  %v3588 = vsel %vm3275, %v3506, %v3098
  %v3591 = vsel %vm3275, %v3508, %v3100
  %v3594 = vsel %vm3275, %v3510, %v3102
  %v3597 = vsel %vm3275, %v3512, %v3104
  %v3600 = vsel %vm3275, %v3514, %v3106
  %v3603 = vsel %vm3275, %v3516, %v3108
  %v3606 = vsel %vm3275, %v3518, %v3110
  %v3609 = vsel %vm3275, %v3520, %v3112
  %v3612 = vsel %vm3275, %v3522, %v3114
  %v3615 = vsel %vm3275, %v3524, %v3116
  %v3618 = vsel %vm3275, %v3526, %v3118
  %v3621 = vsel %vm3275, %v3528, %v3120
  %v3623 = vsel %vm3275, %v3529, %v3090
  %v3625 = vld [vmem:[%s2 + $0x14] sm:$0xf]
  %v3626 = vld [vmem:[%s2 + $0x18] sm:$0xf]
  %v3627 = vld [vmem:[%s2 + $0x1c] sm:$0xf]
  %v3628 = vld [vmem:[%s2 + $0x20] sm:$0xf]
  %v3629 = vld [vmem:[%s2 + $0x24] sm:$0xf]
  %v3630 = vld [vmem:[%s2 + $0x28] sm:$0xf]
  %v3631 = vld [vmem:[%s2 + $0x2c] sm:$0xf]
  %v3632 = vld [vmem:[%s2 + $0x30] sm:$0xf]
  %v3633 = vld [vmem:[%s2 + $0x34] sm:$0xf]
  %v3634 = vld [vmem:[%s2 + $0x38] sm:$0xf]
  %v3635 = vld [vmem:[%s2 + $0x3c] sm:$0xf]
  %v3636 = vld [vmem:[%s2 + $0x40] sm:$0xf]
  %v3637 = vld [vmem:[%s2 + $0x44] sm:$0xf]
  %v3638 = vld [vmem:[%s2 + $0x48] sm:$0xf]
  %v3639 = vld [vmem:[%s2 + $0x4c] sm:$0xf]
  %v3640 = vld [vmem:[%s2 + $0x50] sm:$0xf]
  %v3641 = vld [vmem:[%s2 + $0x54] sm:$0xf]
  %v3642 = vld [vmem:[%s2 + $0x58] sm:$0xf]
  %v3643 = vld [vmem:[%s2 + $0x5c] sm:$0xf]
  %v3644 = vld [vmem:[%s2 + $0x60] sm:$0xf]
  %v3645 = vld [vmem:[%s2 + $0x64] sm:$0xf]
  %v3646 = vld [vmem:[%s2 + $0x68] sm:$0xf]
  %v3647 = vld [vmem:[%s2 + $0x6c] sm:$0xf]
  %v3648 = vld [vmem:[%s2 + $0x70] sm:$0xf]
  %v3649 = vld [vmem:[%s2 + $0x74] sm:$0xf]
  %v3650 = vld [vmem:[%s2 + $0x78] sm:$0xf]
  %v3651 = vld [vmem:[%s2 + $0x7c] sm:$0xf]
  %v3652 = vld [vmem:[%s2 + $0x80] sm:$0xf]
  %v3653 = vld [vmem:[%s2 + $0x84] sm:$0xf]
  %v3654 = vld [vmem:[%s2 + $0x88] sm:$0xf]
  %v3655 = vld [vmem:[%s2 + $0x8c] sm:$0xf]
  %v3656 = vld [vmem:[%s2 + $0x90] sm:$0xf]
  %v3657 = vld [vmem:[%s2 + $0x94] sm:$0xf]
  %v3658 = vld [vmem:[%s2 + $0x98] sm:$0xf]
  %v3659 = vld [vmem:[%s2 + $0x9c] sm:$0xf]
  %v3660 = vld [vmem:[%s2 + $0xa0] sm:$0xf]
  %v3661 = vlaneseq
  %v3662 = vshrl.u32 %v3661, 7
  %v3663 = vsub.s32 1, %v3662
  %v3664 = vrot.slane %v18, %v3663
  %v3701 = vunpack.c.l.b16 %v3625
  %v3702 = vunpack.c.l.b16 %v3626
  %v3703 = vunpack.c.l.b16 %v3627
  %v3704 = vunpack.c.l.b16 %v3628
  %v3705 = vunpack.c.l.b16 %v3629
  %v3706 = vunpack.c.l.b16 %v3630
  %v3707 = vunpack.c.l.b16 %v3631
  %v3708 = vunpack.c.l.b16 %v3632
  %v3709 = vunpack.c.l.b16 %v3633
  %v3710 = vunpack.c.l.b16 %v3634
  %v3711 = vunpack.c.l.b16 %v3635
  %v3712 = vunpack.c.l.b16 %v3636
  %v3713 = vunpack.c.l.b16 %v3637
  %v3714 = vunpack.c.l.b16 %v3638
  %v3715 = vunpack.c.l.b16 %v3639
  %v3716 = vunpack.c.l.b16 %v3640
  %v3717 = vunpack.c.l.b16 %v3641
  %v3718 = vunpack.c.l.b16 %v3642
  %v3719 = vunpack.c.l.b16 %v3643
  %v3720 = vunpack.c.l.b16 %v3644
  %v3721 = vunpack.c.l.b16 %v3645
  %v3722 = vunpack.c.l.b16 %v3646
  %v3723 = vunpack.c.l.b16 %v3647
  %v3724 = vunpack.c.l.b16 %v3648
  %v3725 = vunpack.c.l.b16 %v3649
  %v3726 = vunpack.c.l.b16 %v3650
  %v3727 = vunpack.c.l.b16 %v3651
  %v3728 = vunpack.c.l.b16 %v3652
  %v3729 = vunpack.c.l.b16 %v3653
  %v3730 = vunpack.c.l.b16 %v3654
  %v3731 = vunpack.c.l.b16 %v3655
  %v3732 = vunpack.c.l.b16 %v3656
  %v3733 = vunpack.c.l.b16 %v3657
  %v3734 = vunpack.c.l.b16 %v3658
  %v3735 = vunpack.c.l.b16 %v3659
  %v3736 = vunpack.c.l.b16 %v3660
  %v3737 = vpack.c.b16 %v3702, %v3701
  %v3738 = vpack.c.b16 %v3704, %v3703
  %v3739 = vpack.c.b16 %v3706, %v3705
  %v3740 = vpack.c.b16 %v3708, %v3707
  %v3741 = vpack.c.b16 %v3710, %v3709
  %v3742 = vpack.c.b16 %v3712, %v3711
  %v3743 = vpack.c.b16 %v3714, %v3713
  %v3744 = vpack.c.b16 %v3716, %v3715
  %v3745 = vpack.c.b16 %v3718, %v3717
  %v3746 = vpack.c.b16 %v3720, %v3719
  %v3747 = vpack.c.b16 %v3722, %v3721
  %v3748 = vpack.c.b16 %v3724, %v3723
  %v3749 = vpack.c.b16 %v3726, %v3725
  %v3750 = vpack.c.b16 %v3728, %v3727
  %v3751 = vpack.c.b16 %v3730, %v3729
  %v3752 = vpack.c.b16 %v3732, %v3731
  %v3753 = vpack.c.b16 %v3734, %v3733
  %v3754 = vpack.c.b16 %v3736, %v3735
  %v3774 = vsel %vm1663, %v2622, 0
  %v3777 = vsel %vm1663, %v2623, 0
  %v3780 = vsel %vm1663, %v2624, 0
  %v3783 = vsel %vm1663, %v2625, 0
  %v3786 = vsel %vm1663, %v2626, 0
  %v3789 = vsel %vm1663, %v2627, 0
  %v3792 = vsel %vm1663, %v2628, 0
  %v3795 = vsel %vm1663, %v2629, 0
  %v3798 = vsel %vm1663, %v2630, 0
  %v3801 = vsel %vm1663, %v2631, 0
  %v3804 = vsel %vm1663, %v2632, 0
  %v3807 = vsel %vm1663, %v2633, 0
  %v3810 = vsel %vm1663, %v2634, 0
  %v3813 = vsel %vm1663, %v2635, 0
  %v3816 = vsel %vm1663, %v2636, 0
  %v3818 = vsel %vm1663, 0, 0
  %v3821 = vsel %vm1663, %v2638, 0
  %v3824 = vsel %vm1663, %v2639, 0
  %v3827 = vsel %vm1663, %v2640, 0
  %v3830 = vsel %vm1663, %v2641, 0
  %v3833 = vsel %vm1663, %v2642, 0
  %v3836 = vsel %vm1663, %v2643, 0
  %v3839 = vsel %vm1663, %v2644, 0
  %v3842 = vsel %vm1663, %v2645, 0
  %v3845 = vsel %vm1663, %v2646, 0
  %v3848 = vsel %vm1663, %v2647, 0
  %v3851 = vsel %vm1663, %v2648, 0
  %v3854 = vsel %vm1663, %v2649, 0
  %v3857 = vsel %vm1663, %v2650, 0
  %v3860 = vsel %vm1663, %v2651, 0
  %v3863 = vsel %vm1663, %v2652, 0
  %3865 = vmatprep.subr.bf16.mxu0 0
  %3866 = vmatpush1.bf16.msra.mxu0 %v3737
  %3867 = vmatprep.subr.bf16.mxu0 0
  %3868 = vmatpush1.bf16.msra.mxu0 %v3738
  %3869 = vmatprep.subr.bf16.mxu0 0
  %3870 = vmatpush1.bf16.msra.mxu0 %v3739
  %3871 = vmatprep.subr.bf16.mxu0 0
  %3872 = vmatpush1.bf16.msra.mxu0 %v3740
  %3873 = vmatprep.subr.bf16.mxu0 0
  %3874 = vmatpush1.bf16.msra.mxu0 %v3741
  %3875 = vmatprep.subr.bf16.mxu0 0
  %3876 = vmatpush1.bf16.msra.mxu0 %v3742
  %3877 = vmatprep.subr.bf16.mxu0 0
  %3878 = vmatpush1.bf16.msra.mxu0 %v3743
  %3879 = vmatprep.subr.bf16.mxu0 0
  %3880 = vmatpush1.bf16.msra.mxu0 %v3744
  %3881 = vmatprep.subr.bf16.mxu0 0
  %3882 = vmatpush1.bf16.msra.mxu0 %v3745
  %3883 = vmatprep.subr.bf16.mxu0 0
  %3884 = vmatpush1.bf16.msra.mxu0 %v3746
  %3885 = vmatprep.subr.bf16.mxu0 0
  %3886 = vmatpush1.bf16.msra.mxu0 %v3747
  %3887 = vmatprep.subr.bf16.mxu0 0
  %3888 = vmatpush1.bf16.msra.mxu0 %v3748
  %3889 = vmatprep.subr.bf16.mxu0 0
  %3890 = vmatpush1.bf16.msra.mxu0 %v3749
  %3891 = vmatprep.subr.bf16.mxu0 0
  %3892 = vmatpush1.bf16.msra.mxu0 %v3750
  %3893 = vmatprep.subr.bf16.mxu0 0
  %3894 = vmatpush1.bf16.msra.mxu0 %v3751
  %3895 = vmatprep.subr.bf16.mxu0 0
  %3896 = vmatpush1.bf16.msra.mxu0 %v3752
  %3897 = vmatprep.mubr.bf16.mxu0 %v3531
  %3898 = vmatmul.mubr.bf16.gmra.mrb[0].mxu0 %v3277
  %v3899 = vpop.f32.mrb[0].mxu0
  %v3900 = vadd.f32 %v3664, %v3899
  %v3901 = vpop.f32.mrb[0].mxu0
  %v3902 = vpop.f32.mrb[0].mxu0
  %v3903 = vadd.f32 %v3664, %v3902
  %v3904 = vpop.f32.mrb[0].mxu0
  %3905 = vmatprep.mubr.bf16.mxu0 %v3534
  %3906 = vmatmul.mubr.bf16.gmra.mrb[0].mxu0 %v3280
  %v3907 = vpop.f32.mrb[0].mxu0
  %v3908 = vadd.f32 %v3664, %v3907
  %v3909 = vpop.f32.mrb[0].mxu0
  %v3910 = vpop.f32.mrb[0].mxu0
  %v3911 = vadd.f32 %v3664, %v3910
  %v3912 = vpop.f32.mrb[0].mxu0
  %3913 = vmatprep.mubr.bf16.mxu0 %v3537
  %3914 = vmatmul.mubr.bf16.gmra.mrb[0].mxu0 %v3283
  %v3915 = vpop.f32.mrb[0].mxu0
  %v3916 = vadd.f32 %v3664, %v3915
  %v3917 = vpop.f32.mrb[0].mxu0
  %v3918 = vpop.f32.mrb[0].mxu0
  %v3919 = vadd.f32 %v3664, %v3918
  %v3920 = vpop.f32.mrb[0].mxu0
  %3921 = vmatprep.mubr.bf16.mxu0 %v3540
  %3922 = vmatmul.mubr.bf16.gmra.mrb[0].mxu0 %v3286
  %v3923 = vpop.f32.mrb[0].mxu0
  %v3924 = vadd.f32 %v3664, %v3923
  %v3925 = vpop.f32.mrb[0].mxu0
  %v3926 = vpop.f32.mrb[0].mxu0
  %v3927 = vadd.f32 %v3664, %v3926
  %v3928 = vpop.f32.mrb[0].mxu0
  %3929 = vmatprep.mubr.bf16.mxu0 %v3543
  %3930 = vmatmul.mubr.bf16.gmra.mrb[0].mxu0 %v3289
  %v3931 = vpop.f32.mrb[0].mxu0
  %v3932 = vadd.f32 %v3664, %v3931
  %v3933 = vpop.f32.mrb[0].mxu0
  %v3934 = vpop.f32.mrb[0].mxu0
  %v3935 = vadd.f32 %v3664, %v3934
  %v3936 = vpop.f32.mrb[0].mxu0
  %3937 = vmatprep.mubr.bf16.mxu0 %v3546
  %3938 = vmatmul.mubr.bf16.gmra.mrb[0].mxu0 %v3292
  %v3939 = vpop.f32.mrb[0].mxu0
  %v3940 = vadd.f32 %v3664, %v3939
  %v3941 = vpop.f32.mrb[0].mxu0
  %v3942 = vpop.f32.mrb[0].mxu0
  %v3943 = vadd.f32 %v3664, %v3942
  %v3944 = vpop.f32.mrb[0].mxu0
  %3945 = vmatprep.mubr.bf16.mxu0 %v3549
  %3946 = vmatmul.mubr.bf16.gmra.mrb[0].mxu0 %v3295
  %v3947 = vpop.f32.mrb[0].mxu0
  %v3948 = vadd.f32 %v3664, %v3947
  %v3949 = vpop.f32.mrb[0].mxu0
  %v3950 = vpop.f32.mrb[0].mxu0
  %v3951 = vadd.f32 %v3664, %v3950
  %v3952 = vpop.f32.mrb[0].mxu0
  %3953 = vmatprep.mubr.bf16.mxu0 %v3552
  %3954 = vmatmul.mubr.bf16.gmra.mrb[0].mxu0 %v3298
  %v3955 = vpop.f32.mrb[0].mxu0
  %v3956 = vadd.f32 %v3664, %v3955
  %v3957 = vpop.f32.mrb[0].mxu0
  %v3958 = vpop.f32.mrb[0].mxu0
  %v3959 = vadd.f32 %v3664, %v3958
  %v3960 = vpop.f32.mrb[0].mxu0
  %3961 = vmatprep.mubr.bf16.mxu0 %v3555
  %3962 = vmatmul.mubr.bf16.gmra.mrb[0].mxu0 %v3301
  %v3963 = vpop.f32.mrb[0].mxu0
  %v3964 = vadd.f32 %v3664, %v3963
  %v3965 = vpop.f32.mrb[0].mxu0
  %v3966 = vpop.f32.mrb[0].mxu0
  %v3967 = vadd.f32 %v3664, %v3966
  %v3968 = vpop.f32.mrb[0].mxu0
  %3969 = vmatprep.mubr.bf16.mxu0 %v3558
  %3970 = vmatmul.mubr.bf16.gmra.mrb[0].mxu0 %v3304
  %v3971 = vpop.f32.mrb[0].mxu0
  %v3972 = vadd.f32 %v3664, %v3971
  %v3973 = vpop.f32.mrb[0].mxu0
  %v3974 = vpop.f32.mrb[0].mxu0
  %v3975 = vadd.f32 %v3664, %v3974
  %v3976 = vpop.f32.mrb[0].mxu0
  %3977 = vmatprep.mubr.bf16.mxu0 %v3561
  %3978 = vmatmul.mubr.bf16.gmra.mrb[0].mxu0 %v3307
  %v3979 = vpop.f32.mrb[0].mxu0
  %v3980 = vadd.f32 %v3664, %v3979
  %v3981 = vpop.f32.mrb[0].mxu0
  %v3982 = vpop.f32.mrb[0].mxu0
  %v3983 = vadd.f32 %v3664, %v3982
  %v3984 = vpop.f32.mrb[0].mxu0
  %3985 = vmatprep.mubr.bf16.mxu0 %v3564
  %3986 = vmatmul.mubr.bf16.gmra.mrb[0].mxu0 %v3310
  %v3987 = vpop.f32.mrb[0].mxu0
  %v3988 = vadd.f32 %v3664, %v3987
  %v3989 = vpop.f32.mrb[0].mxu0
  %v3990 = vpop.f32.mrb[0].mxu0
  %v3991 = vadd.f32 %v3664, %v3990
  %v3992 = vpop.f32.mrb[0].mxu0
  %3993 = vmatprep.mubr.bf16.mxu0 %v3567
  %3994 = vmatmul.mubr.bf16.gmra.mrb[0].mxu0 %v3313
  %v3995 = vpop.f32.mrb[0].mxu0
  %v3996 = vadd.f32 %v3664, %v3995
  %v3997 = vpop.f32.mrb[0].mxu0
  %v3998 = vpop.f32.mrb[0].mxu0
  %v3999 = vadd.f32 %v3664, %v3998
  %v4000 = vpop.f32.mrb[0].mxu0
  %4001 = vmatprep.mubr.bf16.mxu0 %v3570
  %4002 = vmatmul.mubr.bf16.gmra.mrb[0].mxu0 %v3316
  %v4003 = vpop.f32.mrb[0].mxu0
  %v4004 = vadd.f32 %v3664, %v4003
  %v4005 = vpop.f32.mrb[0].mxu0
  %v4006 = vpop.f32.mrb[0].mxu0
  %v4007 = vadd.f32 %v3664, %v4006
  %v4008 = vpop.f32.mrb[0].mxu0
  %4009 = vmatprep.mubr.bf16.mxu0 %v3573
  %4010 = vmatmul.mubr.bf16.gmra.mrb[0].mxu0 %v3319
  %v4011 = vpop.f32.mrb[0].mxu0
  %v4012 = vadd.f32 %v3664, %v4011
  %v4013 = vpop.f32.mrb[0].mxu0
  %v4014 = vpop.f32.mrb[0].mxu0
  %v4015 = vadd.f32 %v3664, %v4014
  %v4016 = vpop.f32.mrb[0].mxu0
  %4017 = vmatprep.mubr.bf16.mxu0 %v3576
  %4018 = vmatmul.mubr.bf16.gmra.mrb[0].mxu0 %v3322
  %v4019 = vpop.f32.mrb[0].mxu0
  %v4020 = vadd.f32 %v3664, %v4019
  %v4021 = vpop.f32.mrb[0].mxu0
  %v4022 = vpop.f32.mrb[0].mxu0
  %v4023 = vadd.f32 %v3664, %v4022
  %v4024 = vpop.f32.mrb[0].mxu0
  %4025 = vmatprep.mubr.bf16.mxu0 %v3579
  %4026 = vmatmul.mubr.bf16.gmra.mrb[0].mxu0 %v3325
  %v4027 = vpop.f32.mrb[0].mxu0
  %v4028 = vadd.f32 %v3664, %v4027
  %v4029 = vpop.f32.mrb[0].mxu0
  %v4030 = vpop.f32.mrb[0].mxu0
  %v4031 = vadd.f32 %v3664, %v4030
  %v4032 = vpop.f32.mrb[0].mxu0
  %4033 = vmatprep.mubr.bf16.mxu0 %v3582
  %4034 = vmatmul.mubr.bf16.gmra.mrb[0].mxu0 %v3328
  %v4035 = vpop.f32.mrb[0].mxu0
  %v4036 = vadd.f32 %v3664, %v4035
  %v4037 = vpop.f32.mrb[0].mxu0
  %v4038 = vpop.f32.mrb[0].mxu0
  %v4039 = vadd.f32 %v3664, %v4038
  %v4040 = vpop.f32.mrb[0].mxu0
  %4041 = vmatprep.mubr.bf16.mxu0 %v3585
  %4042 = vmatmul.mubr.bf16.gmra.mrb[0].mxu0 %v3331
  %v4043 = vpop.f32.mrb[0].mxu0
  %v4044 = vadd.f32 %v3664, %v4043
  %v4045 = vpop.f32.mrb[0].mxu0
  %v4046 = vpop.f32.mrb[0].mxu0
  %v4047 = vadd.f32 %v3664, %v4046
  %v4048 = vpop.f32.mrb[0].mxu0
  %4049 = vmatprep.mubr.bf16.mxu0 %v3588
  %4050 = vmatmul.mubr.bf16.gmra.mrb[0].mxu0 %v3334
  %v4051 = vpop.f32.mrb[0].mxu0
  %v4052 = vadd.f32 %v3664, %v4051
  %v4053 = vpop.f32.mrb[0].mxu0
  %v4054 = vpop.f32.mrb[0].mxu0
  %v4055 = vadd.f32 %v3664, %v4054
  %v4056 = vpop.f32.mrb[0].mxu0
  %4057 = vmatprep.mubr.bf16.mxu0 %v3591
  %4058 = vmatmul.mubr.bf16.gmra.mrb[0].mxu0 %v3337
  %v4059 = vpop.f32.mrb[0].mxu0
  %v4060 = vadd.f32 %v3664, %v4059
  %v4061 = vpop.f32.mrb[0].mxu0
  %v4062 = vpop.f32.mrb[0].mxu0
  %v4063 = vadd.f32 %v3664, %v4062
  %v4064 = vpop.f32.mrb[0].mxu0
  %4065 = vmatprep.mubr.bf16.mxu0 %v3594
  %4066 = vmatmul.mubr.bf16.gmra.mrb[0].mxu0 %v3340
  %v4067 = vpop.f32.mrb[0].mxu0
  %v4068 = vadd.f32 %v3664, %v4067
  %v4069 = vpop.f32.mrb[0].mxu0
  %v4070 = vpop.f32.mrb[0].mxu0
  %v4071 = vadd.f32 %v3664, %v4070
  %v4072 = vpop.f32.mrb[0].mxu0
  %4073 = vmatprep.mubr.bf16.mxu0 %v3597
  %4074 = vmatmul.mubr.bf16.gmra.mrb[0].mxu0 %v3343
  %v4075 = vpop.f32.mrb[0].mxu0
  %v4076 = vadd.f32 %v3664, %v4075
  %v4077 = vpop.f32.mrb[0].mxu0
  %v4078 = vpop.f32.mrb[0].mxu0
  %v4079 = vadd.f32 %v3664, %v4078
  %v4080 = vpop.f32.mrb[0].mxu0
  %4081 = vmatprep.mubr.bf16.mxu0 %v3600
  %4082 = vmatmul.mubr.bf16.gmra.mrb[0].mxu0 %v3346
  %v4083 = vpop.f32.mrb[0].mxu0
  %v4084 = vadd.f32 %v3664, %v4083
  %v4085 = vpop.f32.mrb[0].mxu0
  %v4086 = vpop.f32.mrb[0].mxu0
  %v4087 = vadd.f32 %v3664, %v4086
  %v4088 = vpop.f32.mrb[0].mxu0
  %4089 = vmatprep.mubr.bf16.mxu0 %v3603
  %4090 = vmatmul.mubr.bf16.gmra.mrb[0].mxu0 %v3349
  %v4091 = vpop.f32.mrb[0].mxu0
  %v4092 = vadd.f32 %v3664, %v4091
  %v4093 = vpop.f32.mrb[0].mxu0
  %v4094 = vpop.f32.mrb[0].mxu0
  %v4095 = vadd.f32 %v3664, %v4094
  %v4096 = vpop.f32.mrb[0].mxu0
  %4097 = vmatprep.mubr.bf16.mxu0 %v3606
  %4098 = vmatmul.mubr.bf16.gmra.mrb[0].mxu0 %v3352
  %v4099 = vpop.f32.mrb[0].mxu0
  %v4100 = vadd.f32 %v3664, %v4099
  %v4101 = vpop.f32.mrb[0].mxu0
  %v4102 = vpop.f32.mrb[0].mxu0
  %v4103 = vadd.f32 %v3664, %v4102
  %v4104 = vpop.f32.mrb[0].mxu0
  %4105 = vmatprep.mubr.bf16.mxu0 %v3609
  %4106 = vmatmul.mubr.bf16.gmra.mrb[0].mxu0 %v3355
  %v4107 = vpop.f32.mrb[0].mxu0
  %v4108 = vadd.f32 %v3664, %v4107
  %v4109 = vpop.f32.mrb[0].mxu0
  %v4110 = vpop.f32.mrb[0].mxu0
  %v4111 = vadd.f32 %v3664, %v4110
  %v4112 = vpop.f32.mrb[0].mxu0
  %4113 = vmatprep.mubr.bf16.mxu0 %v3612
  %4114 = vmatmul.mubr.bf16.gmra.mrb[0].mxu0 %v3358
  %v4115 = vpop.f32.mrb[0].mxu0
  %v4116 = vadd.f32 %v3664, %v4115
  %v4117 = vpop.f32.mrb[0].mxu0
  %v4118 = vpop.f32.mrb[0].mxu0
  %v4119 = vadd.f32 %v3664, %v4118
  %v4120 = vpop.f32.mrb[0].mxu0
  %4121 = vmatprep.mubr.bf16.mxu0 %v3615
  %4122 = vmatmul.mubr.bf16.gmra.mrb[0].mxu0 %v3361
  %v4123 = vpop.f32.mrb[0].mxu0
  %v4124 = vadd.f32 %v3664, %v4123
  %v4125 = vpop.f32.mrb[0].mxu0
  %v4126 = vpop.f32.mrb[0].mxu0
  %v4127 = vadd.f32 %v3664, %v4126
  %v4128 = vpop.f32.mrb[0].mxu0
  %4129 = vmatprep.mubr.bf16.mxu0 %v3618
  %4130 = vmatmul.mubr.bf16.gmra.mrb[0].mxu0 %v3364
  %v4131 = vpop.f32.mrb[0].mxu0
  %v4132 = vadd.f32 %v3664, %v4131
  %v4133 = vpop.f32.mrb[0].mxu0
  %v4134 = vpop.f32.mrb[0].mxu0
  %v4135 = vadd.f32 %v3664, %v4134
  %v4136 = vpop.f32.mrb[0].mxu0
  %4137 = vmatprep.mubr.bf16.mxu0 %v3621
  %4138 = vmatmul.mubr.bf16.gmra.mrb[0].mxu0 %v3367
  %v4139 = vpop.f32.mrb[0].mxu0
  %v4140 = vadd.f32 %v3664, %v4139
  %v4141 = vpop.f32.mrb[0].mxu0
  %v4142 = vpop.f32.mrb[0].mxu0
  %v4143 = vadd.f32 %v3664, %v4142
  %v4144 = vpop.f32.mrb[0].mxu0
  %4145 = vmatprep.mubr.bf16.mxu0 %v3623
  %4146 = vmatmul.mubr.bf16.gmra.mrb[0].mxu0 %v3370
  %v4147 = vpop.f32.mrb[0].mxu0
  %v4148 = vadd.f32 %v3664, %v4147
  %v4149 = vpop.f32.mrb[0].mxu0
  %v4150 = vpop.f32.mrb[0].mxu0
  %v4151 = vadd.f32 %v3664, %v4150
  %v4152 = vpop.f32.mrb[0].mxu0
  %4153 = vdwg.mxu0
  %4154 = vmatprep.subr.bf16.mxu0 0
  %4155 = vmatpush1.bf16.msra.mxu0 %v3753
  %4156 = vmatprep.subr.bf16.mxu0 0
  %4157 = vmatpush1.bf16.msra.mxu0 %v3754
  %4158 = vmatprep.subr.bf16.mxu0 0
  %4159 = vmatpush1.bf16.msra.mxu0 0
  %4160 = vmatprep.subr.bf16.mxu0 0
  %4161 = vmatpush1.bf16.msra.mxu0 0
  %4162 = vmatprep.subr.bf16.mxu0 0
  %4163 = vmatpush1.bf16.msra.mxu0 0
  %4164 = vmatprep.subr.bf16.mxu0 0
  %4165 = vmatpush1.bf16.msra.mxu0 0
  %4166 = vmatprep.subr.bf16.mxu0 0
  %4167 = vmatpush1.bf16.msra.mxu0 0
  %4168 = vmatprep.subr.bf16.mxu0 0
  %4169 = vmatpush1.bf16.msra.mxu0 0
  %4170 = vmatprep.subr.bf16.mxu0 0
  %4171 = vmatpush1.bf16.msra.mxu0 0
  %4172 = vmatprep.subr.bf16.mxu0 0
  %4173 = vmatpush1.bf16.msra.mxu0 0
  %4174 = vmatprep.subr.bf16.mxu0 0
  %4175 = vmatpush1.bf16.msra.mxu0 0
  %4176 = vmatprep.subr.bf16.mxu0 0
  %4177 = vmatpush1.bf16.msra.mxu0 0
  %4178 = vmatprep.subr.bf16.mxu0 0
  %4179 = vmatpush1.bf16.msra.mxu0 0
  %4180 = vmatprep.subr.bf16.mxu0 0
  %4181 = vmatpush1.bf16.msra.mxu0 0
  %4182 = vmatprep.subr.bf16.mxu0 0
  %4183 = vmatpush1.bf16.msra.mxu0 0
  %4184 = vmatprep.subr.bf16.mxu0 0
  %4185 = vmatpush1.bf16.msra.mxu0 0
  %4186 = vmatprep.mubr.bf16.mxu0 0
  %4187 = vmatmul.mubr.bf16.gmra.mrb[0].mxu0 %v3774
  %v4188 = vpop.f32.mrb[0].mxu0
  %v4189 = vadd.f32 %v3900, %v4188
  %v4190 = vpop.f32.mrb[0].mxu0
  %v4191 = vpop.f32.mrb[0].mxu0
  %v4192 = vadd.f32 %v3903, %v4191
  %v4193 = vpop.f32.mrb[0].mxu0
  %4194 = vmatprep.mubr.bf16.mxu0 0
  %4195 = vmatmul.mubr.bf16.gmra.mrb[0].mxu0 %v3777
  %v4196 = vpop.f32.mrb[0].mxu0
  %v4197 = vadd.f32 %v3908, %v4196
  %v4198 = vpop.f32.mrb[0].mxu0
  %v4199 = vpop.f32.mrb[0].mxu0
  %v4200 = vadd.f32 %v3911, %v4199
  %v4201 = vpop.f32.mrb[0].mxu0
  %4202 = vmatprep.mubr.bf16.mxu0 0
  %4203 = vmatmul.mubr.bf16.gmra.mrb[0].mxu0 %v3780
  %v4204 = vpop.f32.mrb[0].mxu0
  %v4205 = vadd.f32 %v3916, %v4204
  %v4206 = vpop.f32.mrb[0].mxu0
  %v4207 = vpop.f32.mrb[0].mxu0
  %v4208 = vadd.f32 %v3919, %v4207
  %v4209 = vpop.f32.mrb[0].mxu0
  %4210 = vmatprep.mubr.bf16.mxu0 0
  %4211 = vmatmul.mubr.bf16.gmra.mrb[0].mxu0 %v3783
  %v4212 = vpop.f32.mrb[0].mxu0
  %v4213 = vadd.f32 %v3924, %v4212
  %v4214 = vpop.f32.mrb[0].mxu0
  %v4215 = vpop.f32.mrb[0].mxu0
  %v4216 = vadd.f32 %v3927, %v4215
  %v4217 = vpop.f32.mrb[0].mxu0
  %4218 = vmatprep.mubr.bf16.mxu0 0
  %4219 = vmatmul.mubr.bf16.gmra.mrb[0].mxu0 %v3786
  %v4220 = vpop.f32.mrb[0].mxu0
  %v4221 = vadd.f32 %v3932, %v4220
  %v4222 = vpop.f32.mrb[0].mxu0
  %v4223 = vpop.f32.mrb[0].mxu0
  %v4224 = vadd.f32 %v3935, %v4223
  %v4225 = vpop.f32.mrb[0].mxu0
  %4226 = vmatprep.mubr.bf16.mxu0 0
  %4227 = vmatmul.mubr.bf16.gmra.mrb[0].mxu0 %v3789
  %v4228 = vpop.f32.mrb[0].mxu0
  %v4229 = vadd.f32 %v3940, %v4228
  %v4230 = vpop.f32.mrb[0].mxu0
  %v4231 = vpop.f32.mrb[0].mxu0
  %v4232 = vadd.f32 %v3943, %v4231
  %v4233 = vpop.f32.mrb[0].mxu0
  %4234 = vmatprep.mubr.bf16.mxu0 0
  %4235 = vmatmul.mubr.bf16.gmra.mrb[0].mxu0 %v3792
  %v4236 = vpop.f32.mrb[0].mxu0
  %v4237 = vadd.f32 %v3948, %v4236
  %v4238 = vpop.f32.mrb[0].mxu0
  %v4239 = vpop.f32.mrb[0].mxu0
  %v4240 = vadd.f32 %v3951, %v4239
  %v4241 = vpop.f32.mrb[0].mxu0
  %4242 = vmatprep.mubr.bf16.mxu0 0
  %4243 = vmatmul.mubr.bf16.gmra.mrb[0].mxu0 %v3795
  %v4244 = vpop.f32.mrb[0].mxu0
  %v4245 = vadd.f32 %v3956, %v4244
  %v4246 = vpop.f32.mrb[0].mxu0
  %v4247 = vpop.f32.mrb[0].mxu0
  %v4248 = vadd.f32 %v3959, %v4247
  %v4249 = vpop.f32.mrb[0].mxu0
  %4250 = vmatprep.mubr.bf16.mxu0 0
  %4251 = vmatmul.mubr.bf16.gmra.mrb[0].mxu0 %v3798
  %v4252 = vpop.f32.mrb[0].mxu0
  %v4253 = vadd.f32 %v3964, %v4252
  %v4254 = vpop.f32.mrb[0].mxu0
  %v4255 = vpop.f32.mrb[0].mxu0
  %v4256 = vadd.f32 %v3967, %v4255
  %v4257 = vpop.f32.mrb[0].mxu0
  %4258 = vmatprep.mubr.bf16.mxu0 0
  %4259 = vmatmul.mubr.bf16.gmra.mrb[0].mxu0 %v3801
  %v4260 = vpop.f32.mrb[0].mxu0
  %v4261 = vadd.f32 %v3972, %v4260
  %v4262 = vpop.f32.mrb[0].mxu0
  %v4263 = vpop.f32.mrb[0].mxu0
  %v4264 = vadd.f32 %v3975, %v4263
  %v4265 = vpop.f32.mrb[0].mxu0
  %4266 = vmatprep.mubr.bf16.mxu0 0
  %4267 = vmatmul.mubr.bf16.gmra.mrb[0].mxu0 %v3804
  %v4268 = vpop.f32.mrb[0].mxu0
  %v4269 = vadd.f32 %v3980, %v4268
  %v4270 = vpop.f32.mrb[0].mxu0
  %v4271 = vpop.f32.mrb[0].mxu0
  %v4272 = vadd.f32 %v3983, %v4271
  %v4273 = vpop.f32.mrb[0].mxu0
  %4274 = vmatprep.mubr.bf16.mxu0 0
  %4275 = vmatmul.mubr.bf16.gmra.mrb[0].mxu0 %v3807
  %v4276 = vpop.f32.mrb[0].mxu0
  %v4277 = vadd.f32 %v3988, %v4276
  %v4278 = vpop.f32.mrb[0].mxu0
  %v4279 = vpop.f32.mrb[0].mxu0
  %v4280 = vadd.f32 %v3991, %v4279
  %v4281 = vpop.f32.mrb[0].mxu0
  %4282 = vmatprep.mubr.bf16.mxu0 0
  %4283 = vmatmul.mubr.bf16.gmra.mrb[0].mxu0 %v3810
  %v4284 = vpop.f32.mrb[0].mxu0
  %v4285 = vadd.f32 %v3996, %v4284
  %v4286 = vpop.f32.mrb[0].mxu0
  %v4287 = vpop.f32.mrb[0].mxu0
  %v4288 = vadd.f32 %v3999, %v4287
  %v4289 = vpop.f32.mrb[0].mxu0
  %4290 = vmatprep.mubr.bf16.mxu0 0
  %4291 = vmatmul.mubr.bf16.gmra.mrb[0].mxu0 %v3813
  %v4292 = vpop.f32.mrb[0].mxu0
  %v4293 = vadd.f32 %v4004, %v4292
  %v4294 = vpop.f32.mrb[0].mxu0
  %v4295 = vpop.f32.mrb[0].mxu0
  %v4296 = vadd.f32 %v4007, %v4295
  %v4297 = vpop.f32.mrb[0].mxu0
  %4298 = vmatprep.mubr.bf16.mxu0 0
  %4299 = vmatmul.mubr.bf16.gmra.mrb[0].mxu0 %v3816
  %v4300 = vpop.f32.mrb[0].mxu0
  %v4301 = vadd.f32 %v4012, %v4300
  %v4302 = vpop.f32.mrb[0].mxu0
  %v4303 = vpop.f32.mrb[0].mxu0
  %v4304 = vadd.f32 %v4015, %v4303
  %v4305 = vpop.f32.mrb[0].mxu0
  %4306 = vmatprep.mubr.bf16.mxu0 0
  %4307 = vmatmul.mubr.bf16.gmra.mrb[0].mxu0 %v3818
  %v4308 = vpop.f32.mrb[0].mxu0
  %v4309 = vadd.f32 %v4020, %v4308
  %v4310 = vpop.f32.mrb[0].mxu0
  %v4311 = vpop.f32.mrb[0].mxu0
  %v4312 = vadd.f32 %v4023, %v4311
  %v4313 = vpop.f32.mrb[0].mxu0
  %4314 = vmatprep.mubr.bf16.mxu0 0
  %4315 = vmatmul.mubr.bf16.gmra.mrb[0].mxu0 %v3821
  %v4316 = vpop.f32.mrb[0].mxu0
  %v4317 = vadd.f32 %v4028, %v4316
  %v4318 = vpop.f32.mrb[0].mxu0
  %v4319 = vpop.f32.mrb[0].mxu0
  %v4320 = vadd.f32 %v4031, %v4319
  %v4321 = vpop.f32.mrb[0].mxu0
  %4322 = vmatprep.mubr.bf16.mxu0 0
  %4323 = vmatmul.mubr.bf16.gmra.mrb[0].mxu0 %v3824
  %v4324 = vpop.f32.mrb[0].mxu0
  %v4325 = vadd.f32 %v4036, %v4324
  %v4326 = vpop.f32.mrb[0].mxu0
  %v4327 = vpop.f32.mrb[0].mxu0
  %v4328 = vadd.f32 %v4039, %v4327
  %v4329 = vpop.f32.mrb[0].mxu0
  %4330 = vmatprep.mubr.bf16.mxu0 0
  %4331 = vmatmul.mubr.bf16.gmra.mrb[0].mxu0 %v3827
  %v4332 = vpop.f32.mrb[0].mxu0
  %v4333 = vadd.f32 %v4044, %v4332
  %v4334 = vpop.f32.mrb[0].mxu0
  %v4335 = vpop.f32.mrb[0].mxu0
  %v4336 = vadd.f32 %v4047, %v4335
  %v4337 = vpop.f32.mrb[0].mxu0
  %4338 = vmatprep.mubr.bf16.mxu0 0
  %4339 = vmatmul.mubr.bf16.gmra.mrb[0].mxu0 %v3830
  %v4340 = vpop.f32.mrb[0].mxu0
  %v4341 = vadd.f32 %v4052, %v4340
  %v4342 = vpop.f32.mrb[0].mxu0
  %v4343 = vpop.f32.mrb[0].mxu0
  %v4344 = vadd.f32 %v4055, %v4343
  %v4345 = vpop.f32.mrb[0].mxu0
  %4346 = vmatprep.mubr.bf16.mxu0 0
  %4347 = vmatmul.mubr.bf16.gmra.mrb[0].mxu0 %v3833
  %v4348 = vpop.f32.mrb[0].mxu0
  %v4349 = vadd.f32 %v4060, %v4348
  %v4350 = vpop.f32.mrb[0].mxu0
  %v4351 = vpop.f32.mrb[0].mxu0
  %v4352 = vadd.f32 %v4063, %v4351
  %v4353 = vpop.f32.mrb[0].mxu0
  %4354 = vmatprep.mubr.bf16.mxu0 0
  %4355 = vmatmul.mubr.bf16.gmra.mrb[0].mxu0 %v3836
  %v4356 = vpop.f32.mrb[0].mxu0
  %v4357 = vadd.f32 %v4068, %v4356
  %v4358 = vpop.f32.mrb[0].mxu0
  %v4359 = vpop.f32.mrb[0].mxu0
  %v4360 = vadd.f32 %v4071, %v4359
  %v4361 = vpop.f32.mrb[0].mxu0
  %4362 = vmatprep.mubr.bf16.mxu0 0
  %4363 = vmatmul.mubr.bf16.gmra.mrb[0].mxu0 %v3839
  %v4364 = vpop.f32.mrb[0].mxu0
  %v4365 = vadd.f32 %v4076, %v4364
  %v4366 = vpop.f32.mrb[0].mxu0
  %v4367 = vpop.f32.mrb[0].mxu0
  %v4368 = vadd.f32 %v4079, %v4367
  %v4369 = vpop.f32.mrb[0].mxu0
  %4370 = vmatprep.mubr.bf16.mxu0 0
  %4371 = vmatmul.mubr.bf16.gmra.mrb[0].mxu0 %v3842
  %v4372 = vpop.f32.mrb[0].mxu0
  %v4373 = vadd.f32 %v4084, %v4372
  %v4374 = vpop.f32.mrb[0].mxu0
  %v4375 = vpop.f32.mrb[0].mxu0
  %v4376 = vadd.f32 %v4087, %v4375
  %v4377 = vpop.f32.mrb[0].mxu0
  %4378 = vmatprep.mubr.bf16.mxu0 0
  %4379 = vmatmul.mubr.bf16.gmra.mrb[0].mxu0 %v3845
  %v4380 = vpop.f32.mrb[0].mxu0
  %v4381 = vadd.f32 %v4092, %v4380
  %v4382 = vpop.f32.mrb[0].mxu0
  %v4383 = vpop.f32.mrb[0].mxu0
  %v4384 = vadd.f32 %v4095, %v4383
  %v4385 = vpop.f32.mrb[0].mxu0
  %4386 = vmatprep.mubr.bf16.mxu0 0
  %4387 = vmatmul.mubr.bf16.gmra.mrb[0].mxu0 %v3848
  %v4388 = vpop.f32.mrb[0].mxu0
  %v4389 = vadd.f32 %v4100, %v4388
  %v4390 = vpop.f32.mrb[0].mxu0
  %v4391 = vpop.f32.mrb[0].mxu0
  %v4392 = vadd.f32 %v4103, %v4391
  %v4393 = vpop.f32.mrb[0].mxu0
  %4394 = vmatprep.mubr.bf16.mxu0 0
  %4395 = vmatmul.mubr.bf16.gmra.mrb[0].mxu0 %v3851
  %v4396 = vpop.f32.mrb[0].mxu0
  %v4397 = vadd.f32 %v4108, %v4396
  %v4398 = vpop.f32.mrb[0].mxu0
  %v4399 = vpop.f32.mrb[0].mxu0
  %v4400 = vadd.f32 %v4111, %v4399
  %v4401 = vpop.f32.mrb[0].mxu0
  %4402 = vmatprep.mubr.bf16.mxu0 0
  %4403 = vmatmul.mubr.bf16.gmra.mrb[0].mxu0 %v3854
  %v4404 = vpop.f32.mrb[0].mxu0
  %v4405 = vadd.f32 %v4116, %v4404
  %v4406 = vpop.f32.mrb[0].mxu0
  %v4407 = vpop.f32.mrb[0].mxu0
  %v4408 = vadd.f32 %v4119, %v4407
  %v4409 = vpop.f32.mrb[0].mxu0
  %4410 = vmatprep.mubr.bf16.mxu0 0
  %4411 = vmatmul.mubr.bf16.gmra.mrb[0].mxu0 %v3857
  %v4412 = vpop.f32.mrb[0].mxu0
  %v4413 = vadd.f32 %v4124, %v4412
  %v4414 = vpop.f32.mrb[0].mxu0
  %v4415 = vpop.f32.mrb[0].mxu0
  %v4416 = vadd.f32 %v4127, %v4415
  %v4417 = vpop.f32.mrb[0].mxu0
  %4418 = vmatprep.mubr.bf16.mxu0 0
  %4419 = vmatmul.mubr.bf16.gmra.mrb[0].mxu0 %v3860
  %v4420 = vpop.f32.mrb[0].mxu0
  %v4421 = vadd.f32 %v4132, %v4420
  %v4422 = vpop.f32.mrb[0].mxu0
  %v4423 = vpop.f32.mrb[0].mxu0
  %v4424 = vadd.f32 %v4135, %v4423
  %v4425 = vpop.f32.mrb[0].mxu0
  %4426 = vmatprep.mubr.bf16.mxu0 0
  %4427 = vmatmul.mubr.bf16.gmra.mrb[0].mxu0 %v3863
  %v4428 = vpop.f32.mrb[0].mxu0
  %v4429 = vadd.f32 %v4140, %v4428
  %v4430 = vpop.f32.mrb[0].mxu0
  %v4431 = vpop.f32.mrb[0].mxu0
  %v4432 = vadd.f32 %v4143, %v4431
  %v4433 = vpop.f32.mrb[0].mxu0
  %4434 = vmatprep.mubr.bf16.mxu0 0
  %4435 = vmatmul.mubr.bf16.gmra.mrb[0].mxu0 %v3818
  %v4436 = vpop.f32.mrb[0].mxu0
  %v4437 = vadd.f32 %v4148, %v4436
  %v4438 = vpop.f32.mrb[0].mxu0
  %v4439 = vpop.f32.mrb[0].mxu0
  %v4440 = vadd.f32 %v4151, %v4439
  %v4441 = vpop.f32.mrb[0].mxu0
  %4442 = vdwg.mxu0
  %v4443 = vmax.f32 %v4189, 0.0
  %v4444 = vmax.f32 %v4192, 0.0
  %v4445 = vmax.f32 %v4197, 0.0
  %v4446 = vmax.f32 %v4200, 0.0
  %v4447 = vmax.f32 %v4205, 0.0
  %v4448 = vmax.f32 %v4208, 0.0
  %v4449 = vmax.f32 %v4213, 0.0
  %v4450 = vmax.f32 %v4216, 0.0
  %v4451 = vmax.f32 %v4221, 0.0
  %v4452 = vmax.f32 %v4224, 0.0
  %v4453 = vmax.f32 %v4229, 0.0
  %v4454 = vmax.f32 %v4232, 0.0
  %v4455 = vmax.f32 %v4237, 0.0
  %v4456 = vmax.f32 %v4240, 0.0
  %v4457 = vmax.f32 %v4245, 0.0
  %v4458 = vmax.f32 %v4248, 0.0
  %v4459 = vmax.f32 %v4253, 0.0
  %v4460 = vmax.f32 %v4256, 0.0
  %v4461 = vmax.f32 %v4261, 0.0
  %v4462 = vmax.f32 %v4264, 0.0
  %v4463 = vmax.f32 %v4269, 0.0
  %v4464 = vmax.f32 %v4272, 0.0
  %v4465 = vmax.f32 %v4277, 0.0
  %v4466 = vmax.f32 %v4280, 0.0
  %v4467 = vmax.f32 %v4285, 0.0
  %v4468 = vmax.f32 %v4288, 0.0
  %v4469 = vmax.f32 %v4293, 0.0
  %v4470 = vmax.f32 %v4296, 0.0
  %v4471 = vmax.f32 %v4301, 0.0
  %v4472 = vmax.f32 %v4304, 0.0
  %v4473 = vmax.f32 %v4309, 0.0
  %v4474 = vmax.f32 %v4312, 0.0
  %v4475 = vmax.f32 %v4317, 0.0
  %v4476 = vmax.f32 %v4320, 0.0
  %v4477 = vmax.f32 %v4325, 0.0
  %v4478 = vmax.f32 %v4328, 0.0
  %v4479 = vmax.f32 %v4333, 0.0
  %v4480 = vmax.f32 %v4336, 0.0
  %v4481 = vmax.f32 %v4341, 0.0
  %v4482 = vmax.f32 %v4344, 0.0
  %v4483 = vmax.f32 %v4349, 0.0
  %v4484 = vmax.f32 %v4352, 0.0
  %v4485 = vmax.f32 %v4357, 0.0
  %v4486 = vmax.f32 %v4360, 0.0
  %v4487 = vmax.f32 %v4365, 0.0
  %v4488 = vmax.f32 %v4368, 0.0
  %v4489 = vmax.f32 %v4373, 0.0
  %v4490 = vmax.f32 %v4376, 0.0
  %v4491 = vmax.f32 %v4381, 0.0
  %v4492 = vmax.f32 %v4384, 0.0
  %v4493 = vmax.f32 %v4389, 0.0
  %v4494 = vmax.f32 %v4392, 0.0
  %v4495 = vmax.f32 %v4397, 0.0
  %v4496 = vmax.f32 %v4400, 0.0
  %v4497 = vmax.f32 %v4405, 0.0
  %v4498 = vmax.f32 %v4408, 0.0
  %v4499 = vmax.f32 %v4413, 0.0
  %v4500 = vmax.f32 %v4416, 0.0
  %v4501 = vmax.f32 %v4421, 0.0
  %v4502 = vmax.f32 %v4424, 0.0
  %v4503 = vmax.f32 %v4429, 0.0
  %v4504 = vmax.f32 %v4432, 0.0
  %v4505 = vmax.f32 %v4437, 0.0
  %v4506 = vmax.f32 %v4440, 0.0
  %v4507 = vmax.f32 %v4443, %v4445
  %v4508 = vmax.f32 %v4444, %v4446
  %v4509 = vmax.f32 %v4447, %v4449
  %v4510 = vmax.f32 %v4448, %v4450
  %v4511 = vmax.f32 %v4451, %v4453
  %v4512 = vmax.f32 %v4452, %v4454
  %v4513 = vmax.f32 %v4455, %v4457
  %v4514 = vmax.f32 %v4456, %v4458
  %v4515 = vmax.f32 %v4459, %v4461
  %v4516 = vmax.f32 %v4460, %v4462
  %v4517 = vmax.f32 %v4463, %v4465
  %v4518 = vmax.f32 %v4464, %v4466
  %v4519 = vmax.f32 %v4467, %v4469
  %v4520 = vmax.f32 %v4468, %v4470
  %v4521 = vmax.f32 %v4471, %v4473
  %v4522 = vmax.f32 %v4472, %v4474
  %v4523 = vmax.f32 %v4475, %v4477
  %v4524 = vmax.f32 %v4476, %v4478
  %v4525 = vmax.f32 %v4479, %v4481
  %v4526 = vmax.f32 %v4480, %v4482
  %v4527 = vmax.f32 %v4483, %v4485
  %v4528 = vmax.f32 %v4484, %v4486
  %v4529 = vmax.f32 %v4487, %v4489
  %v4530 = vmax.f32 %v4488, %v4490
  %v4531 = vmax.f32 %v4491, %v4493
  %v4532 = vmax.f32 %v4492, %v4494
  %v4533 = vmax.f32 %v4495, %v4497
  %v4534 = vmax.f32 %v4496, %v4498
  %v4535 = vmax.f32 %v4499, %v4501
  %v4536 = vmax.f32 %v4500, %v4502
  %v4537 = vmax.f32 %v4503, %v4505
  %v4538 = vmax.f32 %v4504, %v4506
  %v4539 = vrot.slane %v4507, 1
  %v4540 = vrot.slane %v4509, 1
  %v4541 = vrot.slane %v4511, 1
  %v4542 = vrot.slane %v4513, 1
  %v4543 = vrot.slane %v4515, 1
  %v4544 = vrot.slane %v4517, 1
  %v4545 = vrot.slane %v4519, 1
  %v4546 = vrot.slane %v4521, 1
  %v4547 = vrot.slane %v4523, 1
  %v4548 = vrot.slane %v4525, 1
  %v4549 = vrot.slane %v4527, 1
  %v4550 = vrot.slane %v4529, 1
  %v4551 = vrot.slane %v4531, 1
  %v4552 = vrot.slane %v4533, 1
  %v4553 = vrot.slane %v4535, 1
  %v4554 = vrot.slane %v4537, 1
  %v4555 = vrot.slane %v4508, 1
  %v4556 = vrot.slane %v4510, 1
  %v4557 = vrot.slane %v4512, 1
  %v4558 = vrot.slane %v4514, 1
  %v4559 = vrot.slane %v4516, 1
  %v4560 = vrot.slane %v4518, 1
  %v4561 = vrot.slane %v4520, 1
  %v4562 = vrot.slane %v4522, 1
  %v4563 = vrot.slane %v4524, 1
  %v4564 = vrot.slane %v4526, 1
  %v4565 = vrot.slane %v4528, 1
  %v4566 = vrot.slane %v4530, 1
  %v4567 = vrot.slane %v4532, 1
  %v4568 = vrot.slane %v4534, 1
  %v4569 = vrot.slane %v4536, 1
  %v4570 = vrot.slane %v4538, 1
  %v4571 = vsel %vm415, %v4539, %v4555
  %v4572 = vsel %vm415, %v4540, %v4556
  %v4573 = vsel %vm415, %v4541, %v4557
  %v4574 = vsel %vm415, %v4542, %v4558
  %v4575 = vsel %vm415, %v4543, %v4559
  %v4576 = vsel %vm415, %v4544, %v4560
  %v4577 = vsel %vm415, %v4545, %v4561
  %v4578 = vsel %vm415, %v4546, %v4562
  %v4579 = vsel %vm415, %v4547, %v4563
  %v4580 = vsel %vm415, %v4548, %v4564
  %v4581 = vsel %vm415, %v4549, %v4565
  %v4582 = vsel %vm415, %v4550, %v4566
  %v4583 = vsel %vm415, %v4551, %v4567
  %v4584 = vsel %vm415, %v4552, %v4568
  %v4585 = vsel %vm415, %v4553, %v4569
  %v4586 = vsel %vm415, %v4554, %v4570
  %v4587 = vsel %vm415, %v4555, %v4539
  %v4588 = vsel %vm415, %v4556, %v4540
  %v4589 = vsel %vm415, %v4557, %v4541
  %v4590 = vsel %vm415, %v4558, %v4542
  %v4591 = vsel %vm415, %v4559, %v4543
  %v4592 = vsel %vm415, %v4560, %v4544
  %v4593 = vsel %vm415, %v4561, %v4545
  %v4594 = vsel %vm415, %v4562, %v4546
  %v4595 = vsel %vm415, %v4563, %v4547
  %v4596 = vsel %vm415, %v4564, %v4548
  %v4597 = vsel %vm415, %v4565, %v4549
  %v4598 = vsel %vm415, %v4566, %v4550
  %v4599 = vsel %vm415, %v4567, %v4551
  %v4600 = vsel %vm415, %v4568, %v4552
  %v4601 = vsel %vm415, %v4569, %v4553
  %v4602 = vsel %vm415, %v4570, %v4554
  %v4603 = vmax.f32 %v4507, %v4571
  %v4604 = vmax.f32 %v4508, %v4587
  %v4605 = vmax.f32 %v4509, %v4572
  %v4606 = vmax.f32 %v4510, %v4588
  %v4607 = vmax.f32 %v4511, %v4573
  %v4608 = vmax.f32 %v4512, %v4589
  %v4609 = vmax.f32 %v4513, %v4574
  %v4610 = vmax.f32 %v4514, %v4590
  %v4611 = vmax.f32 %v4515, %v4575
  %v4612 = vmax.f32 %v4516, %v4591
  %v4613 = vmax.f32 %v4517, %v4576
  %v4614 = vmax.f32 %v4518, %v4592
  %v4615 = vmax.f32 %v4519, %v4577
  %v4616 = vmax.f32 %v4520, %v4593
  %v4617 = vmax.f32 %v4521, %v4578
  %v4618 = vmax.f32 %v4522, %v4594
  %v4619 = vmax.f32 %v4523, %v4579
  %v4620 = vmax.f32 %v4524, %v4595
  %v4621 = vmax.f32 %v4525, %v4580
  %v4622 = vmax.f32 %v4526, %v4596
  %v4623 = vmax.f32 %v4527, %v4581
  %v4624 = vmax.f32 %v4528, %v4597
  %v4625 = vmax.f32 %v4529, %v4582
  %v4626 = vmax.f32 %v4530, %v4598
  %v4627 = vmax.f32 %v4531, %v4583
  %v4628 = vmax.f32 %v4532, %v4599
  %v4629 = vmax.f32 %v4533, %v4584
  %v4630 = vmax.f32 %v4534, %v4600
  %v4631 = vmax.f32 %v4535, %v4585
  %v4632 = vmax.f32 %v4536, %v4601
  %v4633 = vmax.f32 %v4537, %v4586
  %v4634 = vmax.f32 %v4538, %v4602
  %vm4635 = vcmp.lt.s32.totalorder %v148, 0
  %v4636 = vsub.s32 0, %v148
  %v4637 = vsel %vm4635, %v4636, %v148
  %v4638 = vshrl.u32 %v4637, 1
  %v4639 = vand.u32 %v4637, 1
  %v4640 = vsub.s32 0, %v4639
  %v4641 = vsel %vm4635, %v4640, %v4639
  %vm4642 = vcmp.lt.s32.totalorder %v214, 0
  %v4643 = vsub.s32 0, %v214
  %v4644 = vsel %vm4642, %v4643, %v214
  %v4645 = vshrl.u32 %v4644, 1
  %v4646 = vand.u32 %v4644, 1
  %v4647 = vsub.s32 0, %v4646
  %v4648 = vsel %vm4642, %v4647, %v4646
  %vm4649 = vcmp.ne.s32.totalorder %v4641, 0
  %vm4650 = vcmp.ne.s32.totalorder %v4648, 0
  %vm4651 = vcmp.lt.s32.totalorder %v4641, 0
  %vm4652 = vcmp.lt.s32.totalorder %v4648, 0
  %vm4653 = vmand %vm4651, %vm4649
  %vm4654 = vmand %vm4652, %vm4650
  %v4655 = vadd.s32 %v4641, 2
  %v4656 = vadd.s32 %v4648, 2
  %v4657 = vsel %vm4653, %v4655, %v4641
  %v4658 = vsel %vm4654, %v4656, %v4648
  %vm4659 = vcmp.eq.s32.totalorder %v4657, 0
  %vm4660 = vcmp.eq.s32.totalorder %v4658, 0
  %v4661 = vsel %vm4659, %v4603, 0.0
  %v4662 = vsel %vm4660, %v4604, 0.0
  %v4663 = vsel %vm4659, %v4605, 0.0
  %v4664 = vsel %vm4660, %v4606, 0.0
  %v4665 = vsel %vm4659, %v4607, 0.0
  %v4666 = vsel %vm4660, %v4608, 0.0
  %v4667 = vsel %vm4659, %v4609, 0.0
  %v4668 = vsel %vm4660, %v4610, 0.0
  %v4669 = vsel %vm4659, %v4611, 0.0
  %v4670 = vsel %vm4660, %v4612, 0.0
  %v4671 = vsel %vm4659, %v4613, 0.0
  %v4672 = vsel %vm4660, %v4614, 0.0
  %v4673 = vsel %vm4659, %v4615, 0.0
  %v4674 = vsel %vm4660, %v4616, 0.0
  %v4675 = vsel %vm4659, %v4617, 0.0
  %v4676 = vsel %vm4660, %v4618, 0.0
  %v4677 = vsel %vm4659, %v4619, 0.0
  %v4678 = vsel %vm4660, %v4620, 0.0
  %v4679 = vsel %vm4659, %v4621, 0.0
  %v4680 = vsel %vm4660, %v4622, 0.0
  %v4681 = vsel %vm4659, %v4623, 0.0
  %v4682 = vsel %vm4660, %v4624, 0.0
  %v4683 = vsel %vm4659, %v4625, 0.0
  %v4684 = vsel %vm4660, %v4626, 0.0
  %v4685 = vsel %vm4659, %v4627, 0.0
  %v4686 = vsel %vm4660, %v4628, 0.0
  %v4687 = vsel %vm4659, %v4629, 0.0
  %v4688 = vsel %vm4660, %v4630, 0.0
  %v4689 = vsel %vm4659, %v4631, 0.0
  %v4690 = vsel %vm4660, %v4632, 0.0
  %v4691 = vsel %vm4659, %v4633, 0.0
  %v4692 = vsel %vm4660, %v4634, 0.0
  %v4693 = vsel %vm1663, %v4661, 0.0
  %v4694 = vsel %vm1663, %v4663, 0.0
  %v4695 = vadd.f32 %v4693, %v4694
  %v4696 = vsel %vm1663, %v4665, 0.0
  %v4697 = vadd.f32 %v4695, %v4696
  %v4698 = vsel %vm1663, %v4667, 0.0
  %v4699 = vadd.f32 %v4697, %v4698
  %v4700 = vrot.slane %v4699, 4
  %v4701 = vadd.f32 %v4699, %v4700
  %v4702 = vrot.slane %v4701, 2
  %v4703 = vadd.f32 %v4701, %v4702
  %v4704 = vrot.slane %v4703, 1
  %v4705 = vadd.f32 %v4703, %v4704
  %v4706 = vsel %vm1663, %v4677, 0.0
  %v4707 = vsel %vm1663, %v4679, 0.0
  %v4708 = vadd.f32 %v4706, %v4707
  %v4709 = vsel %vm1663, %v4681, 0.0
  %v4710 = vadd.f32 %v4708, %v4709
  %v4711 = vsel %vm1663, %v4683, 0.0
  %v4712 = vadd.f32 %v4710, %v4711
  %v4713 = vrot.slane %v4712, 4
  %v4714 = vadd.f32 %v4712, %v4713
  %v4715 = vrot.slane %v4714, 2
  %v4716 = vadd.f32 %v4714, %v4715
  %v4717 = vrot.slane %v4716, 1
  %v4718 = vadd.f32 %v4716, %v4717
  %v4719 = vmul.f32 %v4705, 0.0625
  %v4720 = vmul.f32 %v4718, 0.0625
  %v4721 = vsel %vm1663, %v4662, 0.0
  %v4722 = vsel %vm1663, %v4664, 0.0
  %v4723 = vadd.f32 %v4721, %v4722
  %v4724 = vsel %vm1663, %v4666, 0.0
  %v4725 = vadd.f32 %v4723, %v4724
  %v4726 = vsel %vm1663, %v4668, 0.0
  %v4727 = vadd.f32 %v4725, %v4726
  %v4728 = vrot.slane %v4727, 4
  %v4729 = vadd.f32 %v4727, %v4728
  %v4730 = vrot.slane %v4729, 2
  %v4731 = vadd.f32 %v4729, %v4730
  %v4732 = vrot.slane %v4731, 1
  %v4733 = vadd.f32 %v4731, %v4732
  %v4734 = vsel %vm1663, %v4678, 0.0
  %v4735 = vsel %vm1663, %v4680, 0.0
  %v4736 = vadd.f32 %v4734, %v4735
  %v4737 = vsel %vm1663, %v4682, 0.0
  %v4738 = vadd.f32 %v4736, %v4737
  %v4739 = vsel %vm1663, %v4684, 0.0
  %v4740 = vadd.f32 %v4738, %v4739
  %v4741 = vrot.slane %v4740, 4
  %v4742 = vadd.f32 %v4740, %v4741
  %v4743 = vrot.slane %v4742, 2
  %v4744 = vadd.f32 %v4742, %v4743
  %v4745 = vrot.slane %v4744, 1
  %v4746 = vadd.f32 %v4744, %v4745
  %v4747 = vmul.f32 %v4733, 0.0625
  %v4748 = vmul.f32 %v4746, 0.0625
  %v4749 = vsel %vm1663, %v4669, 0.0
  %v4750 = vsel %vm1663, %v4671, 0.0
  %v4751 = vadd.f32 %v4749, %v4750
  %v4752 = vsel %vm1663, %v4673, 0.0
  %v4753 = vadd.f32 %v4751, %v4752
  %v4754 = vsel %vm1663, %v4675, 0.0
  %v4755 = vadd.f32 %v4753, %v4754
  %v4756 = vrot.slane %v4755, 4
  %v4757 = vadd.f32 %v4755, %v4756
  %v4758 = vrot.slane %v4757, 2
  %v4759 = vadd.f32 %v4757, %v4758
  %v4760 = vrot.slane %v4759, 1
  %v4761 = vadd.f32 %v4759, %v4760
  %v4762 = vsel %vm1663, %v4685, 0.0
  %v4763 = vsel %vm1663, %v4687, 0.0
  %v4764 = vadd.f32 %v4762, %v4763
  %v4765 = vsel %vm1663, %v4689, 0.0
  %v4766 = vadd.f32 %v4764, %v4765
  %v4767 = vsel %vm1663, %v4691, 0.0
  %v4768 = vadd.f32 %v4766, %v4767
  %v4769 = vrot.slane %v4768, 4
  %v4770 = vadd.f32 %v4768, %v4769
  %v4771 = vrot.slane %v4770, 2
  %v4772 = vadd.f32 %v4770, %v4771
  %v4773 = vrot.slane %v4772, 1
  %v4774 = vadd.f32 %v4772, %v4773
  %v4775 = vmul.f32 %v4761, 0.0625
  %v4776 = vmul.f32 %v4774, 0.0625
  %v4777 = vsel %vm1663, %v4670, 0.0
  %v4778 = vsel %vm1663, %v4672, 0.0
  %v4779 = vadd.f32 %v4777, %v4778
  %v4780 = vsel %vm1663, %v4674, 0.0
  %v4781 = vadd.f32 %v4779, %v4780
  %v4782 = vsel %vm1663, %v4676, 0.0
  %v4783 = vadd.f32 %v4781, %v4782
  %v4784 = vrot.slane %v4783, 4
  %v4785 = vadd.f32 %v4783, %v4784
  %v4786 = vrot.slane %v4785, 2
  %v4787 = vadd.f32 %v4785, %v4786
  %v4788 = vrot.slane %v4787, 1
  %v4789 = vadd.f32 %v4787, %v4788
  %v4790 = vsel %vm1663, %v4686, 0.0
  %v4791 = vsel %vm1663, %v4688, 0.0
  %v4792 = vadd.f32 %v4790, %v4791
  %v4793 = vsel %vm1663, %v4690, 0.0
  %v4794 = vadd.f32 %v4792, %v4793
  %v4795 = vsel %vm1663, %v4692, 0.0
  %v4796 = vadd.f32 %v4794, %v4795
  %v4797 = vrot.slane %v4796, 4
  %v4798 = vadd.f32 %v4796, %v4797
  %v4799 = vrot.slane %v4798, 2
  %v4800 = vadd.f32 %v4798, %v4799
  %v4801 = vrot.slane %v4800, 1
  %v4802 = vadd.f32 %v4800, %v4801
  %v4803 = vmul.f32 %v4789, 0.0625
  %v4804 = vmul.f32 %v4802, 0.0625
  %vm4807 = vcmask 1041409
  %v4808 = vsel %vm4807, %v4720, %v4719
  %v4812 = vsel %vm4807, %v4748, %v4747
  %4813 = vrot.lane.b32.xlu0 %v4812, 32
  %v4814 = vpop.permute.xlu0 %4813
  %v4818 = vsel %vm4807, %v4776, %v4775
  %4819 = vrot.lane.b32.xlu0 %v4818, 64
  %v4820 = vpop.permute.xlu0 %4819
  %v4824 = vsel %vm4807, %v4804, %v4803
  %4825 = vrot.lane.b32.xlu0 %v4824, 96
  %v4826 = vpop.permute.xlu0 %4825
  %v4828 = vsel %vm1663, %v4808, %v4814
  %v4829 = vsel %vm3212, %v4828, %v4820
  %v4830 = vsel %vm3275, %v4829, %v4826
  %v4831 = vld [vmem:[%s1] sm:$0x3]
  %v4832 = vpack.c.bf16 %v4830, %v4830
  %v4833 = vld [vmem:[%s2 + $0xa4] sm:$0xf]
  %v4834 = vld [vmem:[%s2 + $0xa8] sm:$0xf]
  %v4835 = vld [vmem:[%s2 + $0xac] sm:$0xf]
  %v4836 = vld [vmem:[%s2 + $0xb0] sm:$0xf]
  %v4837 = vld [vmem:[%s2 + $0xb4] sm:$0xf]
  %v4838 = vld [vmem:[%s2 + $0xb8] sm:$0xf]
  %v4839 = vld [vmem:[%s2 + $0xbc] sm:$0xf]
  %v4840 = vld [vmem:[%s2 + $0xc0] sm:$0xf]
  %v4841 = vld [vmem:[%s2 + $0xc4] sm:$0xf]
  %v4842 = vld [vmem:[%s2 + $0xc8] sm:$0xf]
  %v4843 = vld [vmem:[%s2 + $0xcc] sm:$0xf]
  %v4844 = vld [vmem:[%s2 + $0xd0] sm:$0xf]
  %v4845 = vld [vmem:[%s2 + $0xd4] sm:$0xf]
  %v4846 = vld [vmem:[%s2 + $0xd8] sm:$0xf]
  %v4847 = vld [vmem:[%s2 + $0xdc] sm:$0xf]
  %v4848 = vld [vmem:[%s2 + $0xe0] sm:$0xf]
  %4850 = vset.pattern.permute.xlu0 0
  %4851 = vperm.xlu0 %4850, %v4831
  %v4852 = vpop.permute.xlu0 %4851
  %v4854 = vlaneseq
  %v4855 = vshrl.u32 %v4854, 7
  %v4856 = vsub.s32 3, %v4855
  %v4857 = vrot.slane %v18, %v4856
  %v4858 = vmul.f32 %v4852, %v4857
  %v4875 = vunpack.c.l.b16 %v4833
  %v4876 = vunpack.c.l.b16 %v4834
  %v4877 = vunpack.c.l.b16 %v4835
  %v4878 = vunpack.c.l.b16 %v4836
  %v4879 = vunpack.c.l.b16 %v4837
  %v4880 = vunpack.c.l.b16 %v4838
  %v4881 = vunpack.c.l.b16 %v4839
  %v4882 = vunpack.c.l.b16 %v4840
  %v4883 = vunpack.c.l.b16 %v4841
  %v4884 = vunpack.c.l.b16 %v4842
  %v4885 = vunpack.c.l.b16 %v4843
  %v4886 = vunpack.c.l.b16 %v4844
  %v4887 = vunpack.c.l.b16 %v4845
  %v4888 = vunpack.c.l.b16 %v4846
  %v4889 = vunpack.c.l.b16 %v4847
  %v4890 = vunpack.c.l.b16 %v4848
  %v4891 = vpack.c.b16 %v4876, %v4875
  %v4892 = vpack.c.b16 %v4878, %v4877
  %v4893 = vpack.c.b16 %v4880, %v4879
  %v4894 = vpack.c.b16 %v4882, %v4881
  %v4895 = vpack.c.b16 %v4884, %v4883
  %v4896 = vpack.c.b16 %v4886, %v4885
  %v4897 = vpack.c.b16 %v4888, %v4887
  %v4898 = vpack.c.b16 %v4890, %v4889
  %4907 = vmatprep.subr.bf16.mxu0 0
  %4908 = vmatpush1.bf16.msra.mxu0 %v4891
  %4909 = vmatprep.subr.bf16.mxu0 0
  %4910 = vmatpush1.bf16.msra.mxu0 %v4892
  %4911 = vmatprep.subr.bf16.mxu0 0
  %4912 = vmatpush1.bf16.msra.mxu0 %v4893
  %4913 = vmatprep.subr.bf16.mxu0 0
  %4914 = vmatpush1.bf16.msra.mxu0 %v4894
  %4915 = vmatprep.subr.bf16.mxu0 0
  %4916 = vmatpush1.bf16.msra.mxu0 %v4895
  %4917 = vmatprep.subr.bf16.mxu0 0
  %4918 = vmatpush1.bf16.msra.mxu0 %v4896
  %4919 = vmatprep.subr.bf16.mxu0 0
  %4920 = vmatpush1.bf16.msra.mxu0 %v4897
  %4921 = vmatprep.subr.bf16.mxu0 0
  %4922 = vmatpush1.bf16.msra.mxu0 %v4898
  %4923 = vmatprep.subr.bf16.mxu0 0
  %4924 = vmatpush1.bf16.msra.mxu0 0
  %4925 = vmatprep.subr.bf16.mxu0 0
  %4926 = vmatpush1.bf16.msra.mxu0 0
  %4927 = vmatprep.subr.bf16.mxu0 0
  %4928 = vmatpush1.bf16.msra.mxu0 0
  %4929 = vmatprep.subr.bf16.mxu0 0
  %4930 = vmatpush1.bf16.msra.mxu0 0
  %4931 = vmatprep.subr.bf16.mxu0 0
  %4932 = vmatpush1.bf16.msra.mxu0 0
  %4933 = vmatprep.subr.bf16.mxu0 0
  %4934 = vmatpush1.bf16.msra.mxu0 0
  %4935 = vmatprep.subr.bf16.mxu0 0
  %4936 = vmatpush1.bf16.msra.mxu0 0
  %4937 = vmatprep.subr.bf16.mxu0 0
  %4938 = vmatpush1.bf16.msra.mxu0 0
  %4939 = vmatprep.mubr.bf16.mxu0 0
  %4940 = vmatmul.mubr.bf16.gmra.mrb[0].mxu0 %v4832
  %v4941 = vpop.f32.mrb[0].mxu0
  %v4942 = vadd.f32 %v4858, %v4941
  %v4943 = vpop.f32.mrb[0].mxu0
  %v4944 = vpop.f32.mrb[0].mxu0
  %v4945 = vpop.f32.mrb[0].mxu0
  %4946 = vdwg.mxu0
  %4947 = vset.pattern.permute.xlu0 1
  %4948 = vperm.xlu0 %4947, %v4831
  %v4949 = vpop.permute.xlu0 %4948
  %v4951 = vlaneseq
  %v4952 = vshrl.u32 %v4951, 7
  %v4953 = vsub.s32 4, %v4952
  %v4954 = vrot.slane %v18, %v4953
  %v4955 = vmul.f32 %v4949, %v4954
  %v4956 = vadd.f32 %v4942, %v4955
  %v4957 = vlaneseq
  %v4958 = vshrl.u32 %v4957, 7
  %v4959 = vsub.s32 2, %v4958
  %v4960 = vrot.slane %v18, %v4959
  %v4961 = vadd.f32 %v4956, %v4960
  %v4962 = vmax.f32 %v4961, 0.0
  %v4963 = vlaneseq
  %v4964 = vshrl.u32 %v4963, 7
  %v4965 = vsub.s32 5, %v4964
  %v4966 = vrot.slane %v18, %v4965
  %v4967 = vmul.f32 %v4962, %v4966
  %vm4968 = vcmask 517120
  %v4969 = vsel %vm4968, %v4967, 0.0
  %4970 = vadd.xlane.f32.xlu0 %v4969
  %v4971 = vpop.xlane.xlu0 %4970
  %v4972 = vlaneseq
  %v4973 = vshrl.u32 %v4972, 7
  %v4974 = vsub.s32 6, %v4973
  %v4975 = vrot.slane %v18, %v4974
  %v4976 = vadd.f32 %v4971, %v4975
  %vm4977 = vcmask 1024
  %4978 = vst.msk [vmem:[%s4] sm:$0x3] %vm4977, %v4976
  // Predicated region
  $region18: #{cnn_forward.1} parent=0 // pred_check
    _
  $region19: #{cnn_forward.1} parent=0 // pred_check_branch
    %4980 = sbr.rel (0) target = $region21
  $region20: #{cnn_forward.1} parent=0 // pred_region
    _
  $region21: #{cnn_forward.1} parent=0 // pred_fallthru
    _
  // Predicated region
  $region22: #{cnn_forward.1} parent=0 // pred_check
    _
  $region23: #{cnn_forward.1} parent=0 // pred_check_branch
    %4982 = sbr.rel (0) target = $region25
  $region24: #{cnn_forward.1} parent=0 // pred_region
    _
  $region25: #{cnn_forward.1} parent=0 // pred_fallthru
    _

</llo_original>
